<compile_context>
chip_gen: v5e
topology: v5e:2x2
jax: 0.10.0
libtpu: 0.0.40
codegen_flags: <defaults>
</compile_context>

<pallas_src>
import functools
import math

import jax
import jax.numpy as jnp
import numpy as np
from jax import lax
from jax.experimental import pallas as pl
from jax.experimental.pallas import tpu as pltpu

KSIZE = 5          # conv kernel size (module default)
STRIDE = 2         # conv stride / upsample factor (module default)
PAD = KSIZE // 2   # = 2
LANE = 128         # vreg lane width


def _round_up(x, m):
    return ((x + m - 1) // m) * m


def _vmem_limit_bytes():
    """Generation-aware scoped-VMEM budget (~3/4 physical, capped at 96 MiB)."""
    try:
        cap = getattr(pltpu.get_tpu_info(), "vmem_capacity_bytes", None)
        if cap:
            return int(min(cap * 3 // 4, 96 * 1024 * 1024))
    except Exception:
        pass
    return 48 * 1024 * 1024        # safe on v5e/v6e (128 MiB) and v7x (64 MiB)


VMEM_LIMIT = _vmem_limit_bytes()


def _apply_act(x, act):
    if act == "relu":
        return jnp.maximum(x, 0.0)
    if act == "sigmoid":
        return jax.nn.sigmoid(x)   # exp/recip on the EUP slot
    return x


def _pick_row_tile(m, cap=512):
    """Largest divisor of m that is <= cap and a multiple of 16 (bf16 sublanes)."""
    if m <= cap:
        return m
    for t in range(cap - cap % 16, 15, -16):
        if m % t == 0:
            return t
    return m


def _pick_col_tile(n, cap=2048):
    """Largest divisor of n that is <= cap and a multiple of 128 (lanes)."""
    if n <= cap:
        return n
    for t in range(cap - cap % 128, 127, -128):
        if n % t == 0:
            return t
    return n


# ----------------------------------------------------------------------------
# Shared conv kernel: one packed-K matmul + bias + activation per grid step
# ----------------------------------------------------------------------------
def _conv_mm_kernel(lhs_ref, w_ref, b_ref, o_ref, *, act):
    """lhs_ref: (1, tm, Kp) bf16   w_ref: (Kp, Np) bf16   b_ref: (1, Np) f32
       o_ref : (1, tm, Np) bf16.  All taps are pre-packed into Kp -> single MXU push."""
    y = jnp.dot(lhs_ref[0], w_ref[...], preferred_element_type=jnp.float32)
    o_ref[0] = _apply_act(y + b_ref[...], act).astype(o_ref.dtype)


def conv_matmul(lhs, w, bias, act):
    B, M, Kp = lhs.shape
    Np = w.shape[1]
    tm = _pick_row_tile(M)
    return pl.pallas_call(
        functools.partial(_conv_mm_kernel, act=act),
        out_shape=jax.ShapeDtypeStruct((B, M, Np), jnp.bfloat16),
        grid_spec=pltpu.PrefetchScalarGridSpec(
            num_scalar_prefetch=0,
            grid=(B, M // tm),
            in_specs=[
                pl.BlockSpec((1, tm, Kp), lambda b, i: (b, i, 0)),
                pl.BlockSpec((Kp, Np), lambda b, i: (0, 0)),
                pl.BlockSpec((1, Np), lambda b, i: (0, 0)),
            ],
            out_specs=pl.BlockSpec((1, tm, Np), lambda b, i: (b, i, 0)),
        ),
        compiler_params=pltpu.CompilerParams(
            dimension_semantics=("parallel", "parallel"),
            vmem_limit_bytes=VMEM_LIMIT),
        cost_estimate=pl.CostEstimate(
            flops=2 * B * M * Kp * Np,
            transcendentals=(B * M * Np if act == "sigmoid" else 0),
            bytes_accessed=int(lhs.size * 2 + w.size * 2 + bias.size * 4
                               + B * M * Np * 2)),
    )(lhs, w, bias)


# ----------------------------------------------------------------------------
# Encoder conv block: Conv2d(k=5, s=2, p=2) + ReLU (taps packed into K)
# ----------------------------------------------------------------------------
def encoder_conv(x, w, bias, cout, act="relu"):
    """x: (B, H, W, cin) bf16 real channels -> (B, H//2, W//2, cout) bf16."""
    B, H, W, cin = x.shape
    OH = (H + 2 * PAD - KSIZE) // STRIDE + 1
    OW = (W + 2 * PAD - KSIZE) // STRIDE + 1
    Kp = w.shape[0]
    xp = jnp.pad(x, ((0, 0), (PAD, PAD), (PAD, PAD), (0, 0)))
    # mini-im2col: K index = (kh*5 + kw)*cin + c  (matches offline weight packing)
    taps = [xp[:, kh:kh + STRIDE * OH:STRIDE, kw:kw + STRIDE * OW:STRIDE, :]
            for kh in range(KSIZE) for kw in range(KSIZE)]
    lhs = jnp.concatenate(taps, axis=-1)
    lhs = jnp.pad(lhs, ((0, 0), (0, 0), (0, 0), (0, Kp - KSIZE * KSIZE * cin)))
    out = conv_matmul(lhs.reshape(B, OH * OW, Kp), w, bias, act)
    return out[:, :, :cout].reshape(B, OH, OW, cout)


# ----------------------------------------------------------------------------
# Decoder block: Upsample(x2, nearest) + Conv2d(k=5, s=1, p=2) + act, fully fused
# ----------------------------------------------------------------------------
def decoder_block(x, w, bias, cout, cs, act):
    """x: (B, R, R, cin) bf16 -> (B, 2R, 2R, cout) bf16.  The 4 output phases share one
    packed LHS; phase p = 2*row_parity + col_parity lives in lanes [p*cs, p*cs+cout)."""
    B, R, _, cin = x.shape
    Kp, Np = w.shape
    xp = jnp.pad(x, ((0, 0), (1, 1), (1, 1), (0, 0)))
    taps = [xp[:, i:i + R, j:j + R, :] for i in range(3) for j in range(3)]
    lhs = jnp.concatenate(taps, axis=-1)
    lhs = jnp.pad(lhs, ((0, 0), (0, 0), (0, 0), (0, Kp - 9 * cin)))
    out = conv_matmul(lhs.reshape(B, R * R, Kp), w, bias, act)   # (B, R*R, Np)
    out = out.reshape(B, R, R, Np)
    phases = jnp.stack([out[..., p * cs:p * cs + cout] for p in range(4)], axis=3)
    phases = phases.reshape(B, R, R, 2, 2, cout)
    return phases.transpose(0, 1, 3, 2, 4, 5).reshape(B, 2 * R, 2 * R, cout)


# ----------------------------------------------------------------------------
# Encoder Linear (K-tiled accumulation) and decoder Linear (N-tiled), no recompute
# ----------------------------------------------------------------------------
def _enc_fc_kernel(x_ref, w_ref, b_ref, o_ref):
    k = pl.program_id(0)

    @pl.when(k == 0)
    def _init():
        o_ref[...] = jnp.zeros_like(o_ref)

    o_ref[...] += jnp.dot(x_ref[...], w_ref[...], preferred_element_type=jnp.float32)

    @pl.when(k == pl.num_programs(0) - 1)
    def _finalize():
        o_ref[...] += b_ref[...]               # latent: no activation (per module)


def enc_fc(x_flat, w1, b1):
    B, K1 = x_flat.shape
    LATP = w1.shape[1]
    tk = _pick_col_tile(K1)
    return pl.pallas_call(
        _enc_fc_kernel,
        out_shape=jax.ShapeDtypeStruct((B, LATP), jnp.float32),
        grid_spec=pltpu.PrefetchScalarGridSpec(
            num_scalar_prefetch=0,
            grid=(K1 // tk,),
            in_specs=[
                pl.BlockSpec((B, tk), lambda k: (0, k)),
                pl.BlockSpec((tk, LATP), lambda k: (k, 0)),
                pl.BlockSpec((1, LATP), lambda k: (0, 0)),
            ],
            out_specs=pl.BlockSpec((B, LATP), lambda k: (0, 0)),
        ),
        compiler_params=pltpu.CompilerParams(
            dimension_semantics=("arbitrary",),
            vmem_limit_bytes=VMEM_LIMIT),
        cost_estimate=pl.CostEstimate(
            flops=2 * B * K1 * LATP, transcendentals=0,
            bytes_accessed=int(x_flat.size * 2 + w1.size * 2 + b1.size * 4
                               + B * LATP * 4)),
    )(x_flat, w1, b1)


def _dec_fc_kernel(z_ref, w_ref, b_ref, o_ref):
    y = jnp.dot(z_ref[...], w_ref[...], preferred_element_type=jnp.float32)
    o_ref[...] = (y + b_ref[...]).astype(o_ref.dtype)


def dec_fc(z, w2, b2):
    B, LATP = z.shape
    N2 = w2.shape[1]
    tn = _pick_col_tile(N2)
    return pl.pallas_call(
        _dec_fc_kernel,
        out_shape=jax.ShapeDtypeStruct((B, N2), jnp.bfloat16),
        grid_spec=pltpu.PrefetchScalarGridSpec(
            num_scalar_prefetch=0,
            grid=(N2 // tn,),
            in_specs=[
                pl.BlockSpec((B, LATP), lambda j: (0, 0)),
                pl.BlockSpec((LATP, tn), lambda j: (0, j)),
                pl.BlockSpec((1, tn), lambda j: (0, j)),
            ],
            out_specs=pl.BlockSpec((B, tn), lambda j: (0, j)),
        ),
        compiler_params=pltpu.CompilerParams(
            dimension_semantics=("parallel",),
            vmem_limit_bytes=VMEM_LIMIT),
        cost_estimate=pl.CostEstimate(
            flops=2 * B * LATP * N2, transcendentals=0,
            bytes_accessed=int(z.size * 2 + w2.size * 2 + b2.size * 4 + B * N2 * 2)),
    )(z, w2, b2)


# ----------------------------------------------------------------------------
# Parameter construction (PyTorch layout) and one-time kernel-ready packing
# ----------------------------------------------------------------------------
def init_params(key, in_shape, kernel_size=KSIZE, stride=STRIDE, latent_dim=32,
                encoder_channels=(3, 8, 16)):
    decoder_channels = tuple(reversed(encoder_channels))
    C, H, W = in_shape
    pad = kernel_size // 2

    def uniform(k, shape, fan_in):
        s = 1.0 / math.sqrt(fan_in)
        return jax.random.uniform(k, shape, jnp.float32, -s, s)

    params = {"enc_convs": [], "dec_convs": []}
    h, w = H, W
    for cin, cout in zip(encoder_channels[:-1], encoder_channels[1:]):
        key, k1, k2 = jax.random.split(key, 3)
        fan = cin * kernel_size * kernel_size
        params["enc_convs"].append(
            (uniform(k1, (cout, cin, kernel_size, kernel_size), fan),
             uniform(k2, (cout,), fan)))
        h = (h + 2 * pad - kernel_size) // stride + 1
        w = (w + 2 * pad - kernel_size) // stride + 1

    conv_shape = (encoder_channels[-1], h, w)
    flat_dim = conv_shape[0] * conv_shape[1] * conv_shape[2]

    key, k1, k2 = jax.random.split(key, 3)
    params["enc_fc"] = (uniform(k1, (latent_dim, flat_dim), flat_dim),
                        uniform(k2, (latent_dim,), flat_dim))
    key, k1, k2 = jax.random.split(key, 3)
    params["dec_fc"] = (uniform(k1, (flat_dim, latent_dim), latent_dim),
                        uniform(k2, (flat_dim,), latent_dim))

    for cin, cout in zip(decoder_channels[:-1], decoder_channels[1:]):
        key, k1, k2 = jax.random.split(key, 3)
        fan = cin * kernel_size * kernel_size
        params["dec_convs"].append(
            (uniform(k1, (cout, cin, kernel_size, kernel_size), fan),
             uniform(k2, (cout,), fan)))

    params["conv_shape"] = conv_shape
    return params


def _pack_encoder_conv(w_oihw, b):
    """(cout, cin, 5, 5) -> K-packed (Kp, Np) bf16 weight + (1, Np) f32 bias.
    Row index = (kh*5 + kw)*cin + c, matching the XLA mini-im2col ordering."""
    w = np.asarray(w_oihw, np.float32)
    cout, cin = w.shape[0], w.shape[1]
    kp = _round_up(KSIZE * KSIZE * cin, LANE)
    np_ = _round_up(cout, LANE)
    W = np.zeros((kp, np_), np.float32)
    for kh in range(KSIZE):
        for kw in range(KSIZE):
            t = kh * KSIZE + kw
            W[t * cin:(t + 1) * cin, :cout] = w[:, :, kh, kw].T
    bias = np.zeros((1, np_), np.float32)
    bias[0, :cout] = np.asarray(b, np.float32)
    return jnp.asarray(W).astype(jnp.bfloat16), jnp.asarray(bias), cout


# taps of the 5-wide kernel axis that collapse onto each of the 3 low-res source
# offsets, per output parity, under nearest x2 upsampling with padding=2.
_UP_TAP_SETS = {0: ((0, 1), (2, 3), (4,)), 1: ((0,), (1, 2), (3, 4))}


def _pack_decoder_conv(w_oihw, b):
    """(cout, cin, 5, 5) -> (Kp, Np) bf16 holding the 4 output phases of the fused
    upsample+conv in disjoint lane groups. Row index = (i*3 + j)*cin + c."""
    w = np.asarray(w_oihw, np.float32)
    cout, cin = w.shape[0], w.shape[1]
    kp = _round_up(9 * cin, LANE)
    cs = cout if 4 * cout <= LANE else _round_up(cout, LANE)
    np_ = _round_up(4 * cs, LANE)
    W = np.zeros((kp, np_), np.float32)
    bias = np.zeros((1, np_), np.float32)
    for ph in range(2):
        for pw in range(2):
            p = 2 * ph + pw
            for i in range(3):
                for j in range(3):
                    tap = np.zeros((cin, cout), np.float32)
                    for kh in _UP_TAP_SETS[ph][i]:
                        for kw in _UP_TAP_SETS[pw][j]:
                            tap += w[:, :, kh, kw].T
                    W[(i * 3 + j) * cin:(i * 3 + j + 1) * cin,
                      p * cs:p * cs + cout] = tap
            bias[0, p * cs:p * cs + cout] = np.asarray(b, np.float32)
    return jnp.asarray(W).astype(jnp.bfloat16), jnp.asarray(bias), cout, cs


def prepare_params(params, latent_dim):
    """Pack conv taps into the contraction dim, compact the FC weights to the REAL
    channel count C0, bake the torch NCHW-flatten permutation in, cast to bf16 once."""
    prep = {
        "enc_convs": [_pack_encoder_conv(w, b) for (w, b) in params["enc_convs"]],
        "dec_convs": [_pack_decoder_conv(w, b) for (w, b) in params["dec_convs"]],
    }
    C0, H0, W0 = params["conv_shape"]
    latp = _round_up(latent_dim, LANE)

    wf, bf = params["enc_fc"]            # (latent, C0*H0*W0), (latent,)
    w1 = (np.asarray(wf, np.float32)
            .reshape(latent_dim, C0, H0, W0).transpose(2, 3, 1, 0)
            .reshape(H0 * W0 * C0, latent_dim))
    prep["fc_w1"] = jnp.asarray(np.pad(w1, ((0, 0), (0, latp - latent_dim)))
                                ).astype(jnp.bfloat16)
    b1 = np.zeros((1, latp), np.float32)
    b1[0, :latent_dim] = np.asarray(bf, np.float32)
    prep["fc_b1"] = jnp.asarray(b1)

    wd, bd = params["dec_fc"]            # (C0*H0*W0, latent), (C0*H0*W0,)
    w2 = (np.asarray(wd, np.float32)
            .reshape(C0, H0, W0, latent_dim).transpose(3, 1, 2, 0)
            .reshape(latent_dim, H0 * W0 * C0))
    prep["fc_w2"] = jnp.asarray(np.pad(w2, ((0, latp - latent_dim), (0, 0)))
                                ).astype(jnp.bfloat16)
    b2 = (np.asarray(bd, np.float32).reshape(C0, H0, W0)
            .transpose(1, 2, 0).reshape(1, H0 * W0 * C0))
    prep["fc_b2"] = jnp.asarray(b2)
    return prep


# ----------------------------------------------------------------------------
# Forward pass (mirrors AugmentedAutoEncoder.forward)
# ----------------------------------------------------------------------------
def forward(prep, x_nchw):
    B = x_nchw.shape[0]
    x = jnp.transpose(x_nchw, (0, 2, 3, 1)).astype(jnp.bfloat16)     # NCHW -> NHWC bf16

    for (w, bias, cout) in prep["enc_convs"]:          # Conv2d(k5,s2,p2) + ReLU
        x = encoder_conv(x, w, bias, cout, act="relu")

    _, H0, W0, C0 = x.shape                            # Flatten+Linear ; Linear+Unflatten
    z = enc_fc(x.reshape(B, H0 * W0 * C0), prep["fc_w1"], prep["fc_b1"])   # (B, 128) f32
    y = dec_fc(z.astype(jnp.bfloat16), prep["fc_w2"], prep["fc_b2"])
    y = y.reshape(B, H0, W0, C0)

    n_dec = len(prep["dec_convs"])                     # Upsample(x2)+Conv2d+act, fused
    for i, (w, bias, cout, cs) in enumerate(prep["dec_convs"]):
        act = "sigmoid" if i == n_dec - 1 else "relu"
        y = decoder_block(y, w, bias, cout, cs, act=act)

    return jnp.transpose(y, (0, 3, 1, 2)).astype(jnp.float32)        # NHWC -> NCHW


# ----------------------------------------------------------------------------
# Pure-JAX f32 reference of the PyTorch module (correctness check only)
# ----------------------------------------------------------------------------
def reference_forward(params, x_nchw, kernel_size=KSIZE, stride=STRIDE):
    prec = lax.Precision.HIGHEST
    pad = kernel_size // 2

    def conv(x, w, b, s):
        out = lax.conv_general_dilated(
            x, w, (s, s), [(pad, pad), (pad, pad)],
            dimension_numbers=("NCHW", "OIHW", "NCHW"), precision=prec)
        return out + b[None, :, None, None]

    h = x_nchw
    for (w, b) in params["enc_convs"]:
        h = jnp.maximum(conv(h, w, b, stride), 0.0)
    B = h.shape[0]
    feat = h.reshape(B, -1)                           # torch Flatten (NCHW order)
    wf, bf = params["enc_fc"]
    z = jnp.dot(feat, wf.T, precision=prec) + bf
    wd, bd = params["dec_fc"]
    y = jnp.dot(z, wd.T, precision=prec) + bd
    C0, H0, W0 = params["conv_shape"]
    y = y.reshape(B, C0, H0, W0)                      # torch Unflatten
    n_dec = len(params["dec_convs"])
    for i, (w, b) in enumerate(params["dec_convs"]):
        y = jnp.repeat(jnp.repeat(y, stride, axis=2), stride, axis=3)
        y = conv(y, w, b, 1)
        y = jax.nn.sigmoid(y) if i == n_dec - 1 else jnp.maximum(y, 0.0)
    return y


# ----------------------------------------------------------------------------
if __name__ == "__main__":
    key = jax.random.PRNGKey(0)
    kparam, kx = jax.random.split(key)

    # Small synthetic configuration consistent with the module's __init__.
    in_shape = (3, 32, 32)                 # (C, H, W)
    batch = 2
    encoder_channels = (3, 8, 16)
    latent_dim = 32

    params = init_params(kparam, in_shape, latent_dim=latent_dim,
                         encoder_channels=encoder_channels)
    prep = prepare_params(params, latent_dim)
    x = jax.random.uniform(kx, (batch,) + in_shape, jnp.float32)   # NCHW input

    fwd = jax.jit(functools.partial(forward, prep))
    out = jax.block_until_ready(fwd(x))

    assert out.shape == (batch,) + in_shape, out.shape
    assert bool(jnp.all(jnp.isfinite(out)))
    assert bool(jnp.all(out >= 0.0)) and bool(jnp.all(out <= 1.0))  # final Sigmoid

    # Compare against an f32 reference of the PyTorch module (bf16 MXU operands and
    # bf16 inter-layer activations in the Pallas path -> generous tolerance).
    ref = jax.block_until_ready(reference_forward(params, x))
    max_err = float(jnp.max(jnp.abs(out - ref)))
    assert max_err < 3e-2, f"max |pallas - reference| = {max_err}"

    print("KERNEL_OK")
</pallas_src>

<mosaic_0001>
module attributes {stable_mosaic.version = 11 : i64} {
  func.func @_conv_mm_kernel(%arg0: i32, %arg1: i32, %arg2: memref<1x256x128xbf16, #tpu.memory_space<vmem>>, %arg3: memref<128x128xbf16, #tpu.memory_space<vmem>>, %arg4: memref<1x128xf32, #tpu.memory_space<vmem>>, %arg5: memref<1x256x128xbf16, #tpu.memory_space<vmem>>) attributes {dimension_semantics = [#tpu.dimension_semantics<parallel>, #tpu.dimension_semantics<parallel>], iteration_bounds = array<i64: 2, 1>, scalar_prefetch = 0 : i64, scratch_operands = 0 : i64, tpu.core_type = #tpu.core_type<tc>, window_params = [{transform_indices = @transform_0, window_bounds = array<i64: 1, 256, 128>}, {pipeline_mode = #tpu.pipeline_mode<synchronous>, transform_indices = @transform_1, window_bounds = array<i64: 128, 128>}, {pipeline_mode = #tpu.pipeline_mode<synchronous>, transform_indices = @transform_2, window_bounds = array<i64: 1, 128>}, {transform_indices = @transform_3, window_bounds = array<i64: 1, 256, 128>}]} {
    %c0 = arith.constant 0 : index
    %c0_0 = arith.constant 0 : index
    %c0_1 = arith.constant 0 : index
    %0 = vector.load %arg2[%c0, %c0_0, %c0_1] : memref<1x256x128xbf16, #tpu.memory_space<vmem>>, vector<1x256x128xbf16>
    %1 = vector.shape_cast %0 : vector<1x256x128xbf16> to vector<256x128xbf16>
    %c0_2 = arith.constant 0 : index
    %c0_3 = arith.constant 0 : index
    %2 = vector.load %arg3[%c0_2, %c0_3] : memref<128x128xbf16, #tpu.memory_space<vmem>>, vector<128x128xbf16>
    %cst = arith.constant dense<0.000000e+00> : vector<256x128xf32>
    %3 = tpu.matmul %1, %2, %cst {dimension_numbers = #tpu.dot_dimension_numbers<[1], [0], [0], [1], [0, 0, 1, 1], [], []>} : vector<256x128xbf16>, vector<128x128xbf16>, vector<256x128xf32> -> vector<256x128xf32>
    %c0_4 = arith.constant 0 : index
    %c0_5 = arith.constant 0 : index
    %4 = vector.load %arg4[%c0_4, %c0_5] : memref<1x128xf32, #tpu.memory_space<vmem>>, vector<1x128xf32>
    %5 = vector.broadcast %4 : vector<1x128xf32> to vector<256x128xf32>
    %6 = arith.addf %3, %5 : vector<256x128xf32>
    %cst_6 = arith.constant 0.000000e+00 : f32
    %7 = vector.broadcast %cst_6 : f32 to vector<256x128xf32>
    %8 = arith.maximumf %6, %7 : vector<256x128xf32>
    %9 = arith.truncf %8 : vector<256x128xf32> to vector<256x128xbf16>
    %c0_7 = arith.constant 0 : index
    %c0_8 = arith.constant 0 : index
    %c0_9 = arith.constant 0 : index
    %10 = vector.load %arg5[%c0_7, %c0_8, %c0_9] : memref<1x256x128xbf16, #tpu.memory_space<vmem>>, vector<1x256x128xbf16>
    %11 = vector.shape_cast %10 : vector<1x256x128xbf16> to vector<256x128xbf16>
    %12 = vector.shape_cast %9 : vector<256x128xbf16> to vector<1x256x128xbf16>
    tpu.vector_store %arg5[%c0_7, %c0_8, %c0_9], %12 {strides = array<i32>} : memref<1x256x128xbf16, #tpu.memory_space<vmem>>, vector<1x256x128xbf16>,
    return
  }
  func.func @transform_0(%arg0: i32, %arg1: i32) -> (i32, i32, i32) {
    %c0_i32 = arith.constant 0 : i32
    %c0_i32_0 = arith.constant 0 : i32
    return %arg0, %arg1, %c0_i32 : i32, i32, i32
  }
  func.func @transform_1(%arg0: i32, %arg1: i32) -> (i32, i32) {
    %c0_i32 = arith.constant 0 : i32
    %c0_i32_0 = arith.constant 0 : i32
    %c0_i32_1 = arith.constant 0 : i32
    return %c0_i32, %c0_i32_0 : i32, i32
  }
  func.func @transform_2(%arg0: i32, %arg1: i32) -> (i32, i32) {
    %c0_i32 = arith.constant 0 : i32
    %c0_i32_0 = arith.constant 0 : i32
    %c0_i32_1 = arith.constant 0 : i32
    return %c0_i32, %c0_i32_0 : i32, i32
  }
  func.func @transform_3(%arg0: i32, %arg1: i32) -> (i32, i32, i32) {
    %c0_i32 = arith.constant 0 : i32
    %c0_i32_0 = arith.constant 0 : i32
    return %arg0, %arg1, %c0_i32 : i32, i32, i32
  }
}

module attributes {stable_mosaic.version = 11 : i64} {
  func.func @_conv_mm_kernel(%arg0: i32, %arg1: i32, %arg2: memref<1x64x256xbf16, #tpu.memory_space<vmem>>, %arg3: memref<256x128xbf16, #tpu.memory_space<vmem>>, %arg4: memref<1x128xf32, #tpu.memory_space<vmem>>, %arg5: memref<1x64x128xbf16, #tpu.memory_space<vmem>>) attributes {dimension_semantics = [#tpu.dimension_semantics<parallel>, #tpu.dimension_semantics<parallel>], iteration_bounds = array<i64: 2, 1>, scalar_prefetch = 0 : i64, scratch_operands = 0 : i64, tpu.core_type = #tpu.core_type<tc>, window_params = [{transform_indices = @transform_0, window_bounds = array<i64: 1, 64, 256>}, {pipeline_mode = #tpu.pipeline_mode<synchronous>, transform_indices = @transform_1, window_bounds = array<i64: 256, 128>}, {pipeline_mode = #tpu.pipeline_mode<synchronous>, transform_indices = @transform_2, window_bounds = array<i64: 1, 128>}, {transform_indices = @transform_3, window_bounds = array<i64: 1, 64, 128>}]} {
    %c0 = arith.constant 0 : index
    %c0_0 = arith.constant 0 : index
    %c0_1 = arith.constant 0 : index
    %0 = vector.load %arg2[%c0, %c0_0, %c0_1] : memref<1x64x256xbf16, #tpu.memory_space<vmem>>, vector<1x64x256xbf16>
    %1 = vector.shape_cast %0 : vector<1x64x256xbf16> to vector<64x256xbf16>
    %c0_2 = arith.constant 0 : index
    %c0_3 = arith.constant 0 : index
    %2 = vector.load %arg3[%c0_2, %c0_3] : memref<256x128xbf16, #tpu.memory_space<vmem>>, vector<256x128xbf16>
    %cst = arith.constant dense<0.000000e+00> : vector<64x128xf32>
    %3 = tpu.matmul %1, %2, %cst {dimension_numbers = #tpu.dot_dimension_numbers<[1], [0], [0], [1], [0, 0, 1, 1], [], []>} : vector<64x256xbf16>, vector<256x128xbf16>, vector<64x128xf32> -> vector<64x128xf32>
    %c0_4 = arith.constant 0 : index
    %c0_5 = arith.constant 0 : index
    %4 = vector.load %arg4[%c0_4, %c0_5] : memref<1x128xf32, #tpu.memory_space<vmem>>, vector<1x128xf32>
    %5 = vector.broadcast %4 : vector<1x128xf32> to vector<64x128xf32>
    %6 = arith.addf %3, %5 : vector<64x128xf32>
    %cst_6 = arith.constant 0.000000e+00 : f32
    %7 = vector.broadcast %cst_6 : f32 to vector<64x128xf32>
    %8 = arith.maximumf %6, %7 : vector<64x128xf32>
    %9 = arith.truncf %8 : vector<64x128xf32> to vector<64x128xbf16>
    %c0_7 = arith.constant 0 : index
    %c0_8 = arith.constant 0 : index
    %c0_9 = arith.constant 0 : index
    %10 = vector.load %arg5[%c0_7, %c0_8, %c0_9] : memref<1x64x128xbf16, #tpu.memory_space<vmem>>, vector<1x64x128xbf16>
    %11 = vector.shape_cast %10 : vector<1x64x128xbf16> to vector<64x128xbf16>
    %12 = vector.shape_cast %9 : vector<64x128xbf16> to vector<1x64x128xbf16>
    tpu.vector_store %arg5[%c0_7, %c0_8, %c0_9], %12 {strides = array<i32>} : memref<1x64x128xbf16, #tpu.memory_space<vmem>>, vector<1x64x128xbf16>,
    return
  }
  func.func @transform_0(%arg0: i32, %arg1: i32) -> (i32, i32, i32) {
    %c0_i32 = arith.constant 0 : i32
    %c0_i32_0 = arith.constant 0 : i32
    return %arg0, %arg1, %c0_i32 : i32, i32, i32
  }
  func.func @transform_1(%arg0: i32, %arg1: i32) -> (i32, i32) {
    %c0_i32 = arith.constant 0 : i32
    %c0_i32_0 = arith.constant 0 : i32
    %c0_i32_1 = arith.constant 0 : i32
    return %c0_i32, %c0_i32_0 : i32, i32
  }
  func.func @transform_2(%arg0: i32, %arg1: i32) -> (i32, i32) {
    %c0_i32 = arith.constant 0 : i32
    %c0_i32_0 = arith.constant 0 : i32
    %c0_i32_1 = arith.constant 0 : i32
    return %c0_i32, %c0_i32_0 : i32, i32
  }
  func.func @transform_3(%arg0: i32, %arg1: i32) -> (i32, i32, i32) {
    %c0_i32 = arith.constant 0 : i32
    %c0_i32_0 = arith.constant 0 : i32
    return %arg0, %arg1, %c0_i32 : i32, i32, i32
  }
}

module attributes {stable_mosaic.version = 11 : i64} {
  func.func @_dec_fc_kernel(%arg0: i32, %arg1: memref<2x128xbf16, #tpu.memory_space<vmem>>, %arg2: memref<128x1024xbf16, #tpu.memory_space<vmem>>, %arg3: memref<1x1024xf32, #tpu.memory_space<vmem>>, %arg4: memref<2x1024xbf16, #tpu.memory_space<vmem>>) attributes {dimension_semantics = [#tpu.dimension_semantics<parallel>], iteration_bounds = array<i64: 1>, scalar_prefetch = 0 : i64, scratch_operands = 0 : i64, tpu.core_type = #tpu.core_type<tc>, window_params = [{pipeline_mode = #tpu.pipeline_mode<synchronous>, transform_indices = @transform_0, window_bounds = array<i64: 2, 128>}, {transform_indices = @transform_1, window_bounds = array<i64: 128, 1024>}, {transform_indices = @transform_2, window_bounds = array<i64: 1, 1024>}, {transform_indices = @transform_3, window_bounds = array<i64: 2, 1024>}]} {
    %c0 = arith.constant 0 : index
    %c0_0 = arith.constant 0 : index
    %0 = vector.load %arg1[%c0, %c0_0] : memref<2x128xbf16, #tpu.memory_space<vmem>>, vector<2x128xbf16>
    %c0_1 = arith.constant 0 : index
    %c0_2 = arith.constant 0 : index
    %1 = vector.load %arg2[%c0_1, %c0_2] : memref<128x1024xbf16, #tpu.memory_space<vmem>>, vector<128x1024xbf16>
    %cst = arith.constant dense<0.000000e+00> : vector<2x1024xf32>
    %2 = tpu.matmul %0, %1, %cst {dimension_numbers = #tpu.dot_dimension_numbers<[1], [0], [0], [1], [0, 0, 1, 1], [], []>} : vector<2x128xbf16>, vector<128x1024xbf16>, vector<2x1024xf32> -> vector<2x1024xf32>
    %c0_3 = arith.constant 0 : index
    %c0_4 = arith.constant 0 : index
    %3 = vector.load %arg3[%c0_3, %c0_4] : memref<1x1024xf32, #tpu.memory_space<vmem>>, vector<1x1024xf32>
    %4 = vector.broadcast %3 : vector<1x1024xf32> to vector<2x1024xf32>
    %5 = arith.addf %2, %4 : vector<2x1024xf32>
    %6 = arith.truncf %5 : vector<2x1024xf32> to vector<2x1024xbf16>
    %c0_5 = arith.constant 0 : index
    %c0_6 = arith.constant 0 : index
    %7 = vector.load %arg4[%c0_5, %c0_6] : memref<2x1024xbf16, #tpu.memory_space<vmem>>, vector<2x1024xbf16>
    tpu.vector_store %arg4[%c0_5, %c0_6], %6 {strides = array<i32>} : memref<2x1024xbf16, #tpu.memory_space<vmem>>, vector<2x1024xbf16>,
    return
  }
  func.func @transform_0(%arg0: i32) -> (i32, i32) {
    %c0_i32 = arith.constant 0 : i32
    %c0_i32_0 = arith.constant 0 : i32
    %c0_i32_1 = arith.constant 0 : i32
    return %c0_i32, %c0_i32_0 : i32, i32
  }
  func.func @transform_1(%arg0: i32) -> (i32, i32) {
    %c0_i32 = arith.constant 0 : i32
    %c0_i32_0 = arith.constant 0 : i32
    return %c0_i32, %arg0 : i32, i32
  }
  func.func @transform_2(%arg0: i32) -> (i32, i32) {
    %c0_i32 = arith.constant 0 : i32
    %c0_i32_0 = arith.constant 0 : i32
    return %c0_i32, %arg0 : i32, i32
  }
  func.func @transform_3(%arg0: i32) -> (i32, i32) {
    %c0_i32 = arith.constant 0 : i32
    %c0_i32_0 = arith.constant 0 : i32
    return %c0_i32, %arg0 : i32, i32
  }
}

module attributes {stable_mosaic.version = 11 : i64} {
  func.func @_enc_fc_kernel(%arg0: i32, %arg1: memref<2x1024xbf16, #tpu.memory_space<vmem>>, %arg2: memref<1024x128xbf16, #tpu.memory_space<vmem>>, %arg3: memref<1x128xf32, #tpu.memory_space<vmem>>, %arg4: memref<2x128xf32, #tpu.memory_space<vmem>>) attributes {dimension_semantics = [#tpu.dimension_semantics<arbitrary>], iteration_bounds = array<i64: 1>, scalar_prefetch = 0 : i64, scratch_operands = 0 : i64, tpu.core_type = #tpu.core_type<tc>, window_params = [{transform_indices = @transform_0, window_bounds = array<i64: 2, 1024>}, {transform_indices = @transform_1, window_bounds = array<i64: 1024, 128>}, {pipeline_mode = #tpu.pipeline_mode<synchronous>, transform_indices = @transform_2, window_bounds = array<i64: 1, 128>}, {pipeline_mode = #tpu.pipeline_mode<synchronous>, transform_indices = @transform_3, window_bounds = array<i64: 2, 128>}]} {
    %c0_i32 = arith.constant 0 : i32
    %0 = arith.cmpi eq, %arg0, %c0_i32 : i32
    %1 = arith.extui %0 : i1 to i32
    %c0_i32_0 = arith.constant 0 : i32
    %2 = arith.cmpi ne, %1, %c0_i32_0 : i32
    scf.if %2 {
      %cst_10 = arith.constant 0.000000e+00 : f32
      %12 = vector.broadcast %cst_10 : f32 to vector<2x128xf32>
      %c0_11 = arith.constant 0 : index
      %c0_12 = arith.constant 0 : index
      %13 = vector.load %arg4[%c0_11, %c0_12] : memref<2x128xf32, #tpu.memory_space<vmem>>, vector<2x128xf32>
      tpu.vector_store %arg4[%c0_11, %c0_12], %12 {strides = array<i32>} : memref<2x128xf32, #tpu.memory_space<vmem>>, vector<2x128xf32>,
    } else {
    }
    %c0 = arith.constant 0 : index
    %c0_1 = arith.constant 0 : index
    %3 = vector.load %arg4[%c0, %c0_1] : memref<2x128xf32, #tpu.memory_space<vmem>>, vector<2x128xf32>
    %c0_2 = arith.constant 0 : index
    %c0_3 = arith.constant 0 : index
    %4 = vector.load %arg1[%c0_2, %c0_3] : memref<2x1024xbf16, #tpu.memory_space<vmem>>, vector<2x1024xbf16>
    %c0_4 = arith.constant 0 : index
    %c0_5 = arith.constant 0 : index
    %5 = vector.load %arg2[%c0_4, %c0_5] : memref<1024x128xbf16, #tpu.memory_space<vmem>>, vector<1024x128xbf16>
    %cst = arith.constant dense<0.000000e+00> : vector<2x128xf32>
    %6 = tpu.matmul %4, %5, %cst {dimension_numbers = #tpu.dot_dimension_numbers<[1], [0], [0], [1], [0, 0, 1, 1], [], []>} : vector<2x1024xbf16>, vector<1024x128xbf16>, vector<2x128xf32> -> vector<2x128xf32>
    %7 = arith.addf %3, %6 : vector<2x128xf32>
    %c0_6 = arith.constant 0 : index
    %c0_7 = arith.constant 0 : index
    %8 = vector.load %arg4[%c0_6, %c0_7] : memref<2x128xf32, #tpu.memory_space<vmem>>, vector<2x128xf32>
    tpu.vector_store %arg4[%c0_6, %c0_7], %7 {strides = array<i32>} : memref<2x128xf32, #tpu.memory_space<vmem>>, vector<2x128xf32>,
    %c0_i32_8 = arith.constant 0 : i32
    %9 = arith.cmpi eq, %arg0, %c0_i32_8 : i32
    %10 = arith.extui %9 : i1 to i32
    %c0_i32_9 = arith.constant 0 : i32
    %11 = arith.cmpi ne, %10, %c0_i32_9 : i32
    scf.if %11 {
      %c0_10 = arith.constant 0 : index
      %c0_11 = arith.constant 0 : index
      %12 = vector.load %arg4[%c0_10, %c0_11] : memref<2x128xf32, #tpu.memory_space<vmem>>, vector<2x128xf32>
      %c0_12 = arith.constant 0 : index
      %c0_13 = arith.constant 0 : index
      %13 = vector.load %arg3[%c0_12, %c0_13] : memref<1x128xf32, #tpu.memory_space<vmem>>, vector<1x128xf32>
      %14 = vector.broadcast %13 : vector<1x128xf32> to vector<2x128xf32>
      %15 = arith.addf %12, %14 : vector<2x128xf32>
      %c0_14 = arith.constant 0 : index
      %c0_15 = arith.constant 0 : index
      %16 = vector.load %arg4[%c0_14, %c0_15] : memref<2x128xf32, #tpu.memory_space<vmem>>, vector<2x128xf32>
      tpu.vector_store %arg4[%c0_14, %c0_15], %15 {strides = array<i32>} : memref<2x128xf32, #tpu.memory_space<vmem>>, vector<2x128xf32>,
    } else {
    }
    return
  }
  func.func @transform_0(%arg0: i32) -> (i32, i32) {
    %c0_i32 = arith.constant 0 : i32
    %c0_i32_0 = arith.constant 0 : i32
    return %c0_i32, %arg0 : i32, i32
  }
  func.func @transform_1(%arg0: i32) -> (i32, i32) {
    %c0_i32 = arith.constant 0 : i32
    %c0_i32_0 = arith.constant 0 : i32
    return %arg0, %c0_i32 : i32, i32
  }
  func.func @transform_2(%arg0: i32) -> (i32, i32) {
    %c0_i32 = arith.constant 0 : i32
    %c0_i32_0 = arith.constant 0 : i32
    %c0_i32_1 = arith.constant 0 : i32
    return %c0_i32, %c0_i32_0 : i32, i32
  }
  func.func @transform_3(%arg0: i32) -> (i32, i32) {
    %c0_i32 = arith.constant 0 : i32
    %c0_i32_0 = arith.constant 0 : i32
    %c0_i32_1 = arith.constant 0 : i32
    return %c0_i32, %c0_i32_0 : i32, i32
  }
}

module attributes {stable_mosaic.version = 11 : i64} {
  func.func @_conv_mm_kernel(%arg0: i32, %arg1: i32, %arg2: memref<1x256x128xbf16, #tpu.memory_space<vmem>>, %arg3: memref<128x128xbf16, #tpu.memory_space<vmem>>, %arg4: memref<1x128xf32, #tpu.memory_space<vmem>>, %arg5: memref<1x256x128xbf16, #tpu.memory_space<vmem>>) attributes {dimension_semantics = [#tpu.dimension_semantics<parallel>, #tpu.dimension_semantics<parallel>], iteration_bounds = array<i64: 2, 1>, scalar_prefetch = 0 : i64, scratch_operands = 0 : i64, tpu.core_type = #tpu.core_type<tc>, window_params = [{transform_indices = @transform_0, window_bounds = array<i64: 1, 256, 128>}, {pipeline_mode = #tpu.pipeline_mode<synchronous>, transform_indices = @transform_1, window_bounds = array<i64: 128, 128>}, {pipeline_mode = #tpu.pipeline_mode<synchronous>, transform_indices = @transform_2, window_bounds = array<i64: 1, 128>}, {transform_indices = @transform_3, window_bounds = array<i64: 1, 256, 128>}]} {
    %c0 = arith.constant 0 : index
    %c0_0 = arith.constant 0 : index
    %c0_1 = arith.constant 0 : index
    %0 = vector.load %arg2[%c0, %c0_0, %c0_1] : memref<1x256x128xbf16, #tpu.memory_space<vmem>>, vector<1x256x128xbf16>
    %1 = vector.shape_cast %0 : vector<1x256x128xbf16> to vector<256x128xbf16>
    %c0_2 = arith.constant 0 : index
    %c0_3 = arith.constant 0 : index
    %2 = vector.load %arg3[%c0_2, %c0_3] : memref<128x128xbf16, #tpu.memory_space<vmem>>, vector<128x128xbf16>
    %cst = arith.constant dense<0.000000e+00> : vector<256x128xf32>
    %3 = tpu.matmul %1, %2, %cst {dimension_numbers = #tpu.dot_dimension_numbers<[1], [0], [0], [1], [0, 0, 1, 1], [], []>} : vector<256x128xbf16>, vector<128x128xbf16>, vector<256x128xf32> -> vector<256x128xf32>
    %c0_4 = arith.constant 0 : index
    %c0_5 = arith.constant 0 : index
    %4 = vector.load %arg4[%c0_4, %c0_5] : memref<1x128xf32, #tpu.memory_space<vmem>>, vector<1x128xf32>
    %5 = vector.broadcast %4 : vector<1x128xf32> to vector<256x128xf32>
    %6 = arith.addf %3, %5 : vector<256x128xf32>
    %7 = arith.negf %6 : vector<256x128xf32>
    %8 = math.exp %7 : vector<256x128xf32>
    %cst_6 = arith.constant 1.000000e+00 : f32
    %9 = vector.broadcast %cst_6 : f32 to vector<256x128xf32>
    %10 = arith.addf %9, %8 : vector<256x128xf32>
    %11 = arith.divf %9, %10 : vector<256x128xf32>
    %12 = arith.truncf %11 : vector<256x128xf32> to vector<256x128xbf16>
    %c0_7 = arith.constant 0 : index
    %c0_8 = arith.constant 0 : index
    %c0_9 = arith.constant 0 : index
    %13 = vector.load %arg5[%c0_7, %c0_8, %c0_9] : memref<1x256x128xbf16, #tpu.memory_space<vmem>>, vector<1x256x128xbf16>
    %14 = vector.shape_cast %13 : vector<1x256x128xbf16> to vector<256x128xbf16>
    %15 = vector.shape_cast %12 : vector<256x128xbf16> to vector<1x256x128xbf16>
    tpu.vector_store %arg5[%c0_7, %c0_8, %c0_9], %15 {strides = array<i32>} : memref<1x256x128xbf16, #tpu.memory_space<vmem>>, vector<1x256x128xbf16>,
    return
  }
  func.func @transform_0(%arg0: i32, %arg1: i32) -> (i32, i32, i32) {
    %c0_i32 = arith.constant 0 : i32
    %c0_i32_0 = arith.constant 0 : i32
    return %arg0, %arg1, %c0_i32 : i32, i32, i32
  }
  func.func @transform_1(%arg0: i32, %arg1: i32) -> (i32, i32) {
    %c0_i32 = arith.constant 0 : i32
    %c0_i32_0 = arith.constant 0 : i32
    %c0_i32_1 = arith.constant 0 : i32
    return %c0_i32, %c0_i32_0 : i32, i32
  }
  func.func @transform_2(%arg0: i32, %arg1: i32) -> (i32, i32) {
    %c0_i32 = arith.constant 0 : i32
    %c0_i32_0 = arith.constant 0 : i32
    %c0_i32_1 = arith.constant 0 : i32
    return %c0_i32, %c0_i32_0 : i32, i32
  }
  func.func @transform_3(%arg0: i32, %arg1: i32) -> (i32, i32, i32) {
    %c0_i32 = arith.constant 0 : i32
    %c0_i32_0 = arith.constant 0 : i32
    return %arg0, %arg1, %c0_i32 : i32, i32, i32
  }
}

</mosaic_0001>

<llo_original>
// kernel: forward.6
$region0: #{forward.6}
  #allocation0 [shape = 'u32[]', space=smem, size = 0x4, offset = 0x4, fixed_abs, tag = 'smem constant byte address 0x4 - core index']
  #allocation1 [shape = 'u32[72,128]{1,0:T(1,128)}', space=vmem, size = 0x9000, scoped, tag = 'internal scratch']
  %s0 = inlined_call_operand.vmem [shape: bf16[2,256,128], index: 0, kind: input, shape index: {}]
  %s1 = inlined_call_operand.vmem [shape: bf16[128,128], index: 1, kind: input, shape index: {}]
  %s2 = inlined_call_operand.vmem [shape: f32[1,128], index: 2, kind: input, shape index: {}]
  %s3 = inlined_call_operand.vmem [shape: bf16[2,256,128], index: 3, kind: output, shape index: {}]
  %s4 = sld [smem:[#allocation0]]
  $region45: #{forward.6} parent=0
    _
  %s6 = ssub.s32 1, %s4
  %s7 = scalar_select 0, %s6, %s4
  loop: start=0, step=1, limit=4
  $region2: #{forward.6} parent=0 // loop_pre_header
    _
  $region3: #{forward.6} parent=0 // loop_header
    %s9 = sphi 0, %s13
    %p10 = scmp.ge.s32.totalorder %s9, 4
    %s16 = sphi 0, %s28
    %s17 = sphi 0, %s24
    %s18 = sphi 0, %s16
    %s19 = sphi 0, %s17
    %s20 = sphi 0, %s18
    %s21 = sphi 0, %s19
    %s33 = sphi 0, %s35
    %s36 = sphi 0, %s33
    %s37 = sphi 0, %s36
    %s53 = sphi 0, %s37
    %s57 = sphi 0, %s57
    %s59 = sphi 0, %s57
    %s60 = sphi 0, %s59
    %s74 = sphi 0, %s60
    %s78 = sphi 0, %s78
    %s80 = sphi 0, %s78
    %s81 = sphi 0, %s80
    %s95 = sphi 0, %s81
    %s103 = sphi 0, %s105
    %s106 = sphi 0, %s103
    %s107 = sphi 0, %s106
    %s123 = sphi 0, %s107
  $region4: #{forward.6} parent=0 // loop_header_branch
    %12 = sbr.rel (%p10) target = $region8
  $region5: #{forward.6} parent=0 // loop_body
    %s14 = ssub.s32 %s9, 1
    %s15 = ssub.s32 %s9, 2
    %s22 = sadd.s32 1, %s17
    %p23 = scmp.ge.s32.totalorder %s22, 1
    %s24 = scalar_select %p23, 0, %s22
    %s25 = sadd.s32 1, %s16
    %s26 = scalar_select %p23, %s25, %s16
    %p27 = scmp.ge.s32.totalorder %s26, 2
    %s28 = scalar_select %p27, 0, %s26
    %s29 = ssub.s32 %s16, %s28
    %s30 = ssub.s32 %s17, %s24
    %s31 = sor.u32 %s29, %s30
    %p32 = scmp.eq.s32.totalorder %s31, 0
    %s34 = sadd.s32 %s33, 1
    %s35 = scalar_select %p32, %s33, %s34
    %p38 = pneg %p32
    %p39 = scmp.eq.s32.totalorder %s9, 1
    %p40 = por %p38, %p39
    %p41 = scmp.ne.s32.totalorder %s33, %s36
    %p42 = scmp.eq.s32.totalorder %s9, 0
    %p43 = por %p41, %p42
    %p44 = scmp.ne.s32.totalorder %s33, %s36
    %p45 = scmp.eq.s32.totalorder %s14, 1
    %p46 = por %p44, %p45
    %p47 = scmp.ne.s32.totalorder %s36, %s37
    %p48 = scmp.eq.s32.totalorder %s14, 0
    %p49 = por %p47, %p48
    %p50 = scmp.ne.s32.totalorder %s36, %s37
    %p51 = scmp.eq.s32.totalorder %s15, 1
    %p52 = por %p50, %p51
    %p54 = scmp.ne.s32.totalorder %s37, %s53
    %p55 = scmp.eq.s32.totalorder %s15, 0
    %p56 = por %p54, %p55
    %s58 = sadd.s32 %s57, 1
    %p61 = scmp.eq.s32.totalorder %s9, 1
    %p62 = scmp.ne.s32.totalorder %s57, %s59
    %p63 = scmp.eq.s32.totalorder %s9, 0
    %p64 = por %p62, %p63
    %p65 = scmp.ne.s32.totalorder %s57, %s59
    %p66 = scmp.eq.s32.totalorder %s14, 1
    %p67 = por %p65, %p66
    %p68 = scmp.ne.s32.totalorder %s59, %s60
    %p69 = scmp.eq.s32.totalorder %s14, 0
    %p70 = por %p68, %p69
    %p71 = scmp.ne.s32.totalorder %s59, %s60
    %p72 = scmp.eq.s32.totalorder %s15, 1
    %p73 = por %p71, %p72
    %p75 = scmp.ne.s32.totalorder %s60, %s74
    %p76 = scmp.eq.s32.totalorder %s15, 0
    %p77 = por %p75, %p76
    %s79 = sadd.s32 %s78, 1
    %p82 = scmp.eq.s32.totalorder %s9, 1
    %p83 = scmp.ne.s32.totalorder %s78, %s80
    %p84 = scmp.eq.s32.totalorder %s9, 0
    %p85 = por %p83, %p84
    %p86 = scmp.ne.s32.totalorder %s78, %s80
    %p87 = scmp.eq.s32.totalorder %s14, 1
    %p88 = por %p86, %p87
    %p89 = scmp.ne.s32.totalorder %s80, %s81
    %p90 = scmp.eq.s32.totalorder %s14, 0
    %p91 = por %p89, %p90
    %p92 = scmp.ne.s32.totalorder %s80, %s81
    %p93 = scmp.eq.s32.totalorder %s15, 1
    %p94 = por %p92, %p93
    %p96 = scmp.ne.s32.totalorder %s81, %s95
    %p97 = scmp.eq.s32.totalorder %s15, 0
    %p98 = por %p96, %p97
    %s99 = ssub.s32 %s16, %s28
    %s100 = ssub.s32 %s17, %s24
    %s101 = sor.u32 %s99, %s100
    %p102 = scmp.eq.s32.totalorder %s101, 0
    %s104 = sadd.s32 %s103, 1
    %s105 = scalar_select %p102, %s103, %s104
    %p108 = pneg %p102
    %p109 = scmp.eq.s32.totalorder %s9, 1
    %p110 = por %p108, %p109
    %p111 = scmp.ne.s32.totalorder %s103, %s106
    %p112 = scmp.eq.s32.totalorder %s9, 0
    %p113 = por %p111, %p112
    %p114 = scmp.ne.s32.totalorder %s103, %s106
    %p115 = scmp.eq.s32.totalorder %s14, 1
    %p116 = por %p114, %p115
    %p117 = scmp.ne.s32.totalorder %s106, %s107
    %p118 = scmp.eq.s32.totalorder %s14, 0
    %p119 = por %p117, %p118
    %p120 = scmp.ne.s32.totalorder %s106, %s107
    %p121 = scmp.eq.s32.totalorder %s15, 1
    %p122 = por %p120, %p121
    %p124 = scmp.ne.s32.totalorder %s107, %s123
    %p125 = scmp.eq.s32.totalorder %s15, 0
    %p126 = por %p124, %p125
    %p127 = scmp.le.s32.totalorder 1, %s9
    %p128 = scmp.lt.s32.totalorder %s9, 3
    %p129 = pnand %p127, %p128
    %p130 = pneg %p129
    // Predicated region
    $region9: #{forward.6} parent=5 // pred_check
      _
    $region10: #{forward.6} parent=5 // pred_check_branch
      %132 = sbr.rel (%p129) target = $region12
    $region11: #{forward.6} parent=5 // pred_region
      %s133 = ssub.s32 %s9, 1
      // Predicated region
      $region13: #{forward.6} parent=11 // pred_check
        %p134 = pneg %p70
      $region14: #{forward.6} parent=11 // pred_check_branch
        %136 = sbr.rel (%p134) target = $region16
      $region15: #{forward.6} parent=11 // pred_region
        _
      $region16: #{forward.6} parent=11 // pred_fallthru
        _
      // Predicated region
      $region17: #{forward.6} parent=11 // pred_check
        %p137 = pneg %p91
      $region18: #{forward.6} parent=11 // pred_check_branch
        %139 = sbr.rel (%p137) target = $region20
      $region19: #{forward.6} parent=11 // pred_region
        _
      $region20: #{forward.6} parent=11 // pred_fallthru
        _
    $region12: #{forward.6} parent=5 // pred_fallthru
      _
    %p140 = scmp.lt.s32.totalorder %s9, 2
    // Predicated region
    $region21: #{forward.6} parent=5 // pred_check
      %p141 = pneg %p140
    $region22: #{forward.6} parent=5 // pred_check_branch
      %143 = sbr.rel (%p141) target = $region24
    $region23: #{forward.6} parent=5 // pred_region
      // Predicated region
      $region25: #{forward.6} parent=23 // pred_check
        %p144 = pneg %p43
      $region26: #{forward.6} parent=23 // pred_check_branch
        %146 = sbr.rel (%p144) target = $region28
      $region27: #{forward.6} parent=23 // pred_region
        %s147 = smul.u32 32, %s17
        %p148 = scmp.lt.s32.totalorder %s16, 1
        %s149 = scalar_select %p148, %s16, 1
        %p150 = scmp.lt.s32.totalorder %s147, 31
        %s151 = scalar_select %p150, %s147, 31
        %s152 = smul.addr %s149, 32
        %s153 = sadd.s32 %s151, %s152
        %s154 = smul.addr %s153, 4
        %s155 = scalar_lea.vmem %s0, %s154
        %s156 = smul.u32 32, %s17
      $region28: #{forward.6} parent=23 // pred_fallthru
        _
    $region24: #{forward.6} parent=5 // pred_fallthru
      _
    %p157 = scmp.le.s32.totalorder 1, %s9
    %p158 = scmp.lt.s32.totalorder %s9, 3
    %p159 = pnand %p157, %p158
    %p160 = pneg %p159
    // Predicated region
    $region29: #{forward.6} parent=5 // pred_check
      _
    $region30: #{forward.6} parent=5 // pred_check_branch
      %162 = sbr.rel (%p159) target = $region32
    $region31: #{forward.6} parent=5 // pred_region
      %s163 = ssub.s32 %s9, 1
      %s164 = smul.u32 32, %s19
      %p165 = scmp.lt.s32.totalorder %s18, 1
      %s166 = scalar_select %p165, %s18, 1
      %p167 = scmp.lt.s32.totalorder %s164, 31
      %s168 = scalar_select %p167, %s164, 31
      %s169 = smul.addr %s166, 32
      %s170 = sadd.s32 %s168, %s169
      %s171 = smul.addr %s170, 4
      %s172 = scalar_lea.vmem %s0, %s171
      %p173 = pneg %p49
      %p174 = pneg %p46
      %p175 = pneg %p70
      %p176 = pneg %p67
      %p177 = pneg %p91
      %p178 = pneg %p88
      %p179 = pneg %p119
      %p180 = pneg %p116
      %s181 = smul.u32 32, %s19
      %p182 = scmp.lt.s32.totalorder %s18, 1
      %s183 = scalar_select %p182, %s18, 1
      %p184 = scmp.lt.s32.totalorder %s181, 31
      %s185 = scalar_select %p184, %s181, 31
      %s186 = smul.addr %s183, 32
      %s187 = sadd.s32 %s185, %s186
      %s188 = smul.addr %s187, 4
      %s189 = scalar_lea.vmem %s3, %s188
      %s190 = smul.u32 32, %s19
      %p191 = scmp.lt.s32.totalorder %s18, 1
      %s192 = scalar_select %p191, %s18, 1
      %p193 = scmp.lt.s32.totalorder %s190, 31
      %s194 = scalar_select %p193, %s190, 31
      %s195 = smul.addr %s192, 32
      %s196 = sadd.s32 %s194, %s195
      %s197 = smul.addr %s196, 4
      %s198 = scalar_lea.vmem %s0, %s197
      %s199 = smul.u32 32, %s19
      %s200 = smul.u32 32, %s19
      %p201 = scmp.lt.s32.totalorder %s18, 1
      %s202 = scalar_select %p201, %s18, 1
      %p203 = scmp.lt.s32.totalorder %s200, 31
      %s204 = scalar_select %p203, %s200, 31
      %s205 = smul.addr %s202, 32
      %s206 = sadd.s32 %s204, %s205
      %s207 = smul.addr %s206, 4
      %s208 = scalar_lea.vmem %s3, %s207
      %s209 = smul.u32 32, %s19
      %v210 = vld [vmem:[%s198] sm:$0xf]
      %v211 = vld [vmem:[%s198 + $0x4] sm:$0xf]
      %v212 = vld [vmem:[%s198 + $0x8] sm:$0xf]
      %v213 = vld [vmem:[%s198 + $0xc] sm:$0xf]
      %v214 = vld [vmem:[%s198 + $0x10] sm:$0xf]
      %v215 = vld [vmem:[%s198 + $0x14] sm:$0xf]
      %v216 = vld [vmem:[%s198 + $0x18] sm:$0xf]
      %v217 = vld [vmem:[%s198 + $0x1c] sm:$0xf]
      %v218 = vld [vmem:[%s198 + $0x20] sm:$0xf]
      %v219 = vld [vmem:[%s198 + $0x24] sm:$0xf]
      %v220 = vld [vmem:[%s198 + $0x28] sm:$0xf]
      %v221 = vld [vmem:[%s198 + $0x2c] sm:$0xf]
      %v222 = vld [vmem:[%s198 + $0x30] sm:$0xf]
      %v223 = vld [vmem:[%s198 + $0x34] sm:$0xf]
      %v224 = vld [vmem:[%s198 + $0x38] sm:$0xf]
      %v225 = vld [vmem:[%s198 + $0x3c] sm:$0xf]
      %v226 = vld [vmem:[%s198 + $0x40] sm:$0xf]
      %v227 = vld [vmem:[%s198 + $0x44] sm:$0xf]
      %v228 = vld [vmem:[%s198 + $0x48] sm:$0xf]
      %v229 = vld [vmem:[%s198 + $0x4c] sm:$0xf]
      %v230 = vld [vmem:[%s198 + $0x50] sm:$0xf]
      %v231 = vld [vmem:[%s198 + $0x54] sm:$0xf]
      %v232 = vld [vmem:[%s198 + $0x58] sm:$0xf]
      %v233 = vld [vmem:[%s198 + $0x5c] sm:$0xf]
      %v234 = vld [vmem:[%s198 + $0x60] sm:$0xf]
      %v235 = vld [vmem:[%s198 + $0x64] sm:$0xf]
      %v236 = vld [vmem:[%s198 + $0x68] sm:$0xf]
      %v237 = vld [vmem:[%s198 + $0x6c] sm:$0xf]
      %v238 = vld [vmem:[%s198 + $0x70] sm:$0xf]
      %v239 = vld [vmem:[%s198 + $0x74] sm:$0xf]
      %v240 = vld [vmem:[%s198 + $0x78] sm:$0xf]
      %v241 = vld [vmem:[%s198 + $0x7c] sm:$0xf]
      %v242 = vld [vmem:[%s1] sm:$0xf]
      %v243 = vld [vmem:[%s1 + $0x4] sm:$0xf]
      %v244 = vld [vmem:[%s1 + $0x8] sm:$0xf]
      %v245 = vld [vmem:[%s1 + $0xc] sm:$0xf]
      %v246 = vld [vmem:[%s1 + $0x10] sm:$0xf]
      %v247 = vld [vmem:[%s1 + $0x14] sm:$0xf]
      %v248 = vld [vmem:[%s1 + $0x18] sm:$0xf]
      %v249 = vld [vmem:[%s1 + $0x1c] sm:$0xf]
      %v250 = vld [vmem:[%s1 + $0x20] sm:$0xf]
      %v251 = vld [vmem:[%s1 + $0x24] sm:$0xf]
      %v252 = vld [vmem:[%s1 + $0x28] sm:$0xf]
      %v253 = vld [vmem:[%s1 + $0x2c] sm:$0xf]
      %v254 = vld [vmem:[%s1 + $0x30] sm:$0xf]
      %v255 = vld [vmem:[%s1 + $0x34] sm:$0xf]
      %v256 = vld [vmem:[%s1 + $0x38] sm:$0xf]
      %v257 = vld [vmem:[%s1 + $0x3c] sm:$0xf]
      %v258 = vld [vmem:[%s2] sm:$0x1]
      %v260 = vperm.slane %v258, 0
      %v294 = vunpack.c.l.b16 %v210
      %v295 = vunpack.c.l.b16 %v211
      %v296 = vunpack.c.l.b16 %v212
      %v297 = vunpack.c.l.b16 %v213
      %v298 = vunpack.c.l.b16 %v214
      %v299 = vunpack.c.l.b16 %v215
      %v300 = vunpack.c.l.b16 %v216
      %v301 = vunpack.c.l.b16 %v217
      %v302 = vunpack.c.l.b16 %v218
      %v303 = vunpack.c.l.b16 %v219
      %v304 = vunpack.c.l.b16 %v220
      %v305 = vunpack.c.l.b16 %v221
      %v306 = vunpack.c.l.b16 %v222
      %v307 = vunpack.c.l.b16 %v223
      %v308 = vunpack.c.l.b16 %v224
      %v309 = vunpack.c.l.b16 %v225
      %v310 = vunpack.c.l.b16 %v226
      %v311 = vunpack.c.l.b16 %v227
      %v312 = vunpack.c.l.b16 %v228
      %v313 = vunpack.c.l.b16 %v229
      %v314 = vunpack.c.l.b16 %v230
      %v315 = vunpack.c.l.b16 %v231
      %v316 = vunpack.c.l.b16 %v232
      %v317 = vunpack.c.l.b16 %v233
      %v318 = vunpack.c.l.b16 %v234
      %v319 = vunpack.c.l.b16 %v235
      %v320 = vunpack.c.l.b16 %v236
      %v321 = vunpack.c.l.b16 %v237
      %v322 = vunpack.c.l.b16 %v238
      %v323 = vunpack.c.l.b16 %v239
      %v324 = vunpack.c.l.b16 %v240
      %v325 = vunpack.c.l.b16 %v241
      %v326 = vpack.c.b16 %v295, %v294
      %v327 = vpack.c.b16 %v297, %v296
      %v328 = vpack.c.b16 %v299, %v298
      %v329 = vpack.c.b16 %v301, %v300
      %v330 = vpack.c.b16 %v303, %v302
      %v331 = vpack.c.b16 %v305, %v304
      %v332 = vpack.c.b16 %v307, %v306
      %v333 = vpack.c.b16 %v309, %v308
      %v334 = vpack.c.b16 %v311, %v310
      %v335 = vpack.c.b16 %v313, %v312
      %v336 = vpack.c.b16 %v315, %v314
      %v337 = vpack.c.b16 %v317, %v316
      %v338 = vpack.c.b16 %v319, %v318
      %v339 = vpack.c.b16 %v321, %v320
      %v340 = vpack.c.b16 %v323, %v322
      %v341 = vpack.c.b16 %v325, %v324
      %v374 = vunpack.c.l.b16 %v242
      %v375 = vunpack.c.l.b16 %v243
      %v376 = vunpack.c.l.b16 %v244
      %v377 = vunpack.c.l.b16 %v245
      %v378 = vunpack.c.l.b16 %v246
      %v379 = vunpack.c.l.b16 %v247
      %v380 = vunpack.c.l.b16 %v248
      %v381 = vunpack.c.l.b16 %v249
      %v382 = vunpack.c.l.b16 %v250
      %v383 = vunpack.c.l.b16 %v251
      %v384 = vunpack.c.l.b16 %v252
      %v385 = vunpack.c.l.b16 %v253
      %v386 = vunpack.c.l.b16 %v254
      %v387 = vunpack.c.l.b16 %v255
      %v388 = vunpack.c.l.b16 %v256
      %v389 = vunpack.c.l.b16 %v257
      %v390 = vpack.c.b16 %v375, %v374
      %v391 = vpack.c.b16 %v377, %v376
      %v392 = vpack.c.b16 %v379, %v378
      %v393 = vpack.c.b16 %v381, %v380
      %v394 = vpack.c.b16 %v383, %v382
      %v395 = vpack.c.b16 %v385, %v384
      %v396 = vpack.c.b16 %v387, %v386
      %v397 = vpack.c.b16 %v389, %v388
      %406 = vmatpush.bf16.msra.mxu0 %v397
      %407 = vmatpush.bf16.msra.mxu0 %v396
      %408 = vmatpush.bf16.msra.mxu0 %v395
      %409 = vmatpush.bf16.msra.mxu0 %v394
      %410 = vmatpush.bf16.msra.mxu0 %v393
      %411 = vmatpush.bf16.msra.mxu0 %v392
      %412 = vmatpush.bf16.msra.mxu0 %v391
      %413 = vmatpush.bf16.msra.mxu0 %v390
      %414 = vmatmul.bf16.gmra.mxu0 %v326
      %v415 = vpop.f32.mrf.mxu0
      %v416 = vadd.f32 %v260, %v415
      %v417 = vpop.f32.mrf.mxu0
      %v418 = vadd.f32 %v260, %v417
      %419 = vmatmul.bf16.gmra.mxu0 %v327
      %v420 = vpop.f32.mrf.mxu0
      %v421 = vadd.f32 %v260, %v420
      %v422 = vpop.f32.mrf.mxu0
      %v423 = vadd.f32 %v260, %v422
      %424 = vmatmul.bf16.gmra.mxu0 %v328
      %v425 = vpop.f32.mrf.mxu0
      %v426 = vadd.f32 %v260, %v425
      %v427 = vpop.f32.mrf.mxu0
      %v428 = vadd.f32 %v260, %v427
      %429 = vmatmul.bf16.gmra.mxu0 %v329
      %v430 = vpop.f32.mrf.mxu0
      %v431 = vadd.f32 %v260, %v430
      %v432 = vpop.f32.mrf.mxu0
      %v433 = vadd.f32 %v260, %v432
      %434 = vmatmul.bf16.gmra.mxu0 %v330
      %v435 = vpop.f32.mrf.mxu0
      %v436 = vadd.f32 %v260, %v435
      %v437 = vpop.f32.mrf.mxu0
      %v438 = vadd.f32 %v260, %v437
      %439 = vmatmul.bf16.gmra.mxu0 %v331
      %v440 = vpop.f32.mrf.mxu0
      %v441 = vadd.f32 %v260, %v440
      %v442 = vpop.f32.mrf.mxu0
      %v443 = vadd.f32 %v260, %v442
      %444 = vmatmul.bf16.gmra.mxu0 %v332
      %v445 = vpop.f32.mrf.mxu0
      %v446 = vadd.f32 %v260, %v445
      %v447 = vpop.f32.mrf.mxu0
      %v448 = vadd.f32 %v260, %v447
      %449 = vmatmul.bf16.gmra.mxu0 %v333
      %v450 = vpop.f32.mrf.mxu0
      %v451 = vadd.f32 %v260, %v450
      %v452 = vpop.f32.mrf.mxu0
      %v453 = vadd.f32 %v260, %v452
      %454 = vmatmul.bf16.gmra.mxu0 %v334
      %v455 = vpop.f32.mrf.mxu0
      %v456 = vadd.f32 %v260, %v455
      %v457 = vpop.f32.mrf.mxu0
      %v458 = vadd.f32 %v260, %v457
      %459 = vmatmul.bf16.gmra.mxu0 %v335
      %v460 = vpop.f32.mrf.mxu0
      %v461 = vadd.f32 %v260, %v460
      %v462 = vpop.f32.mrf.mxu0
      %v463 = vadd.f32 %v260, %v462
      %464 = vmatmul.bf16.gmra.mxu0 %v336
      %v465 = vpop.f32.mrf.mxu0
      %v466 = vadd.f32 %v260, %v465
      %v467 = vpop.f32.mrf.mxu0
      %v468 = vadd.f32 %v260, %v467
      %469 = vmatmul.bf16.gmra.mxu0 %v337
      %v470 = vpop.f32.mrf.mxu0
      %v471 = vadd.f32 %v260, %v470
      %v472 = vpop.f32.mrf.mxu0
      %v473 = vadd.f32 %v260, %v472
      %474 = vmatmul.bf16.gmra.mxu0 %v338
      %v475 = vpop.f32.mrf.mxu0
      %v476 = vadd.f32 %v260, %v475
      %v477 = vpop.f32.mrf.mxu0
      %v478 = vadd.f32 %v260, %v477
      %479 = vmatmul.bf16.gmra.mxu0 %v339
      %v480 = vpop.f32.mrf.mxu0
      %v481 = vadd.f32 %v260, %v480
      %v482 = vpop.f32.mrf.mxu0
      %v483 = vadd.f32 %v260, %v482
      %484 = vmatmul.bf16.gmra.mxu0 %v340
      %v485 = vpop.f32.mrf.mxu0
      %v486 = vadd.f32 %v260, %v485
      %v487 = vpop.f32.mrf.mxu0
      %v488 = vadd.f32 %v260, %v487
      %489 = vmatmul.bf16.gmra.mxu0 %v341
      %v490 = vpop.f32.mrf.mxu0
      %v491 = vadd.f32 %v260, %v490
      %v492 = vpop.f32.mrf.mxu0
      %v493 = vadd.f32 %v260, %v492
      %494 = vdwg.mxu0
      %v495 = vmax.f32 %v416, 0.0
      %v496 = vmax.f32 %v418, 0.0
      %v497 = vmax.f32 %v421, 0.0
      %v498 = vmax.f32 %v423, 0.0
      %v499 = vmax.f32 %v426, 0.0
      %v500 = vmax.f32 %v428, 0.0
      %v501 = vmax.f32 %v431, 0.0
      %v502 = vmax.f32 %v433, 0.0
      %v503 = vmax.f32 %v436, 0.0
      %v504 = vmax.f32 %v438, 0.0
      %v505 = vmax.f32 %v441, 0.0
      %v506 = vmax.f32 %v443, 0.0
      %v507 = vmax.f32 %v446, 0.0
      %v508 = vmax.f32 %v448, 0.0
      %v509 = vmax.f32 %v451, 0.0
      %v510 = vmax.f32 %v453, 0.0
      %v511 = vmax.f32 %v456, 0.0
      %v512 = vmax.f32 %v458, 0.0
      %v513 = vmax.f32 %v461, 0.0
      %v514 = vmax.f32 %v463, 0.0
      %v515 = vmax.f32 %v466, 0.0
      %v516 = vmax.f32 %v468, 0.0
      %v517 = vmax.f32 %v471, 0.0
      %v518 = vmax.f32 %v473, 0.0
      %v519 = vmax.f32 %v476, 0.0
      %v520 = vmax.f32 %v478, 0.0
      %v521 = vmax.f32 %v481, 0.0
      %v522 = vmax.f32 %v483, 0.0
      %v523 = vmax.f32 %v486, 0.0
      %v524 = vmax.f32 %v488, 0.0
      %v525 = vmax.f32 %v491, 0.0
      %v526 = vmax.f32 %v493, 0.0
      %v527 = vpack.c.bf16 %v495, %v495
      %v528 = vpack.c.bf16 %v496, %v496
      %v529 = vpack.c.bf16 %v497, %v497
      %v530 = vpack.c.bf16 %v498, %v498
      %v531 = vpack.c.bf16 %v499, %v499
      %v532 = vpack.c.bf16 %v500, %v500
      %v533 = vpack.c.bf16 %v501, %v501
      %v534 = vpack.c.bf16 %v502, %v502
      %v535 = vpack.c.bf16 %v503, %v503
      %v536 = vpack.c.bf16 %v504, %v504
      %v537 = vpack.c.bf16 %v505, %v505
      %v538 = vpack.c.bf16 %v506, %v506
      %v539 = vpack.c.bf16 %v507, %v507
      %v540 = vpack.c.bf16 %v508, %v508
      %v541 = vpack.c.bf16 %v509, %v509
      %v542 = vpack.c.bf16 %v510, %v510
      %v543 = vpack.c.bf16 %v511, %v511
      %v544 = vpack.c.bf16 %v512, %v512
      %v545 = vpack.c.bf16 %v513, %v513
      %v546 = vpack.c.bf16 %v514, %v514
      %v547 = vpack.c.bf16 %v515, %v515
      %v548 = vpack.c.bf16 %v516, %v516
      %v549 = vpack.c.bf16 %v517, %v517
      %v550 = vpack.c.bf16 %v518, %v518
      %v551 = vpack.c.bf16 %v519, %v519
      %v552 = vpack.c.bf16 %v520, %v520
      %v553 = vpack.c.bf16 %v521, %v521
      %v554 = vpack.c.bf16 %v522, %v522
      %v555 = vpack.c.bf16 %v523, %v523
      %v556 = vpack.c.bf16 %v524, %v524
      %v557 = vpack.c.bf16 %v525, %v525
      %v558 = vpack.c.bf16 %v526, %v526
      %559 = vst [vmem:[%s208] sm:$0xf] %v527
      %560 = vst [vmem:[%s208 + $0x4] sm:$0xf] %v528
      %561 = vst [vmem:[%s208 + $0x8] sm:$0xf] %v529
      %562 = vst [vmem:[%s208 + $0xc] sm:$0xf] %v530
      %563 = vst [vmem:[%s208 + $0x10] sm:$0xf] %v531
      %564 = vst [vmem:[%s208 + $0x14] sm:$0xf] %v532
      %565 = vst [vmem:[%s208 + $0x18] sm:$0xf] %v533
      %566 = vst [vmem:[%s208 + $0x1c] sm:$0xf] %v534
      %567 = vst [vmem:[%s208 + $0x20] sm:$0xf] %v535
      %568 = vst [vmem:[%s208 + $0x24] sm:$0xf] %v536
      %569 = vst [vmem:[%s208 + $0x28] sm:$0xf] %v537
      %570 = vst [vmem:[%s208 + $0x2c] sm:$0xf] %v538
      %571 = vst [vmem:[%s208 + $0x30] sm:$0xf] %v539
      %572 = vst [vmem:[%s208 + $0x34] sm:$0xf] %v540
      %573 = vst [vmem:[%s208 + $0x38] sm:$0xf] %v541
      %574 = vst [vmem:[%s208 + $0x3c] sm:$0xf] %v542
      %575 = vst [vmem:[%s208 + $0x40] sm:$0xf] %v543
      %576 = vst [vmem:[%s208 + $0x44] sm:$0xf] %v544
      %577 = vst [vmem:[%s208 + $0x48] sm:$0xf] %v545
      %578 = vst [vmem:[%s208 + $0x4c] sm:$0xf] %v546
      %579 = vst [vmem:[%s208 + $0x50] sm:$0xf] %v547
      %580 = vst [vmem:[%s208 + $0x54] sm:$0xf] %v548
      %581 = vst [vmem:[%s208 + $0x58] sm:$0xf] %v549
      %582 = vst [vmem:[%s208 + $0x5c] sm:$0xf] %v550
      %583 = vst [vmem:[%s208 + $0x60] sm:$0xf] %v551
      %584 = vst [vmem:[%s208 + $0x64] sm:$0xf] %v552
      %585 = vst [vmem:[%s208 + $0x68] sm:$0xf] %v553
      %586 = vst [vmem:[%s208 + $0x6c] sm:$0xf] %v554
      %587 = vst [vmem:[%s208 + $0x70] sm:$0xf] %v555
      %588 = vst [vmem:[%s208 + $0x74] sm:$0xf] %v556
      %589 = vst [vmem:[%s208 + $0x78] sm:$0xf] %v557
      %590 = vst [vmem:[%s208 + $0x7c] sm:$0xf] %v558
      %s591 = smul.u32 32, %s19
      %p592 = scmp.lt.s32.totalorder %s18, 1
      %s593 = scalar_select %p592, %s18, 1
      %p594 = scmp.lt.s32.totalorder %s591, 31
      %s595 = scalar_select %p594, %s591, 31
      %s596 = smul.addr %s593, 32
      %s597 = sadd.s32 %s595, %s596
      %s598 = smul.addr %s597, 4
      %s599 = scalar_lea.vmem %s3, %s598
      // Predicated region
      $region33: #{forward.6} parent=31 // pred_check
        %p600 = pneg %p116
      $region34: #{forward.6} parent=31 // pred_check_branch
        %602 = sbr.rel (%p600) target = $region36
      $region35: #{forward.6} parent=31 // pred_region
        %s603 = smul.u32 32, %s19
      $region36: #{forward.6} parent=31 // pred_fallthru
        _
    $region32: #{forward.6} parent=5 // pred_fallthru
      _
    %p604 = scmp.le.s32.totalorder 2, %s9
    // Predicated region
    $region37: #{forward.6} parent=5 // pred_check
      %p605 = pneg %p604
    $region38: #{forward.6} parent=5 // pred_check_branch
      %607 = sbr.rel (%p605) target = $region40
    $region39: #{forward.6} parent=5 // pred_region
      %s608 = ssub.s32 %s9, 2
      // Predicated region
      $region41: #{forward.6} parent=39 // pred_check
        %p609 = pneg %p122
      $region42: #{forward.6} parent=39 // pred_check_branch
        %611 = sbr.rel (%p609) target = $region44
      $region43: #{forward.6} parent=39 // pred_region
        %s612 = smul.u32 32, %s21
        %p613 = scmp.lt.s32.totalorder %s20, 1
        %s614 = scalar_select %p613, %s20, 1
        %p615 = scmp.lt.s32.totalorder %s612, 31
        %s616 = scalar_select %p615, %s612, 31
        %s617 = smul.addr %s614, 32
        %s618 = sadd.s32 %s616, %s617
        %s619 = smul.addr %s618, 4
        %s620 = scalar_lea.vmem %s3, %s619
      $region44: #{forward.6} parent=39 // pred_fallthru
        _
    $region40: #{forward.6} parent=5 // pred_fallthru
      _
  $region6: #{forward.6} parent=0 // loop_footer
    %s13 = sadd.s32 1, %s9
  $region7: #{forward.6} parent=0 // loop_footer_branch
    %8 = sbr.rel target = $region3
  $region8: #{forward.6} parent=0 // loop_exit
    _

// kernel: forward.7
$region0: #{forward.7}
  #allocation0 [shape = 'u32[]', space=smem, size = 0x4, offset = 0x4, fixed_abs, tag = 'smem constant byte address 0x4 - core index']
  #allocation1 [shape = 'u32[72,128]{1,0:T(1,128)}', space=vmem, size = 0x9000, scoped, tag = 'internal scratch']
  %s0 = inlined_call_operand.vmem [shape: bf16[2,64,256], index: 0, kind: input, shape index: {}]
  %s1 = inlined_call_operand.vmem [shape: bf16[256,128], index: 1, kind: input, shape index: {}]
  %s2 = inlined_call_operand.vmem [shape: f32[1,128], index: 2, kind: input, shape index: {}]
  %s3 = inlined_call_operand.vmem [shape: bf16[2,64,128], index: 3, kind: output, shape index: {}]
  %s4 = sld [smem:[#allocation0]]
  $region45: #{forward.7} parent=0
    _
  %s6 = ssub.s32 1, %s4
  %s7 = scalar_select 0, %s6, %s4
  loop: start=0, step=1, limit=4
  $region2: #{forward.7} parent=0 // loop_pre_header
    _
  $region3: #{forward.7} parent=0 // loop_header
    %s9 = sphi 0, %s13
    %p10 = scmp.ge.s32.totalorder %s9, 4
    %s16 = sphi 0, %s28
    %s17 = sphi 0, %s24
    %s18 = sphi 0, %s16
    %s19 = sphi 0, %s17
    %s20 = sphi 0, %s18
    %s21 = sphi 0, %s19
    %s33 = sphi 0, %s35
    %s36 = sphi 0, %s33
    %s37 = sphi 0, %s36
    %s53 = sphi 0, %s37
    %s57 = sphi 0, %s57
    %s59 = sphi 0, %s57
    %s60 = sphi 0, %s59
    %s74 = sphi 0, %s60
    %s78 = sphi 0, %s78
    %s80 = sphi 0, %s78
    %s81 = sphi 0, %s80
    %s95 = sphi 0, %s81
    %s103 = sphi 0, %s105
    %s106 = sphi 0, %s103
    %s107 = sphi 0, %s106
    %s123 = sphi 0, %s107
  $region4: #{forward.7} parent=0 // loop_header_branch
    %12 = sbr.rel (%p10) target = $region8
  $region5: #{forward.7} parent=0 // loop_body
    %s14 = ssub.s32 %s9, 1
    %s15 = ssub.s32 %s9, 2
    %s22 = sadd.s32 1, %s17
    %p23 = scmp.ge.s32.totalorder %s22, 1
    %s24 = scalar_select %p23, 0, %s22
    %s25 = sadd.s32 1, %s16
    %s26 = scalar_select %p23, %s25, %s16
    %p27 = scmp.ge.s32.totalorder %s26, 2
    %s28 = scalar_select %p27, 0, %s26
    %s29 = ssub.s32 %s16, %s28
    %s30 = ssub.s32 %s17, %s24
    %s31 = sor.u32 %s29, %s30
    %p32 = scmp.eq.s32.totalorder %s31, 0
    %s34 = sadd.s32 %s33, 1
    %s35 = scalar_select %p32, %s33, %s34
    %p38 = pneg %p32
    %p39 = scmp.eq.s32.totalorder %s9, 1
    %p40 = por %p38, %p39
    %p41 = scmp.ne.s32.totalorder %s33, %s36
    %p42 = scmp.eq.s32.totalorder %s9, 0
    %p43 = por %p41, %p42
    %p44 = scmp.ne.s32.totalorder %s33, %s36
    %p45 = scmp.eq.s32.totalorder %s14, 1
    %p46 = por %p44, %p45
    %p47 = scmp.ne.s32.totalorder %s36, %s37
    %p48 = scmp.eq.s32.totalorder %s14, 0
    %p49 = por %p47, %p48
    %p50 = scmp.ne.s32.totalorder %s36, %s37
    %p51 = scmp.eq.s32.totalorder %s15, 1
    %p52 = por %p50, %p51
    %p54 = scmp.ne.s32.totalorder %s37, %s53
    %p55 = scmp.eq.s32.totalorder %s15, 0
    %p56 = por %p54, %p55
    %s58 = sadd.s32 %s57, 1
    %p61 = scmp.eq.s32.totalorder %s9, 1
    %p62 = scmp.ne.s32.totalorder %s57, %s59
    %p63 = scmp.eq.s32.totalorder %s9, 0
    %p64 = por %p62, %p63
    %p65 = scmp.ne.s32.totalorder %s57, %s59
    %p66 = scmp.eq.s32.totalorder %s14, 1
    %p67 = por %p65, %p66
    %p68 = scmp.ne.s32.totalorder %s59, %s60
    %p69 = scmp.eq.s32.totalorder %s14, 0
    %p70 = por %p68, %p69
    %p71 = scmp.ne.s32.totalorder %s59, %s60
    %p72 = scmp.eq.s32.totalorder %s15, 1
    %p73 = por %p71, %p72
    %p75 = scmp.ne.s32.totalorder %s60, %s74
    %p76 = scmp.eq.s32.totalorder %s15, 0
    %p77 = por %p75, %p76
    %s79 = sadd.s32 %s78, 1
    %p82 = scmp.eq.s32.totalorder %s9, 1
    %p83 = scmp.ne.s32.totalorder %s78, %s80
    %p84 = scmp.eq.s32.totalorder %s9, 0
    %p85 = por %p83, %p84
    %p86 = scmp.ne.s32.totalorder %s78, %s80
    %p87 = scmp.eq.s32.totalorder %s14, 1
    %p88 = por %p86, %p87
    %p89 = scmp.ne.s32.totalorder %s80, %s81
    %p90 = scmp.eq.s32.totalorder %s14, 0
    %p91 = por %p89, %p90
    %p92 = scmp.ne.s32.totalorder %s80, %s81
    %p93 = scmp.eq.s32.totalorder %s15, 1
    %p94 = por %p92, %p93
    %p96 = scmp.ne.s32.totalorder %s81, %s95
    %p97 = scmp.eq.s32.totalorder %s15, 0
    %p98 = por %p96, %p97
    %s99 = ssub.s32 %s16, %s28
    %s100 = ssub.s32 %s17, %s24
    %s101 = sor.u32 %s99, %s100
    %p102 = scmp.eq.s32.totalorder %s101, 0
    %s104 = sadd.s32 %s103, 1
    %s105 = scalar_select %p102, %s103, %s104
    %p108 = pneg %p102
    %p109 = scmp.eq.s32.totalorder %s9, 1
    %p110 = por %p108, %p109
    %p111 = scmp.ne.s32.totalorder %s103, %s106
    %p112 = scmp.eq.s32.totalorder %s9, 0
    %p113 = por %p111, %p112
    %p114 = scmp.ne.s32.totalorder %s103, %s106
    %p115 = scmp.eq.s32.totalorder %s14, 1
    %p116 = por %p114, %p115
    %p117 = scmp.ne.s32.totalorder %s106, %s107
    %p118 = scmp.eq.s32.totalorder %s14, 0
    %p119 = por %p117, %p118
    %p120 = scmp.ne.s32.totalorder %s106, %s107
    %p121 = scmp.eq.s32.totalorder %s15, 1
    %p122 = por %p120, %p121
    %p124 = scmp.ne.s32.totalorder %s107, %s123
    %p125 = scmp.eq.s32.totalorder %s15, 0
    %p126 = por %p124, %p125
    %p127 = scmp.le.s32.totalorder 1, %s9
    %p128 = scmp.lt.s32.totalorder %s9, 3
    %p129 = pnand %p127, %p128
    %p130 = pneg %p129
    // Predicated region
    $region9: #{forward.7} parent=5 // pred_check
      _
    $region10: #{forward.7} parent=5 // pred_check_branch
      %132 = sbr.rel (%p129) target = $region12
    $region11: #{forward.7} parent=5 // pred_region
      %s133 = ssub.s32 %s9, 1
      // Predicated region
      $region13: #{forward.7} parent=11 // pred_check
        %p134 = pneg %p70
      $region14: #{forward.7} parent=11 // pred_check_branch
        %136 = sbr.rel (%p134) target = $region16
      $region15: #{forward.7} parent=11 // pred_region
        _
      $region16: #{forward.7} parent=11 // pred_fallthru
        _
      // Predicated region
      $region17: #{forward.7} parent=11 // pred_check
        %p137 = pneg %p91
      $region18: #{forward.7} parent=11 // pred_check_branch
        %139 = sbr.rel (%p137) target = $region20
      $region19: #{forward.7} parent=11 // pred_region
        _
      $region20: #{forward.7} parent=11 // pred_fallthru
        _
    $region12: #{forward.7} parent=5 // pred_fallthru
      _
    %p140 = scmp.lt.s32.totalorder %s9, 2
    // Predicated region
    $region21: #{forward.7} parent=5 // pred_check
      %p141 = pneg %p140
    $region22: #{forward.7} parent=5 // pred_check_branch
      %143 = sbr.rel (%p141) target = $region24
    $region23: #{forward.7} parent=5 // pred_region
      // Predicated region
      $region25: #{forward.7} parent=23 // pred_check
        %p144 = pneg %p43
      $region26: #{forward.7} parent=23 // pred_check_branch
        %146 = sbr.rel (%p144) target = $region28
      $region27: #{forward.7} parent=23 // pred_region
        %s147 = smul.u32 8, %s17
        %p148 = scmp.lt.s32.totalorder %s16, 1
        %s149 = scalar_select %p148, %s16, 1
        %p150 = scmp.lt.s32.totalorder %s147, 7
        %s151 = scalar_select %p150, %s147, 7
        %s152 = smul.addr %s151, 2
        %s153 = smul.addr %s149, 16
        %s154 = sadd.s32 %s152, %s153
        %s155 = smul.addr %s154, 4
        %s156 = scalar_lea.vmem %s0, %s155
        %s157 = smul.u32 8, %s17
      $region28: #{forward.7} parent=23 // pred_fallthru
        _
    $region24: #{forward.7} parent=5 // pred_fallthru
      _
    %p158 = scmp.le.s32.totalorder 1, %s9
    %p159 = scmp.lt.s32.totalorder %s9, 3
    %p160 = pnand %p158, %p159
    %p161 = pneg %p160
    // Predicated region
    $region29: #{forward.7} parent=5 // pred_check
      _
    $region30: #{forward.7} parent=5 // pred_check_branch
      %163 = sbr.rel (%p160) target = $region32
    $region31: #{forward.7} parent=5 // pred_region
      %s164 = ssub.s32 %s9, 1
      %s165 = smul.u32 8, %s19
      %p166 = scmp.lt.s32.totalorder %s18, 1
      %s167 = scalar_select %p166, %s18, 1
      %p168 = scmp.lt.s32.totalorder %s165, 7
      %s169 = scalar_select %p168, %s165, 7
      %s170 = smul.addr %s169, 2
      %s171 = smul.addr %s167, 16
      %s172 = sadd.s32 %s170, %s171
      %s173 = smul.addr %s172, 4
      %s174 = scalar_lea.vmem %s0, %s173
      %p175 = pneg %p49
      %p176 = pneg %p46
      %p177 = pneg %p70
      %p178 = pneg %p67
      %p179 = pneg %p91
      %p180 = pneg %p88
      %p181 = pneg %p119
      %p182 = pneg %p116
      %s183 = smul.u32 8, %s19
      %p184 = scmp.lt.s32.totalorder %s18, 1
      %s185 = scalar_select %p184, %s18, 1
      %p186 = scmp.lt.s32.totalorder %s183, 7
      %s187 = scalar_select %p186, %s183, 7
      %s188 = smul.addr %s185, 8
      %s189 = sadd.s32 %s187, %s188
      %s190 = smul.addr %s189, 4
      %s191 = scalar_lea.vmem %s3, %s190
      %s192 = smul.u32 8, %s19
      %p193 = scmp.lt.s32.totalorder %s18, 1
      %s194 = scalar_select %p193, %s18, 1
      %p195 = scmp.lt.s32.totalorder %s192, 7
      %s196 = scalar_select %p195, %s192, 7
      %s197 = smul.addr %s196, 2
      %s198 = smul.addr %s194, 16
      %s199 = sadd.s32 %s197, %s198
      %s200 = smul.addr %s199, 4
      %s201 = scalar_lea.vmem %s0, %s200
      %s202 = smul.u32 8, %s19
      %s203 = smul.u32 8, %s19
      %p204 = scmp.lt.s32.totalorder %s18, 1
      %s205 = scalar_select %p204, %s18, 1
      %p206 = scmp.lt.s32.totalorder %s203, 7
      %s207 = scalar_select %p206, %s203, 7
      %s208 = smul.addr %s205, 8
      %s209 = sadd.s32 %s207, %s208
      %s210 = smul.addr %s209, 4
      %s211 = scalar_lea.vmem %s3, %s210
      %s212 = smul.u32 8, %s19
      %v213 = vld [vmem:[%s201] sm:$0xff]
      %v214 = vld [vmem:[%s201 + $0x8] sm:$0xff]
      %v215 = vld [vmem:[%s201 + $0x10] sm:$0xff]
      %v216 = vld [vmem:[%s201 + $0x18] sm:$0xff]
      %v217 = vld [vmem:[%s201 + $0x20] sm:$0xff]
      %v218 = vld [vmem:[%s201 + $0x28] sm:$0xff]
      %v219 = vld [vmem:[%s201 + $0x30] sm:$0xff]
      %v220 = vld [vmem:[%s201 + $0x38] sm:$0xff]
      %v221 = vld [vmem:[%s1] sm:$0xf]
      %v222 = vld [vmem:[%s1 + $0x4] sm:$0xf]
      %v223 = vld [vmem:[%s1 + $0x8] sm:$0xf]
      %v224 = vld [vmem:[%s1 + $0xc] sm:$0xf]
      %v225 = vld [vmem:[%s1 + $0x10] sm:$0xf]
      %v226 = vld [vmem:[%s1 + $0x14] sm:$0xf]
      %v227 = vld [vmem:[%s1 + $0x18] sm:$0xf]
      %v228 = vld [vmem:[%s1 + $0x1c] sm:$0xf]
      %v229 = vld [vmem:[%s1 + $0x20] sm:$0xf]
      %v230 = vld [vmem:[%s1 + $0x24] sm:$0xf]
      %v231 = vld [vmem:[%s1 + $0x28] sm:$0xf]
      %v232 = vld [vmem:[%s1 + $0x2c] sm:$0xf]
      %v233 = vld [vmem:[%s1 + $0x30] sm:$0xf]
      %v234 = vld [vmem:[%s1 + $0x34] sm:$0xf]
      %v235 = vld [vmem:[%s1 + $0x38] sm:$0xf]
      %v236 = vld [vmem:[%s1 + $0x3c] sm:$0xf]
      %v237 = vld [vmem:[%s1 + $0x40] sm:$0xf]
      %v238 = vld [vmem:[%s1 + $0x44] sm:$0xf]
      %v239 = vld [vmem:[%s1 + $0x48] sm:$0xf]
      %v240 = vld [vmem:[%s1 + $0x4c] sm:$0xf]
      %v241 = vld [vmem:[%s1 + $0x50] sm:$0xf]
      %v242 = vld [vmem:[%s1 + $0x54] sm:$0xf]
      %v243 = vld [vmem:[%s1 + $0x58] sm:$0xf]
      %v244 = vld [vmem:[%s1 + $0x5c] sm:$0xf]
      %v245 = vld [vmem:[%s1 + $0x60] sm:$0xf]
      %v246 = vld [vmem:[%s1 + $0x64] sm:$0xf]
      %v247 = vld [vmem:[%s1 + $0x68] sm:$0xf]
      %v248 = vld [vmem:[%s1 + $0x6c] sm:$0xf]
      %v249 = vld [vmem:[%s1 + $0x70] sm:$0xf]
      %v250 = vld [vmem:[%s1 + $0x74] sm:$0xf]
      %v251 = vld [vmem:[%s1 + $0x78] sm:$0xf]
      %v252 = vld [vmem:[%s1 + $0x7c] sm:$0xf]
      %v253 = vld [vmem:[%s2] sm:$0x1]
      %v255 = vperm.slane %v253, 0
      %v265 = vunpack.c.l.b16 %v213
      %v266 = vunpack.c.h.b16 %v213
      %v267 = vunpack.c.l.b16 %v214
      %v268 = vunpack.c.h.b16 %v214
      %v269 = vunpack.c.l.b16 %v215
      %v270 = vunpack.c.h.b16 %v215
      %v271 = vunpack.c.l.b16 %v216
      %v272 = vunpack.c.h.b16 %v216
      %v273 = vunpack.c.l.b16 %v217
      %v274 = vunpack.c.h.b16 %v217
      %v275 = vunpack.c.l.b16 %v218
      %v276 = vunpack.c.h.b16 %v218
      %v277 = vunpack.c.l.b16 %v219
      %v278 = vunpack.c.h.b16 %v219
      %v279 = vunpack.c.l.b16 %v220
      %v280 = vunpack.c.h.b16 %v220
      %v281 = vpack.c.b16 %v267, %v265
      %v282 = vpack.c.b16 %v268, %v266
      %v283 = vpack.c.b16 %v271, %v269
      %v284 = vpack.c.b16 %v272, %v270
      %v285 = vpack.c.b16 %v275, %v273
      %v286 = vpack.c.b16 %v276, %v274
      %v287 = vpack.c.b16 %v279, %v277
      %v288 = vpack.c.b16 %v280, %v278
      %v329 = vunpack.c.l.b16 %v221
      %v330 = vunpack.c.l.b16 %v222
      %v331 = vunpack.c.l.b16 %v223
      %v332 = vunpack.c.l.b16 %v224
      %v333 = vunpack.c.l.b16 %v225
      %v334 = vunpack.c.l.b16 %v226
      %v335 = vunpack.c.l.b16 %v227
      %v336 = vunpack.c.l.b16 %v228
      %v337 = vunpack.c.l.b16 %v229
      %v338 = vunpack.c.l.b16 %v230
      %v339 = vunpack.c.l.b16 %v231
      %v340 = vunpack.c.l.b16 %v232
      %v341 = vunpack.c.l.b16 %v233
      %v342 = vunpack.c.l.b16 %v234
      %v343 = vunpack.c.l.b16 %v235
      %v344 = vunpack.c.l.b16 %v236
      %v345 = vunpack.c.l.b16 %v237
      %v346 = vunpack.c.l.b16 %v238
      %v347 = vunpack.c.l.b16 %v239
      %v348 = vunpack.c.l.b16 %v240
      %v349 = vunpack.c.l.b16 %v241
      %v350 = vunpack.c.l.b16 %v242
      %v351 = vunpack.c.l.b16 %v243
      %v352 = vunpack.c.l.b16 %v244
      %v353 = vunpack.c.l.b16 %v245
      %v354 = vunpack.c.l.b16 %v246
      %v355 = vunpack.c.l.b16 %v247
      %v356 = vunpack.c.l.b16 %v248
      %v357 = vunpack.c.l.b16 %v249
      %v358 = vunpack.c.l.b16 %v250
      %v359 = vunpack.c.l.b16 %v251
      %v360 = vunpack.c.l.b16 %v252
      %v361 = vpack.c.b16 %v330, %v329
      %v362 = vpack.c.b16 %v332, %v331
      %v363 = vpack.c.b16 %v334, %v333
      %v364 = vpack.c.b16 %v336, %v335
      %v365 = vpack.c.b16 %v338, %v337
      %v366 = vpack.c.b16 %v340, %v339
      %v367 = vpack.c.b16 %v342, %v341
      %v368 = vpack.c.b16 %v344, %v343
      %v369 = vpack.c.b16 %v346, %v345
      %v370 = vpack.c.b16 %v348, %v347
      %v371 = vpack.c.b16 %v350, %v349
      %v372 = vpack.c.b16 %v352, %v351
      %v373 = vpack.c.b16 %v354, %v353
      %v374 = vpack.c.b16 %v356, %v355
      %v375 = vpack.c.b16 %v358, %v357
      %v376 = vpack.c.b16 %v360, %v359
      %393 = vmatpush.bf16.msra.mxu0 %v368
      %394 = vmatpush.bf16.msra.mxu0 %v367
      %395 = vmatpush.bf16.msra.mxu0 %v366
      %396 = vmatpush.bf16.msra.mxu0 %v365
      %397 = vmatpush.bf16.msra.mxu0 %v364
      %398 = vmatpush.bf16.msra.mxu0 %v363
      %399 = vmatpush.bf16.msra.mxu0 %v362
      %400 = vmatpush.bf16.msra.mxu0 %v361
      %401 = vmatmul.bf16.gmra.mxu0 %v281
      %v402 = vpop.f32.mrf.mxu0
      %v403 = vadd.f32 %v255, %v402
      %v404 = vpop.f32.mrf.mxu0
      %v405 = vadd.f32 %v255, %v404
      %406 = vmatmul.bf16.gmra.mxu0 %v283
      %v407 = vpop.f32.mrf.mxu0
      %v408 = vadd.f32 %v255, %v407
      %v409 = vpop.f32.mrf.mxu0
      %v410 = vadd.f32 %v255, %v409
      %411 = vmatmul.bf16.gmra.mxu0 %v285
      %v412 = vpop.f32.mrf.mxu0
      %v413 = vadd.f32 %v255, %v412
      %v414 = vpop.f32.mrf.mxu0
      %v415 = vadd.f32 %v255, %v414
      %416 = vmatmul.bf16.gmra.mxu0 %v287
      %v417 = vpop.f32.mrf.mxu0
      %v418 = vadd.f32 %v255, %v417
      %v419 = vpop.f32.mrf.mxu0
      %v420 = vadd.f32 %v255, %v419
      %421 = vdwg.mxu0
      %422 = vmatpush.bf16.msra.mxu0 %v376
      %423 = vmatpush.bf16.msra.mxu0 %v375
      %424 = vmatpush.bf16.msra.mxu0 %v374
      %425 = vmatpush.bf16.msra.mxu0 %v373
      %426 = vmatpush.bf16.msra.mxu0 %v372
      %427 = vmatpush.bf16.msra.mxu0 %v371
      %428 = vmatpush.bf16.msra.mxu0 %v370
      %429 = vmatpush.bf16.msra.mxu0 %v369
      %430 = vmatmul.bf16.gmra.mxu0 %v282
      %v431 = vpop.f32.mrf.mxu0
      %v432 = vadd.f32 %v403, %v431
      %v433 = vpop.f32.mrf.mxu0
      %v434 = vadd.f32 %v405, %v433
      %435 = vmatmul.bf16.gmra.mxu0 %v284
      %v436 = vpop.f32.mrf.mxu0
      %v437 = vadd.f32 %v408, %v436
      %v438 = vpop.f32.mrf.mxu0
      %v439 = vadd.f32 %v410, %v438
      %440 = vmatmul.bf16.gmra.mxu0 %v286
      %v441 = vpop.f32.mrf.mxu0
      %v442 = vadd.f32 %v413, %v441
      %v443 = vpop.f32.mrf.mxu0
      %v444 = vadd.f32 %v415, %v443
      %445 = vmatmul.bf16.gmra.mxu0 %v288
      %v446 = vpop.f32.mrf.mxu0
      %v447 = vadd.f32 %v418, %v446
      %v448 = vpop.f32.mrf.mxu0
      %v449 = vadd.f32 %v420, %v448
      %450 = vdwg.mxu0
      %v451 = vmax.f32 %v432, 0.0
      %v452 = vmax.f32 %v434, 0.0
      %v453 = vmax.f32 %v437, 0.0
      %v454 = vmax.f32 %v439, 0.0
      %v455 = vmax.f32 %v442, 0.0
      %v456 = vmax.f32 %v444, 0.0
      %v457 = vmax.f32 %v447, 0.0
      %v458 = vmax.f32 %v449, 0.0
      %v459 = vpack.c.bf16 %v451, %v451
      %v460 = vpack.c.bf16 %v452, %v452
      %v461 = vpack.c.bf16 %v453, %v453
      %v462 = vpack.c.bf16 %v454, %v454
      %v463 = vpack.c.bf16 %v455, %v455
      %v464 = vpack.c.bf16 %v456, %v456
      %v465 = vpack.c.bf16 %v457, %v457
      %v466 = vpack.c.bf16 %v458, %v458
      %467 = vst [vmem:[%s211] sm:$0xf] %v459
      %468 = vst [vmem:[%s211 + $0x4] sm:$0xf] %v460
      %469 = vst [vmem:[%s211 + $0x8] sm:$0xf] %v461
      %470 = vst [vmem:[%s211 + $0xc] sm:$0xf] %v462
      %471 = vst [vmem:[%s211 + $0x10] sm:$0xf] %v463
      %472 = vst [vmem:[%s211 + $0x14] sm:$0xf] %v464
      %473 = vst [vmem:[%s211 + $0x18] sm:$0xf] %v465
      %474 = vst [vmem:[%s211 + $0x1c] sm:$0xf] %v466
      %s475 = smul.u32 8, %s19
      %p476 = scmp.lt.s32.totalorder %s18, 1
      %s477 = scalar_select %p476, %s18, 1
      %p478 = scmp.lt.s32.totalorder %s475, 7
      %s479 = scalar_select %p478, %s475, 7
      %s480 = smul.addr %s477, 8
      %s481 = sadd.s32 %s479, %s480
      %s482 = smul.addr %s481, 4
      %s483 = scalar_lea.vmem %s3, %s482
      // Predicated region
      $region33: #{forward.7} parent=31 // pred_check
        %p484 = pneg %p116
      $region34: #{forward.7} parent=31 // pred_check_branch
        %486 = sbr.rel (%p484) target = $region36
      $region35: #{forward.7} parent=31 // pred_region
        %s487 = smul.u32 8, %s19
      $region36: #{forward.7} parent=31 // pred_fallthru
        _
    $region32: #{forward.7} parent=5 // pred_fallthru
      _
    %p488 = scmp.le.s32.totalorder 2, %s9
    // Predicated region
    $region37: #{forward.7} parent=5 // pred_check
      %p489 = pneg %p488
    $region38: #{forward.7} parent=5 // pred_check_branch
      %491 = sbr.rel (%p489) target = $region40
    $region39: #{forward.7} parent=5 // pred_region
      %s492 = ssub.s32 %s9, 2
      // Predicated region
      $region41: #{forward.7} parent=39 // pred_check
        %p493 = pneg %p122
      $region42: #{forward.7} parent=39 // pred_check_branch
        %495 = sbr.rel (%p493) target = $region44
      $region43: #{forward.7} parent=39 // pred_region
        %s496 = smul.u32 8, %s21
        %p497 = scmp.lt.s32.totalorder %s20, 1
        %s498 = scalar_select %p497, %s20, 1
        %p499 = scmp.lt.s32.totalorder %s496, 7
        %s500 = scalar_select %p499, %s496, 7
        %s501 = smul.addr %s498, 8
        %s502 = sadd.s32 %s500, %s501
        %s503 = smul.addr %s502, 4
        %s504 = scalar_lea.vmem %s3, %s503
      $region44: #{forward.7} parent=39 // pred_fallthru
        _
    $region40: #{forward.7} parent=5 // pred_fallthru
      _
  $region6: #{forward.7} parent=0 // loop_footer
    %s13 = sadd.s32 1, %s9
  $region7: #{forward.7} parent=0 // loop_footer_branch
    %8 = sbr.rel target = $region3
  $region8: #{forward.7} parent=0 // loop_exit
    _

// kernel: forward.9
$region0: #{forward.9}
  #allocation0 [shape = 'u32[]', space=smem, size = 0x4, offset = 0x4, fixed_abs, tag = 'smem constant byte address 0x4 - core index']
  #allocation1 [shape = 'u32[72,128]{1,0:T(1,128)}', space=vmem, size = 0x9000, scoped, tag = 'internal scratch']
  %s0 = inlined_call_operand.vmem [shape: bf16[2,128], index: 0, kind: input, shape index: {}]
  %s1 = inlined_call_operand.vmem [shape: bf16[128,1024], index: 1, kind: input, shape index: {}]
  %s2 = inlined_call_operand.vmem [shape: f32[1,1024], index: 2, kind: input, shape index: {}]
  %s3 = inlined_call_operand.vmem [shape: bf16[2,1024], index: 3, kind: output, shape index: {}]
  %s4 = sld [smem:[#allocation0]]
  $region22: #{forward.9} parent=0
    _
  %s6 = ssub.s32 1, %s4
  %s7 = scalar_select 0, %s6, %s4
  // Predicated region
  $region2: #{forward.9} parent=0 // pred_check
    _
  $region3: #{forward.9} parent=0 // pred_check_branch
    %9 = sbr.rel (0) target = $region5
  $region4: #{forward.9} parent=0 // pred_region
    _
  $region5: #{forward.9} parent=0 // pred_fallthru
    _
  // Predicated region
  $region6: #{forward.9} parent=0 // pred_check
    _
  $region7: #{forward.9} parent=0 // pred_check_branch
    %11 = sbr.rel (0) target = $region9
  $region8: #{forward.9} parent=0 // pred_region
    _
  $region9: #{forward.9} parent=0 // pred_fallthru
    _
  // Predicated region
  $region10: #{forward.9} parent=0 // pred_check
    _
  $region11: #{forward.9} parent=0 // pred_check_branch
    %13 = sbr.rel (0) target = $region13
  $region12: #{forward.9} parent=0 // pred_region
    _
  $region13: #{forward.9} parent=0 // pred_fallthru
    _
  %v14 = vld [vmem:[%s0] sm:$0x1]
  %v15 = vld [vmem:[%s1] sm:$0xff]
  %v16 = vld [vmem:[%s1 + $0x8] sm:$0xff]
  %v17 = vld [vmem:[%s1 + $0x10] sm:$0xff]
  %v18 = vld [vmem:[%s1 + $0x18] sm:$0xff]
  %v19 = vld [vmem:[%s1 + $0x20] sm:$0xff]
  %v20 = vld [vmem:[%s1 + $0x28] sm:$0xff]
  %v21 = vld [vmem:[%s1 + $0x30] sm:$0xff]
  %v22 = vld [vmem:[%s1 + $0x38] sm:$0xff]
  %v23 = vld [vmem:[%s1 + $0x40] sm:$0xff]
  %v24 = vld [vmem:[%s1 + $0x48] sm:$0xff]
  %v25 = vld [vmem:[%s1 + $0x50] sm:$0xff]
  %v26 = vld [vmem:[%s1 + $0x58] sm:$0xff]
  %v27 = vld [vmem:[%s1 + $0x60] sm:$0xff]
  %v28 = vld [vmem:[%s1 + $0x68] sm:$0xff]
  %v29 = vld [vmem:[%s1 + $0x70] sm:$0xff]
  %v30 = vld [vmem:[%s1 + $0x78] sm:$0xff]
  %v31 = vld [vmem:[%s1 + $0x80] sm:$0xff]
  %v32 = vld [vmem:[%s1 + $0x88] sm:$0xff]
  %v33 = vld [vmem:[%s1 + $0x90] sm:$0xff]
  %v34 = vld [vmem:[%s1 + $0x98] sm:$0xff]
  %v35 = vld [vmem:[%s1 + $0xa0] sm:$0xff]
  %v36 = vld [vmem:[%s1 + $0xa8] sm:$0xff]
  %v37 = vld [vmem:[%s1 + $0xb0] sm:$0xff]
  %v38 = vld [vmem:[%s1 + $0xb8] sm:$0xff]
  %v39 = vld [vmem:[%s1 + $0xc0] sm:$0xff]
  %v40 = vld [vmem:[%s1 + $0xc8] sm:$0xff]
  %v41 = vld [vmem:[%s1 + $0xd0] sm:$0xff]
  %v42 = vld [vmem:[%s1 + $0xd8] sm:$0xff]
  %v43 = vld [vmem:[%s1 + $0xe0] sm:$0xff]
  %v44 = vld [vmem:[%s1 + $0xe8] sm:$0xff]
  %v45 = vld [vmem:[%s1 + $0xf0] sm:$0xff]
  %v46 = vld [vmem:[%s1 + $0xf8] sm:$0xff]
  %v47 = vld [vmem:[%s1 + $0x100] sm:$0xff]
  %v48 = vld [vmem:[%s1 + $0x108] sm:$0xff]
  %v49 = vld [vmem:[%s1 + $0x110] sm:$0xff]
  %v50 = vld [vmem:[%s1 + $0x118] sm:$0xff]
  %v51 = vld [vmem:[%s1 + $0x120] sm:$0xff]
  %v52 = vld [vmem:[%s1 + $0x128] sm:$0xff]
  %v53 = vld [vmem:[%s1 + $0x130] sm:$0xff]
  %v54 = vld [vmem:[%s1 + $0x138] sm:$0xff]
  %v55 = vld [vmem:[%s1 + $0x140] sm:$0xff]
  %v56 = vld [vmem:[%s1 + $0x148] sm:$0xff]
  %v57 = vld [vmem:[%s1 + $0x150] sm:$0xff]
  %v58 = vld [vmem:[%s1 + $0x158] sm:$0xff]
  %v59 = vld [vmem:[%s1 + $0x160] sm:$0xff]
  %v60 = vld [vmem:[%s1 + $0x168] sm:$0xff]
  %v61 = vld [vmem:[%s1 + $0x170] sm:$0xff]
  %v62 = vld [vmem:[%s1 + $0x178] sm:$0xff]
  %v63 = vld [vmem:[%s1 + $0x180] sm:$0xff]
  %v64 = vld [vmem:[%s1 + $0x188] sm:$0xff]
  %v65 = vld [vmem:[%s1 + $0x190] sm:$0xff]
  %v66 = vld [vmem:[%s1 + $0x198] sm:$0xff]
  %v67 = vld [vmem:[%s1 + $0x1a0] sm:$0xff]
  %v68 = vld [vmem:[%s1 + $0x1a8] sm:$0xff]
  %v69 = vld [vmem:[%s1 + $0x1b0] sm:$0xff]
  %v70 = vld [vmem:[%s1 + $0x1b8] sm:$0xff]
  %v71 = vld [vmem:[%s1 + $0x1c0] sm:$0xff]
  %v72 = vld [vmem:[%s1 + $0x1c8] sm:$0xff]
  %v73 = vld [vmem:[%s1 + $0x1d0] sm:$0xff]
  %v74 = vld [vmem:[%s1 + $0x1d8] sm:$0xff]
  %v75 = vld [vmem:[%s1 + $0x1e0] sm:$0xff]
  %v76 = vld [vmem:[%s1 + $0x1e8] sm:$0xff]
  %v77 = vld [vmem:[%s1 + $0x1f0] sm:$0xff]
  %v78 = vld [vmem:[%s1 + $0x1f8] sm:$0xff]
  %v79 = vld [vmem:[%s2] sm:$0xff]
  %v81 = vperm.slane %v79, 0
  %v82 = vperm.slane %v79, 1
  %v83 = vperm.slane %v79, 2
  %v84 = vperm.slane %v79, 3
  %v85 = vperm.slane %v79, 4
  %v86 = vperm.slane %v79, 5
  %v87 = vperm.slane %v79, 6
  %v88 = vperm.slane %v79, 7
  %v161 = vunpack.c.l.b16 %v15
  %v162 = vunpack.c.h.b16 %v15
  %v163 = vunpack.c.l.b16 %v16
  %v164 = vunpack.c.h.b16 %v16
  %v165 = vunpack.c.l.b16 %v17
  %v166 = vunpack.c.h.b16 %v17
  %v167 = vunpack.c.l.b16 %v18
  %v168 = vunpack.c.h.b16 %v18
  %v169 = vunpack.c.l.b16 %v19
  %v170 = vunpack.c.h.b16 %v19
  %v171 = vunpack.c.l.b16 %v20
  %v172 = vunpack.c.h.b16 %v20
  %v173 = vunpack.c.l.b16 %v21
  %v174 = vunpack.c.h.b16 %v21
  %v175 = vunpack.c.l.b16 %v22
  %v176 = vunpack.c.h.b16 %v22
  %v177 = vunpack.c.l.b16 %v23
  %v178 = vunpack.c.h.b16 %v23
  %v179 = vunpack.c.l.b16 %v24
  %v180 = vunpack.c.h.b16 %v24
  %v181 = vunpack.c.l.b16 %v25
  %v182 = vunpack.c.h.b16 %v25
  %v183 = vunpack.c.l.b16 %v26
  %v184 = vunpack.c.h.b16 %v26
  %v185 = vunpack.c.l.b16 %v27
  %v186 = vunpack.c.h.b16 %v27
  %v187 = vunpack.c.l.b16 %v28
  %v188 = vunpack.c.h.b16 %v28
  %v189 = vunpack.c.l.b16 %v29
  %v190 = vunpack.c.h.b16 %v29
  %v191 = vunpack.c.l.b16 %v30
  %v192 = vunpack.c.h.b16 %v30
  %v193 = vunpack.c.l.b16 %v31
  %v194 = vunpack.c.h.b16 %v31
  %v195 = vunpack.c.l.b16 %v32
  %v196 = vunpack.c.h.b16 %v32
  %v197 = vunpack.c.l.b16 %v33
  %v198 = vunpack.c.h.b16 %v33
  %v199 = vunpack.c.l.b16 %v34
  %v200 = vunpack.c.h.b16 %v34
  %v201 = vunpack.c.l.b16 %v35
  %v202 = vunpack.c.h.b16 %v35
  %v203 = vunpack.c.l.b16 %v36
  %v204 = vunpack.c.h.b16 %v36
  %v205 = vunpack.c.l.b16 %v37
  %v206 = vunpack.c.h.b16 %v37
  %v207 = vunpack.c.l.b16 %v38
  %v208 = vunpack.c.h.b16 %v38
  %v209 = vunpack.c.l.b16 %v39
  %v210 = vunpack.c.h.b16 %v39
  %v211 = vunpack.c.l.b16 %v40
  %v212 = vunpack.c.h.b16 %v40
  %v213 = vunpack.c.l.b16 %v41
  %v214 = vunpack.c.h.b16 %v41
  %v215 = vunpack.c.l.b16 %v42
  %v216 = vunpack.c.h.b16 %v42
  %v217 = vunpack.c.l.b16 %v43
  %v218 = vunpack.c.h.b16 %v43
  %v219 = vunpack.c.l.b16 %v44
  %v220 = vunpack.c.h.b16 %v44
  %v221 = vunpack.c.l.b16 %v45
  %v222 = vunpack.c.h.b16 %v45
  %v223 = vunpack.c.l.b16 %v46
  %v224 = vunpack.c.h.b16 %v46
  %v225 = vunpack.c.l.b16 %v47
  %v226 = vunpack.c.h.b16 %v47
  %v227 = vunpack.c.l.b16 %v48
  %v228 = vunpack.c.h.b16 %v48
  %v229 = vunpack.c.l.b16 %v49
  %v230 = vunpack.c.h.b16 %v49
  %v231 = vunpack.c.l.b16 %v50
  %v232 = vunpack.c.h.b16 %v50
  %v233 = vunpack.c.l.b16 %v51
  %v234 = vunpack.c.h.b16 %v51
  %v235 = vunpack.c.l.b16 %v52
  %v236 = vunpack.c.h.b16 %v52
  %v237 = vunpack.c.l.b16 %v53
  %v238 = vunpack.c.h.b16 %v53
  %v239 = vunpack.c.l.b16 %v54
  %v240 = vunpack.c.h.b16 %v54
  %v241 = vunpack.c.l.b16 %v55
  %v242 = vunpack.c.h.b16 %v55
  %v243 = vunpack.c.l.b16 %v56
  %v244 = vunpack.c.h.b16 %v56
  %v245 = vunpack.c.l.b16 %v57
  %v246 = vunpack.c.h.b16 %v57
  %v247 = vunpack.c.l.b16 %v58
  %v248 = vunpack.c.h.b16 %v58
  %v249 = vunpack.c.l.b16 %v59
  %v250 = vunpack.c.h.b16 %v59
  %v251 = vunpack.c.l.b16 %v60
  %v252 = vunpack.c.h.b16 %v60
  %v253 = vunpack.c.l.b16 %v61
  %v254 = vunpack.c.h.b16 %v61
  %v255 = vunpack.c.l.b16 %v62
  %v256 = vunpack.c.h.b16 %v62
  %v257 = vunpack.c.l.b16 %v63
  %v258 = vunpack.c.h.b16 %v63
  %v259 = vunpack.c.l.b16 %v64
  %v260 = vunpack.c.h.b16 %v64
  %v261 = vunpack.c.l.b16 %v65
  %v262 = vunpack.c.h.b16 %v65
  %v263 = vunpack.c.l.b16 %v66
  %v264 = vunpack.c.h.b16 %v66
  %v265 = vunpack.c.l.b16 %v67
  %v266 = vunpack.c.h.b16 %v67
  %v267 = vunpack.c.l.b16 %v68
  %v268 = vunpack.c.h.b16 %v68
  %v269 = vunpack.c.l.b16 %v69
  %v270 = vunpack.c.h.b16 %v69
  %v271 = vunpack.c.l.b16 %v70
  %v272 = vunpack.c.h.b16 %v70
  %v273 = vunpack.c.l.b16 %v71
  %v274 = vunpack.c.h.b16 %v71
  %v275 = vunpack.c.l.b16 %v72
  %v276 = vunpack.c.h.b16 %v72
  %v277 = vunpack.c.l.b16 %v73
  %v278 = vunpack.c.h.b16 %v73
  %v279 = vunpack.c.l.b16 %v74
  %v280 = vunpack.c.h.b16 %v74
  %v281 = vunpack.c.l.b16 %v75
  %v282 = vunpack.c.h.b16 %v75
  %v283 = vunpack.c.l.b16 %v76
  %v284 = vunpack.c.h.b16 %v76
  %v285 = vunpack.c.l.b16 %v77
  %v286 = vunpack.c.h.b16 %v77
  %v287 = vunpack.c.l.b16 %v78
  %v288 = vunpack.c.h.b16 %v78
  %v289 = vpack.c.b16 %v169, %v161
  %v290 = vpack.c.b16 %v170, %v162
  %v291 = vpack.c.b16 %v171, %v163
  %v292 = vpack.c.b16 %v172, %v164
  %v293 = vpack.c.b16 %v173, %v165
  %v294 = vpack.c.b16 %v174, %v166
  %v295 = vpack.c.b16 %v175, %v167
  %v296 = vpack.c.b16 %v176, %v168
  %v297 = vpack.c.b16 %v185, %v177
  %v298 = vpack.c.b16 %v186, %v178
  %v299 = vpack.c.b16 %v187, %v179
  %v300 = vpack.c.b16 %v188, %v180
  %v301 = vpack.c.b16 %v189, %v181
  %v302 = vpack.c.b16 %v190, %v182
  %v303 = vpack.c.b16 %v191, %v183
  %v304 = vpack.c.b16 %v192, %v184
  %v305 = vpack.c.b16 %v201, %v193
  %v306 = vpack.c.b16 %v202, %v194
  %v307 = vpack.c.b16 %v203, %v195
  %v308 = vpack.c.b16 %v204, %v196
  %v309 = vpack.c.b16 %v205, %v197
  %v310 = vpack.c.b16 %v206, %v198
  %v311 = vpack.c.b16 %v207, %v199
  %v312 = vpack.c.b16 %v208, %v200
  %v313 = vpack.c.b16 %v217, %v209
  %v314 = vpack.c.b16 %v218, %v210
  %v315 = vpack.c.b16 %v219, %v211
  %v316 = vpack.c.b16 %v220, %v212
  %v317 = vpack.c.b16 %v221, %v213
  %v318 = vpack.c.b16 %v222, %v214
  %v319 = vpack.c.b16 %v223, %v215
  %v320 = vpack.c.b16 %v224, %v216
  %v321 = vpack.c.b16 %v233, %v225
  %v322 = vpack.c.b16 %v234, %v226
  %v323 = vpack.c.b16 %v235, %v227
  %v324 = vpack.c.b16 %v236, %v228
  %v325 = vpack.c.b16 %v237, %v229
  %v326 = vpack.c.b16 %v238, %v230
  %v327 = vpack.c.b16 %v239, %v231
  %v328 = vpack.c.b16 %v240, %v232
  %v329 = vpack.c.b16 %v249, %v241
  %v330 = vpack.c.b16 %v250, %v242
  %v331 = vpack.c.b16 %v251, %v243
  %v332 = vpack.c.b16 %v252, %v244
  %v333 = vpack.c.b16 %v253, %v245
  %v334 = vpack.c.b16 %v254, %v246
  %v335 = vpack.c.b16 %v255, %v247
  %v336 = vpack.c.b16 %v256, %v248
  %v337 = vpack.c.b16 %v265, %v257
  %v338 = vpack.c.b16 %v266, %v258
  %v339 = vpack.c.b16 %v267, %v259
  %v340 = vpack.c.b16 %v268, %v260
  %v341 = vpack.c.b16 %v269, %v261
  %v342 = vpack.c.b16 %v270, %v262
  %v343 = vpack.c.b16 %v271, %v263
  %v344 = vpack.c.b16 %v272, %v264
  %v345 = vpack.c.b16 %v281, %v273
  %v346 = vpack.c.b16 %v282, %v274
  %v347 = vpack.c.b16 %v283, %v275
  %v348 = vpack.c.b16 %v284, %v276
  %v349 = vpack.c.b16 %v285, %v277
  %v350 = vpack.c.b16 %v286, %v278
  %v351 = vpack.c.b16 %v287, %v279
  %v352 = vpack.c.b16 %v288, %v280
  %417 = vmatpush.bf16.msra.mxu0 %v345
  %418 = vmatpush.bf16.msra.mxu0 %v337
  %419 = vmatpush.bf16.msra.mxu0 %v329
  %420 = vmatpush.bf16.msra.mxu0 %v321
  %421 = vmatpush.bf16.msra.mxu0 %v313
  %422 = vmatpush.bf16.msra.mxu0 %v305
  %423 = vmatpush.bf16.msra.mxu0 %v297
  %424 = vmatpush.bf16.msra.mxu0 %v289
  %425 = vmatmul.bf16.gmra.mxu0 %v14
  %v426 = vpop.f32.mrf.mxu0
  %v427 = vadd.f32 %v81, %v426
  %v428 = vpop.f32.mrf.mxu0
  %429 = vdwg.mxu0
  %430 = vmatpush.bf16.msra.mxu0 %v346
  %431 = vmatpush.bf16.msra.mxu0 %v338
  %432 = vmatpush.bf16.msra.mxu0 %v330
  %433 = vmatpush.bf16.msra.mxu0 %v322
  %434 = vmatpush.bf16.msra.mxu0 %v314
  %435 = vmatpush.bf16.msra.mxu0 %v306
  %436 = vmatpush.bf16.msra.mxu0 %v298
  %437 = vmatpush.bf16.msra.mxu0 %v290
  %438 = vmatmul.bf16.gmra.mxu0 %v14
  %v439 = vpop.f32.mrf.mxu0
  %v440 = vadd.f32 %v82, %v439
  %v441 = vpop.f32.mrf.mxu0
  %442 = vdwg.mxu0
  %443 = vmatpush.bf16.msra.mxu0 %v347
  %444 = vmatpush.bf16.msra.mxu0 %v339
  %445 = vmatpush.bf16.msra.mxu0 %v331
  %446 = vmatpush.bf16.msra.mxu0 %v323
  %447 = vmatpush.bf16.msra.mxu0 %v315
  %448 = vmatpush.bf16.msra.mxu0 %v307
  %449 = vmatpush.bf16.msra.mxu0 %v299
  %450 = vmatpush.bf16.msra.mxu0 %v291
  %451 = vmatmul.bf16.gmra.mxu0 %v14
  %v452 = vpop.f32.mrf.mxu0
  %v453 = vadd.f32 %v83, %v452
  %v454 = vpop.f32.mrf.mxu0
  %455 = vdwg.mxu0
  %456 = vmatpush.bf16.msra.mxu0 %v348
  %457 = vmatpush.bf16.msra.mxu0 %v340
  %458 = vmatpush.bf16.msra.mxu0 %v332
  %459 = vmatpush.bf16.msra.mxu0 %v324
  %460 = vmatpush.bf16.msra.mxu0 %v316
  %461 = vmatpush.bf16.msra.mxu0 %v308
  %462 = vmatpush.bf16.msra.mxu0 %v300
  %463 = vmatpush.bf16.msra.mxu0 %v292
  %464 = vmatmul.bf16.gmra.mxu0 %v14
  %v465 = vpop.f32.mrf.mxu0
  %v466 = vadd.f32 %v84, %v465
  %v467 = vpop.f32.mrf.mxu0
  %468 = vdwg.mxu0
  %469 = vmatpush.bf16.msra.mxu0 %v349
  %470 = vmatpush.bf16.msra.mxu0 %v341
  %471 = vmatpush.bf16.msra.mxu0 %v333
  %472 = vmatpush.bf16.msra.mxu0 %v325
  %473 = vmatpush.bf16.msra.mxu0 %v317
  %474 = vmatpush.bf16.msra.mxu0 %v309
  %475 = vmatpush.bf16.msra.mxu0 %v301
  %476 = vmatpush.bf16.msra.mxu0 %v293
  %477 = vmatmul.bf16.gmra.mxu0 %v14
  %v478 = vpop.f32.mrf.mxu0
  %v479 = vadd.f32 %v85, %v478
  %v480 = vpop.f32.mrf.mxu0
  %481 = vdwg.mxu0
  %482 = vmatpush.bf16.msra.mxu0 %v350
  %483 = vmatpush.bf16.msra.mxu0 %v342
  %484 = vmatpush.bf16.msra.mxu0 %v334
  %485 = vmatpush.bf16.msra.mxu0 %v326
  %486 = vmatpush.bf16.msra.mxu0 %v318
  %487 = vmatpush.bf16.msra.mxu0 %v310
  %488 = vmatpush.bf16.msra.mxu0 %v302
  %489 = vmatpush.bf16.msra.mxu0 %v294
  %490 = vmatmul.bf16.gmra.mxu0 %v14
  %v491 = vpop.f32.mrf.mxu0
  %v492 = vadd.f32 %v86, %v491
  %v493 = vpop.f32.mrf.mxu0
  %494 = vdwg.mxu0
  %495 = vmatpush.bf16.msra.mxu0 %v351
  %496 = vmatpush.bf16.msra.mxu0 %v343
  %497 = vmatpush.bf16.msra.mxu0 %v335
  %498 = vmatpush.bf16.msra.mxu0 %v327
  %499 = vmatpush.bf16.msra.mxu0 %v319
  %500 = vmatpush.bf16.msra.mxu0 %v311
  %501 = vmatpush.bf16.msra.mxu0 %v303
  %502 = vmatpush.bf16.msra.mxu0 %v295
  %503 = vmatmul.bf16.gmra.mxu0 %v14
  %v504 = vpop.f32.mrf.mxu0
  %v505 = vadd.f32 %v87, %v504
  %v506 = vpop.f32.mrf.mxu0
  %507 = vdwg.mxu0
  %508 = vmatpush.bf16.msra.mxu0 %v352
  %509 = vmatpush.bf16.msra.mxu0 %v344
  %510 = vmatpush.bf16.msra.mxu0 %v336
  %511 = vmatpush.bf16.msra.mxu0 %v328
  %512 = vmatpush.bf16.msra.mxu0 %v320
  %513 = vmatpush.bf16.msra.mxu0 %v312
  %514 = vmatpush.bf16.msra.mxu0 %v304
  %515 = vmatpush.bf16.msra.mxu0 %v296
  %516 = vmatmul.bf16.gmra.mxu0 %v14
  %v517 = vpop.f32.mrf.mxu0
  %v518 = vadd.f32 %v88, %v517
  %v519 = vpop.f32.mrf.mxu0
  %520 = vdwg.mxu0
  %v521 = vpack.c.bf16 %v440, %v427
  %v522 = vpack.c.bf16 %v466, %v453
  %v523 = vpack.c.bf16 %v492, %v479
  %v524 = vpack.c.bf16 %v518, %v505
  %v529 = vrot.slane %v521, 3
  %v530 = vrot.slane %v522, 6
  %v531 = vrot.slane %v522, 1
  %v532 = vrot.slane %v523, 4
  %v533 = vrot.slane %v523, 7
  %v534 = vrot.slane %v524, 2
  %v535 = vrot.slane %v524, 5
  %vm536 = vcmask 1040384
  %v539 = vsel %vm536, %v521, %v529
  %vm540 = vcmask 1042434
  %v543 = vsel %vm540, %v530, %v531
  %vm544 = vcmask 1041408
  %v545 = vsel %vm544, %v539, %v543
  %vm546 = vcmask 1044484
  %v549 = vsel %vm546, %v532, %v533
  %vm550 = vcmask 1046534
  %v553 = vsel %vm550, %v534, %v535
  %vm554 = vcmask 1045508
  %v555 = vsel %vm554, %v549, %v553
  %vm556 = vcmask 1043456
  %v557 = vsel %vm556, %v545, %v555
  %559 = vst [vmem:[%s3] sm:$0xff] %v557
  // Predicated region
  $region14: #{forward.9} parent=0 // pred_check
    _
  $region15: #{forward.9} parent=0 // pred_check_branch
    %561 = sbr.rel (0) target = $region17
  $region16: #{forward.9} parent=0 // pred_region
    _
  $region17: #{forward.9} parent=0 // pred_fallthru
    _
  // Predicated region
  $region18: #{forward.9} parent=0 // pred_check
    _
  $region19: #{forward.9} parent=0 // pred_check_branch
    %563 = sbr.rel (0) target = $region21
  $region20: #{forward.9} parent=0 // pred_region
    _
  $region21: #{forward.9} parent=0 // pred_fallthru
    _

// kernel: forward.8
$region0: #{forward.8}
  #allocation0 [shape = 'u32[]', space=smem, size = 0x4, offset = 0x4, fixed_abs, tag = 'smem constant byte address 0x4 - core index']
  #allocation1 [shape = 'u32[72,128]{1,0:T(1,128)}', space=vmem, size = 0x9000, scoped, tag = 'internal scratch']
  %s0 = inlined_call_operand.vmem [shape: bf16[2,1024], index: 0, kind: input, shape index: {}]
  %s1 = inlined_call_operand.vmem [shape: bf16[1024,128], index: 1, kind: input, shape index: {}]
  %s2 = inlined_call_operand.vmem [shape: f32[1,128], index: 2, kind: input, shape index: {}]
  %s3 = inlined_call_operand.vmem [shape: f32[2,128], index: 3, kind: output, shape index: {}]
  %s4 = sld [smem:[#allocation0]]
  $region30: #{forward.8} parent=0
    _
  %s6 = ssub.s32 1, %s4
  %s7 = scalar_select 0, %s6, %s4
  // Predicated region
  $region2: #{forward.8} parent=0 // pred_check
    _
  $region3: #{forward.8} parent=0 // pred_check_branch
    %9 = sbr.rel (0) target = $region5
  $region4: #{forward.8} parent=0 // pred_region
    _
  $region5: #{forward.8} parent=0 // pred_fallthru
    _
  // Predicated region
  $region6: #{forward.8} parent=0 // pred_check
    _
  $region7: #{forward.8} parent=0 // pred_check_branch
    %11 = sbr.rel (0) target = $region9
  $region8: #{forward.8} parent=0 // pred_region
    _
  $region9: #{forward.8} parent=0 // pred_fallthru
    _
  // Predicated region
  $region10: #{forward.8} parent=0 // pred_check
    _
  $region11: #{forward.8} parent=0 // pred_check_branch
    %13 = sbr.rel (0) target = $region13
  $region12: #{forward.8} parent=0 // pred_region
    _
  $region13: #{forward.8} parent=0 // pred_fallthru
    _
  %p14 = scmp.eq.s32.totalorder 0, 0
  // Predicated region
  $region14: #{forward.8} parent=0 // pred_check
    %p15 = pneg %p14
  $region15: #{forward.8} parent=0 // pred_check_branch
    %17 = sbr.rel (%p15) target = $region17
  $region16: #{forward.8} parent=0 // pred_region
    %18 = vst [vmem:[%s3] sm:$0x3] 0.0
  $region17: #{forward.8} parent=0 // pred_fallthru
    _
  %v19 = vld [vmem:[%s3] sm:$0x3]
  %v20 = vld [vmem:[%s0] sm:$0xff]
  %v21 = vld [vmem:[%s1] sm:$0xf]
  %v22 = vld [vmem:[%s1 + $0x4] sm:$0xf]
  %v23 = vld [vmem:[%s1 + $0x8] sm:$0xf]
  %v24 = vld [vmem:[%s1 + $0xc] sm:$0xf]
  %v25 = vld [vmem:[%s1 + $0x10] sm:$0xf]
  %v26 = vld [vmem:[%s1 + $0x14] sm:$0xf]
  %v27 = vld [vmem:[%s1 + $0x18] sm:$0xf]
  %v28 = vld [vmem:[%s1 + $0x1c] sm:$0xf]
  %v29 = vld [vmem:[%s1 + $0x20] sm:$0xf]
  %v30 = vld [vmem:[%s1 + $0x24] sm:$0xf]
  %v31 = vld [vmem:[%s1 + $0x28] sm:$0xf]
  %v32 = vld [vmem:[%s1 + $0x2c] sm:$0xf]
  %v33 = vld [vmem:[%s1 + $0x30] sm:$0xf]
  %v34 = vld [vmem:[%s1 + $0x34] sm:$0xf]
  %v35 = vld [vmem:[%s1 + $0x38] sm:$0xf]
  %v36 = vld [vmem:[%s1 + $0x3c] sm:$0xf]
  %v37 = vld [vmem:[%s1 + $0x40] sm:$0xf]
  %v38 = vld [vmem:[%s1 + $0x44] sm:$0xf]
  %v39 = vld [vmem:[%s1 + $0x48] sm:$0xf]
  %v40 = vld [vmem:[%s1 + $0x4c] sm:$0xf]
  %v41 = vld [vmem:[%s1 + $0x50] sm:$0xf]
  %v42 = vld [vmem:[%s1 + $0x54] sm:$0xf]
  %v43 = vld [vmem:[%s1 + $0x58] sm:$0xf]
  %v44 = vld [vmem:[%s1 + $0x5c] sm:$0xf]
  %v45 = vld [vmem:[%s1 + $0x60] sm:$0xf]
  %v46 = vld [vmem:[%s1 + $0x64] sm:$0xf]
  %v47 = vld [vmem:[%s1 + $0x68] sm:$0xf]
  %v48 = vld [vmem:[%s1 + $0x6c] sm:$0xf]
  %v49 = vld [vmem:[%s1 + $0x70] sm:$0xf]
  %v50 = vld [vmem:[%s1 + $0x74] sm:$0xf]
  %v51 = vld [vmem:[%s1 + $0x78] sm:$0xf]
  %v52 = vld [vmem:[%s1 + $0x7c] sm:$0xf]
  %v53 = vld [vmem:[%s1 + $0x80] sm:$0xf]
  %v54 = vld [vmem:[%s1 + $0x84] sm:$0xf]
  %v55 = vld [vmem:[%s1 + $0x88] sm:$0xf]
  %v56 = vld [vmem:[%s1 + $0x8c] sm:$0xf]
  %v57 = vld [vmem:[%s1 + $0x90] sm:$0xf]
  %v58 = vld [vmem:[%s1 + $0x94] sm:$0xf]
  %v59 = vld [vmem:[%s1 + $0x98] sm:$0xf]
  %v60 = vld [vmem:[%s1 + $0x9c] sm:$0xf]
  %v61 = vld [vmem:[%s1 + $0xa0] sm:$0xf]
  %v62 = vld [vmem:[%s1 + $0xa4] sm:$0xf]
  %v63 = vld [vmem:[%s1 + $0xa8] sm:$0xf]
  %v64 = vld [vmem:[%s1 + $0xac] sm:$0xf]
  %v65 = vld [vmem:[%s1 + $0xb0] sm:$0xf]
  %v66 = vld [vmem:[%s1 + $0xb4] sm:$0xf]
  %v67 = vld [vmem:[%s1 + $0xb8] sm:$0xf]
  %v68 = vld [vmem:[%s1 + $0xbc] sm:$0xf]
  %v69 = vld [vmem:[%s1 + $0xc0] sm:$0xf]
  %v70 = vld [vmem:[%s1 + $0xc4] sm:$0xf]
  %v71 = vld [vmem:[%s1 + $0xc8] sm:$0xf]
  %v72 = vld [vmem:[%s1 + $0xcc] sm:$0xf]
  %v73 = vld [vmem:[%s1 + $0xd0] sm:$0xf]
  %v74 = vld [vmem:[%s1 + $0xd4] sm:$0xf]
  %v75 = vld [vmem:[%s1 + $0xd8] sm:$0xf]
  %v76 = vld [vmem:[%s1 + $0xdc] sm:$0xf]
  %v77 = vld [vmem:[%s1 + $0xe0] sm:$0xf]
  %v78 = vld [vmem:[%s1 + $0xe4] sm:$0xf]
  %v79 = vld [vmem:[%s1 + $0xe8] sm:$0xf]
  %v80 = vld [vmem:[%s1 + $0xec] sm:$0xf]
  %v81 = vld [vmem:[%s1 + $0xf0] sm:$0xf]
  %v82 = vld [vmem:[%s1 + $0xf4] sm:$0xf]
  %v83 = vld [vmem:[%s1 + $0xf8] sm:$0xf]
  %v84 = vld [vmem:[%s1 + $0xfc] sm:$0xf]
  %v85 = vld [vmem:[%s1 + $0x100] sm:$0xf]
  %v86 = vld [vmem:[%s1 + $0x104] sm:$0xf]
  %v87 = vld [vmem:[%s1 + $0x108] sm:$0xf]
  %v88 = vld [vmem:[%s1 + $0x10c] sm:$0xf]
  %v89 = vld [vmem:[%s1 + $0x110] sm:$0xf]
  %v90 = vld [vmem:[%s1 + $0x114] sm:$0xf]
  %v91 = vld [vmem:[%s1 + $0x118] sm:$0xf]
  %v92 = vld [vmem:[%s1 + $0x11c] sm:$0xf]
  %v93 = vld [vmem:[%s1 + $0x120] sm:$0xf]
  %v94 = vld [vmem:[%s1 + $0x124] sm:$0xf]
  %v95 = vld [vmem:[%s1 + $0x128] sm:$0xf]
  %v96 = vld [vmem:[%s1 + $0x12c] sm:$0xf]
  %v97 = vld [vmem:[%s1 + $0x130] sm:$0xf]
  %v98 = vld [vmem:[%s1 + $0x134] sm:$0xf]
  %v99 = vld [vmem:[%s1 + $0x138] sm:$0xf]
  %v100 = vld [vmem:[%s1 + $0x13c] sm:$0xf]
  %v101 = vld [vmem:[%s1 + $0x140] sm:$0xf]
  %v102 = vld [vmem:[%s1 + $0x144] sm:$0xf]
  %v103 = vld [vmem:[%s1 + $0x148] sm:$0xf]
  %v104 = vld [vmem:[%s1 + $0x14c] sm:$0xf]
  %v105 = vld [vmem:[%s1 + $0x150] sm:$0xf]
  %v106 = vld [vmem:[%s1 + $0x154] sm:$0xf]
  %v107 = vld [vmem:[%s1 + $0x158] sm:$0xf]
  %v108 = vld [vmem:[%s1 + $0x15c] sm:$0xf]
  %v109 = vld [vmem:[%s1 + $0x160] sm:$0xf]
  %v110 = vld [vmem:[%s1 + $0x164] sm:$0xf]
  %v111 = vld [vmem:[%s1 + $0x168] sm:$0xf]
  %v112 = vld [vmem:[%s1 + $0x16c] sm:$0xf]
  %v113 = vld [vmem:[%s1 + $0x170] sm:$0xf]
  %v114 = vld [vmem:[%s1 + $0x174] sm:$0xf]
  %v115 = vld [vmem:[%s1 + $0x178] sm:$0xf]
  %v116 = vld [vmem:[%s1 + $0x17c] sm:$0xf]
  %v117 = vld [vmem:[%s1 + $0x180] sm:$0xf]
  %v118 = vld [vmem:[%s1 + $0x184] sm:$0xf]
  %v119 = vld [vmem:[%s1 + $0x188] sm:$0xf]
  %v120 = vld [vmem:[%s1 + $0x18c] sm:$0xf]
  %v121 = vld [vmem:[%s1 + $0x190] sm:$0xf]
  %v122 = vld [vmem:[%s1 + $0x194] sm:$0xf]
  %v123 = vld [vmem:[%s1 + $0x198] sm:$0xf]
  %v124 = vld [vmem:[%s1 + $0x19c] sm:$0xf]
  %v125 = vld [vmem:[%s1 + $0x1a0] sm:$0xf]
  %v126 = vld [vmem:[%s1 + $0x1a4] sm:$0xf]
  %v127 = vld [vmem:[%s1 + $0x1a8] sm:$0xf]
  %v128 = vld [vmem:[%s1 + $0x1ac] sm:$0xf]
  %v129 = vld [vmem:[%s1 + $0x1b0] sm:$0xf]
  %v130 = vld [vmem:[%s1 + $0x1b4] sm:$0xf]
  %v131 = vld [vmem:[%s1 + $0x1b8] sm:$0xf]
  %v132 = vld [vmem:[%s1 + $0x1bc] sm:$0xf]
  %v133 = vld [vmem:[%s1 + $0x1c0] sm:$0xf]
  %v134 = vld [vmem:[%s1 + $0x1c4] sm:$0xf]
  %v135 = vld [vmem:[%s1 + $0x1c8] sm:$0xf]
  %v136 = vld [vmem:[%s1 + $0x1cc] sm:$0xf]
  %v137 = vld [vmem:[%s1 + $0x1d0] sm:$0xf]
  %v138 = vld [vmem:[%s1 + $0x1d4] sm:$0xf]
  %v139 = vld [vmem:[%s1 + $0x1d8] sm:$0xf]
  %v140 = vld [vmem:[%s1 + $0x1dc] sm:$0xf]
  %v141 = vld [vmem:[%s1 + $0x1e0] sm:$0xf]
  %v142 = vld [vmem:[%s1 + $0x1e4] sm:$0xf]
  %v143 = vld [vmem:[%s1 + $0x1e8] sm:$0xf]
  %v144 = vld [vmem:[%s1 + $0x1ec] sm:$0xf]
  %v145 = vld [vmem:[%s1 + $0x1f0] sm:$0xf]
  %v146 = vld [vmem:[%s1 + $0x1f4] sm:$0xf]
  %v147 = vld [vmem:[%s1 + $0x1f8] sm:$0xf]
  %v148 = vld [vmem:[%s1 + $0x1fc] sm:$0xf]
  %150 = vst [vmem:[#allocation1] ss:$9 sm:$0xff] %v20
  %v151 = vld [vmem:[#allocation1] sm:$0xff]
  %v152 = vld [vmem:[#allocation1 + $0x9] sm:$0xff]
  %v153 = vld [vmem:[#allocation1 + $0x12] sm:$0xff]
  %v154 = vld [vmem:[#allocation1 + $0x1b] sm:$0xff]
  %v155 = vld [vmem:[#allocation1 + $0x24] sm:$0xff]
  %v156 = vld [vmem:[#allocation1 + $0x2d] sm:$0xff]
  %v157 = vld [vmem:[#allocation1 + $0x36] sm:$0xff]
  %v158 = vld [vmem:[#allocation1 + $0x3f] sm:$0xff]
  %v295 = vunpack.c.l.b16 %v21
  %v296 = vunpack.c.l.b16 %v22
  %v297 = vunpack.c.l.b16 %v23
  %v298 = vunpack.c.l.b16 %v24
  %v299 = vunpack.c.l.b16 %v25
  %v300 = vunpack.c.l.b16 %v26
  %v301 = vunpack.c.l.b16 %v27
  %v302 = vunpack.c.l.b16 %v28
  %v303 = vunpack.c.l.b16 %v29
  %v304 = vunpack.c.l.b16 %v30
  %v305 = vunpack.c.l.b16 %v31
  %v306 = vunpack.c.l.b16 %v32
  %v307 = vunpack.c.l.b16 %v33
  %v308 = vunpack.c.l.b16 %v34
  %v309 = vunpack.c.l.b16 %v35
  %v310 = vunpack.c.l.b16 %v36
  %v311 = vunpack.c.l.b16 %v37
  %v312 = vunpack.c.l.b16 %v38
  %v313 = vunpack.c.l.b16 %v39
  %v314 = vunpack.c.l.b16 %v40
  %v315 = vunpack.c.l.b16 %v41
  %v316 = vunpack.c.l.b16 %v42
  %v317 = vunpack.c.l.b16 %v43
  %v318 = vunpack.c.l.b16 %v44
  %v319 = vunpack.c.l.b16 %v45
  %v320 = vunpack.c.l.b16 %v46
  %v321 = vunpack.c.l.b16 %v47
  %v322 = vunpack.c.l.b16 %v48
  %v323 = vunpack.c.l.b16 %v49
  %v324 = vunpack.c.l.b16 %v50
  %v325 = vunpack.c.l.b16 %v51
  %v326 = vunpack.c.l.b16 %v52
  %v327 = vunpack.c.l.b16 %v53
  %v328 = vunpack.c.l.b16 %v54
  %v329 = vunpack.c.l.b16 %v55
  %v330 = vunpack.c.l.b16 %v56
  %v331 = vunpack.c.l.b16 %v57
  %v332 = vunpack.c.l.b16 %v58
  %v333 = vunpack.c.l.b16 %v59
  %v334 = vunpack.c.l.b16 %v60
  %v335 = vunpack.c.l.b16 %v61
  %v336 = vunpack.c.l.b16 %v62
  %v337 = vunpack.c.l.b16 %v63
  %v338 = vunpack.c.l.b16 %v64
  %v339 = vunpack.c.l.b16 %v65
  %v340 = vunpack.c.l.b16 %v66
  %v341 = vunpack.c.l.b16 %v67
  %v342 = vunpack.c.l.b16 %v68
  %v343 = vunpack.c.l.b16 %v69
  %v344 = vunpack.c.l.b16 %v70
  %v345 = vunpack.c.l.b16 %v71
  %v346 = vunpack.c.l.b16 %v72
  %v347 = vunpack.c.l.b16 %v73
  %v348 = vunpack.c.l.b16 %v74
  %v349 = vunpack.c.l.b16 %v75
  %v350 = vunpack.c.l.b16 %v76
  %v351 = vunpack.c.l.b16 %v77
  %v352 = vunpack.c.l.b16 %v78
  %v353 = vunpack.c.l.b16 %v79
  %v354 = vunpack.c.l.b16 %v80
  %v355 = vunpack.c.l.b16 %v81
  %v356 = vunpack.c.l.b16 %v82
  %v357 = vunpack.c.l.b16 %v83
  %v358 = vunpack.c.l.b16 %v84
  %v359 = vunpack.c.l.b16 %v85
  %v360 = vunpack.c.l.b16 %v86
  %v361 = vunpack.c.l.b16 %v87
  %v362 = vunpack.c.l.b16 %v88
  %v363 = vunpack.c.l.b16 %v89
  %v364 = vunpack.c.l.b16 %v90
  %v365 = vunpack.c.l.b16 %v91
  %v366 = vunpack.c.l.b16 %v92
  %v367 = vunpack.c.l.b16 %v93
  %v368 = vunpack.c.l.b16 %v94
  %v369 = vunpack.c.l.b16 %v95
  %v370 = vunpack.c.l.b16 %v96
  %v371 = vunpack.c.l.b16 %v97
  %v372 = vunpack.c.l.b16 %v98
  %v373 = vunpack.c.l.b16 %v99
  %v374 = vunpack.c.l.b16 %v100
  %v375 = vunpack.c.l.b16 %v101
  %v376 = vunpack.c.l.b16 %v102
  %v377 = vunpack.c.l.b16 %v103
  %v378 = vunpack.c.l.b16 %v104
  %v379 = vunpack.c.l.b16 %v105
  %v380 = vunpack.c.l.b16 %v106
  %v381 = vunpack.c.l.b16 %v107
  %v382 = vunpack.c.l.b16 %v108
  %v383 = vunpack.c.l.b16 %v109
  %v384 = vunpack.c.l.b16 %v110
  %v385 = vunpack.c.l.b16 %v111
  %v386 = vunpack.c.l.b16 %v112
  %v387 = vunpack.c.l.b16 %v113
  %v388 = vunpack.c.l.b16 %v114
  %v389 = vunpack.c.l.b16 %v115
  %v390 = vunpack.c.l.b16 %v116
  %v391 = vunpack.c.l.b16 %v117
  %v392 = vunpack.c.l.b16 %v118
  %v393 = vunpack.c.l.b16 %v119
  %v394 = vunpack.c.l.b16 %v120
  %v395 = vunpack.c.l.b16 %v121
  %v396 = vunpack.c.l.b16 %v122
  %v397 = vunpack.c.l.b16 %v123
  %v398 = vunpack.c.l.b16 %v124
  %v399 = vunpack.c.l.b16 %v125
  %v400 = vunpack.c.l.b16 %v126
  %v401 = vunpack.c.l.b16 %v127
  %v402 = vunpack.c.l.b16 %v128
  %v403 = vunpack.c.l.b16 %v129
  %v404 = vunpack.c.l.b16 %v130
  %v405 = vunpack.c.l.b16 %v131
  %v406 = vunpack.c.l.b16 %v132
  %v407 = vunpack.c.l.b16 %v133
  %v408 = vunpack.c.l.b16 %v134
  %v409 = vunpack.c.l.b16 %v135
  %v410 = vunpack.c.l.b16 %v136
  %v411 = vunpack.c.l.b16 %v137
  %v412 = vunpack.c.l.b16 %v138
  %v413 = vunpack.c.l.b16 %v139
  %v414 = vunpack.c.l.b16 %v140
  %v415 = vunpack.c.l.b16 %v141
  %v416 = vunpack.c.l.b16 %v142
  %v417 = vunpack.c.l.b16 %v143
  %v418 = vunpack.c.l.b16 %v144
  %v419 = vunpack.c.l.b16 %v145
  %v420 = vunpack.c.l.b16 %v146
  %v421 = vunpack.c.l.b16 %v147
  %v422 = vunpack.c.l.b16 %v148
  %v423 = vpack.c.b16 %v296, %v295
  %v424 = vpack.c.b16 %v298, %v297
  %v425 = vpack.c.b16 %v300, %v299
  %v426 = vpack.c.b16 %v302, %v301
  %v427 = vpack.c.b16 %v304, %v303
  %v428 = vpack.c.b16 %v306, %v305
  %v429 = vpack.c.b16 %v308, %v307
  %v430 = vpack.c.b16 %v310, %v309
  %v431 = vpack.c.b16 %v312, %v311
  %v432 = vpack.c.b16 %v314, %v313
  %v433 = vpack.c.b16 %v316, %v315
  %v434 = vpack.c.b16 %v318, %v317
  %v435 = vpack.c.b16 %v320, %v319
  %v436 = vpack.c.b16 %v322, %v321
  %v437 = vpack.c.b16 %v324, %v323
  %v438 = vpack.c.b16 %v326, %v325
  %v439 = vpack.c.b16 %v328, %v327
  %v440 = vpack.c.b16 %v330, %v329
  %v441 = vpack.c.b16 %v332, %v331
  %v442 = vpack.c.b16 %v334, %v333
  %v443 = vpack.c.b16 %v336, %v335
  %v444 = vpack.c.b16 %v338, %v337
  %v445 = vpack.c.b16 %v340, %v339
  %v446 = vpack.c.b16 %v342, %v341
  %v447 = vpack.c.b16 %v344, %v343
  %v448 = vpack.c.b16 %v346, %v345
  %v449 = vpack.c.b16 %v348, %v347
  %v450 = vpack.c.b16 %v350, %v349
  %v451 = vpack.c.b16 %v352, %v351
  %v452 = vpack.c.b16 %v354, %v353
  %v453 = vpack.c.b16 %v356, %v355
  %v454 = vpack.c.b16 %v358, %v357
  %v455 = vpack.c.b16 %v360, %v359
  %v456 = vpack.c.b16 %v362, %v361
  %v457 = vpack.c.b16 %v364, %v363
  %v458 = vpack.c.b16 %v366, %v365
  %v459 = vpack.c.b16 %v368, %v367
  %v460 = vpack.c.b16 %v370, %v369
  %v461 = vpack.c.b16 %v372, %v371
  %v462 = vpack.c.b16 %v374, %v373
  %v463 = vpack.c.b16 %v376, %v375
  %v464 = vpack.c.b16 %v378, %v377
  %v465 = vpack.c.b16 %v380, %v379
  %v466 = vpack.c.b16 %v382, %v381
  %v467 = vpack.c.b16 %v384, %v383
  %v468 = vpack.c.b16 %v386, %v385
  %v469 = vpack.c.b16 %v388, %v387
  %v470 = vpack.c.b16 %v390, %v389
  %v471 = vpack.c.b16 %v392, %v391
  %v472 = vpack.c.b16 %v394, %v393
  %v473 = vpack.c.b16 %v396, %v395
  %v474 = vpack.c.b16 %v398, %v397
  %v475 = vpack.c.b16 %v400, %v399
  %v476 = vpack.c.b16 %v402, %v401
  %v477 = vpack.c.b16 %v404, %v403
  %v478 = vpack.c.b16 %v406, %v405
  %v479 = vpack.c.b16 %v408, %v407
  %v480 = vpack.c.b16 %v410, %v409
  %v481 = vpack.c.b16 %v412, %v411
  %v482 = vpack.c.b16 %v414, %v413
  %v483 = vpack.c.b16 %v416, %v415
  %v484 = vpack.c.b16 %v418, %v417
  %v485 = vpack.c.b16 %v420, %v419
  %v486 = vpack.c.b16 %v422, %v421
  %551 = vmatpush.bf16.msra.mxu0 %v430
  %552 = vmatpush.bf16.msra.mxu0 %v429
  %553 = vmatpush.bf16.msra.mxu0 %v428
  %554 = vmatpush.bf16.msra.mxu0 %v427
  %555 = vmatpush.bf16.msra.mxu0 %v426
  %556 = vmatpush.bf16.msra.mxu0 %v425
  %557 = vmatpush.bf16.msra.mxu0 %v424
  %558 = vmatpush.bf16.msra.mxu0 %v423
  %559 = vmatmul.bf16.gmra.mxu0 %v151
  %v560 = vpop.f32.mrf.mxu0
  %v561 = vadd.f32 0.0, %v560
  %v562 = vpop.f32.mrf.mxu0
  %563 = vdwg.mxu0
  %564 = vmatpush.bf16.msra.mxu0 %v438
  %565 = vmatpush.bf16.msra.mxu0 %v437
  %566 = vmatpush.bf16.msra.mxu0 %v436
  %567 = vmatpush.bf16.msra.mxu0 %v435
  %568 = vmatpush.bf16.msra.mxu0 %v434
  %569 = vmatpush.bf16.msra.mxu0 %v433
  %570 = vmatpush.bf16.msra.mxu0 %v432
  %571 = vmatpush.bf16.msra.mxu0 %v431
  %572 = vmatmul.bf16.gmra.mxu0 %v152
  %v573 = vpop.f32.mrf.mxu0
  %v574 = vadd.f32 %v561, %v573
  %v575 = vpop.f32.mrf.mxu0
  %576 = vdwg.mxu0
  %577 = vmatpush.bf16.msra.mxu0 %v446
  %578 = vmatpush.bf16.msra.mxu0 %v445
  %579 = vmatpush.bf16.msra.mxu0 %v444
  %580 = vmatpush.bf16.msra.mxu0 %v443
  %581 = vmatpush.bf16.msra.mxu0 %v442
  %582 = vmatpush.bf16.msra.mxu0 %v441
  %583 = vmatpush.bf16.msra.mxu0 %v440
  %584 = vmatpush.bf16.msra.mxu0 %v439
  %585 = vmatmul.bf16.gmra.mxu0 %v153
  %v586 = vpop.f32.mrf.mxu0
  %v587 = vadd.f32 %v574, %v586
  %v588 = vpop.f32.mrf.mxu0
  %589 = vdwg.mxu0
  %590 = vmatpush.bf16.msra.mxu0 %v454
  %591 = vmatpush.bf16.msra.mxu0 %v453
  %592 = vmatpush.bf16.msra.mxu0 %v452
  %593 = vmatpush.bf16.msra.mxu0 %v451
  %594 = vmatpush.bf16.msra.mxu0 %v450
  %595 = vmatpush.bf16.msra.mxu0 %v449
  %596 = vmatpush.bf16.msra.mxu0 %v448
  %597 = vmatpush.bf16.msra.mxu0 %v447
  %598 = vmatmul.bf16.gmra.mxu0 %v154
  %v599 = vpop.f32.mrf.mxu0
  %v600 = vadd.f32 %v587, %v599
  %v601 = vpop.f32.mrf.mxu0
  %602 = vdwg.mxu0
  %603 = vmatpush.bf16.msra.mxu0 %v462
  %604 = vmatpush.bf16.msra.mxu0 %v461
  %605 = vmatpush.bf16.msra.mxu0 %v460
  %606 = vmatpush.bf16.msra.mxu0 %v459
  %607 = vmatpush.bf16.msra.mxu0 %v458
  %608 = vmatpush.bf16.msra.mxu0 %v457
  %609 = vmatpush.bf16.msra.mxu0 %v456
  %610 = vmatpush.bf16.msra.mxu0 %v455
  %611 = vmatmul.bf16.gmra.mxu0 %v155
  %v612 = vpop.f32.mrf.mxu0
  %v613 = vadd.f32 %v600, %v612
  %v614 = vpop.f32.mrf.mxu0
  %615 = vdwg.mxu0
  %616 = vmatpush.bf16.msra.mxu0 %v470
  %617 = vmatpush.bf16.msra.mxu0 %v469
  %618 = vmatpush.bf16.msra.mxu0 %v468
  %619 = vmatpush.bf16.msra.mxu0 %v467
  %620 = vmatpush.bf16.msra.mxu0 %v466
  %621 = vmatpush.bf16.msra.mxu0 %v465
  %622 = vmatpush.bf16.msra.mxu0 %v464
  %623 = vmatpush.bf16.msra.mxu0 %v463
  %624 = vmatmul.bf16.gmra.mxu0 %v156
  %v625 = vpop.f32.mrf.mxu0
  %v626 = vadd.f32 %v613, %v625
  %v627 = vpop.f32.mrf.mxu0
  %628 = vdwg.mxu0
  %629 = vmatpush.bf16.msra.mxu0 %v478
  %630 = vmatpush.bf16.msra.mxu0 %v477
  %631 = vmatpush.bf16.msra.mxu0 %v476
  %632 = vmatpush.bf16.msra.mxu0 %v475
  %633 = vmatpush.bf16.msra.mxu0 %v474
  %634 = vmatpush.bf16.msra.mxu0 %v473
  %635 = vmatpush.bf16.msra.mxu0 %v472
  %636 = vmatpush.bf16.msra.mxu0 %v471
  %637 = vmatmul.bf16.gmra.mxu0 %v157
  %v638 = vpop.f32.mrf.mxu0
  %v639 = vadd.f32 %v626, %v638
  %v640 = vpop.f32.mrf.mxu0
  %641 = vdwg.mxu0
  %642 = vmatpush.bf16.msra.mxu0 %v486
  %643 = vmatpush.bf16.msra.mxu0 %v485
  %644 = vmatpush.bf16.msra.mxu0 %v484
  %645 = vmatpush.bf16.msra.mxu0 %v483
  %646 = vmatpush.bf16.msra.mxu0 %v482
  %647 = vmatpush.bf16.msra.mxu0 %v481
  %648 = vmatpush.bf16.msra.mxu0 %v480
  %649 = vmatpush.bf16.msra.mxu0 %v479
  %650 = vmatmul.bf16.gmra.mxu0 %v158
  %v651 = vpop.f32.mrf.mxu0
  %v652 = vadd.f32 %v639, %v651
  %v653 = vpop.f32.mrf.mxu0
  %654 = vdwg.mxu0
  %v655 = vadd.f32 %v19, %v652
  %656 = vst [vmem:[%s3] sm:$0x3] %v655
  // Predicated region
  $region18: #{forward.8} parent=0 // pred_check
    %p657 = pneg %p14
  $region19: #{forward.8} parent=0 // pred_check_branch
    %659 = sbr.rel (%p657) target = $region21
  $region20: #{forward.8} parent=0 // pred_region
    %v660 = vld [vmem:[%s3] sm:$0x3]
    %v661 = vld [vmem:[%s2] sm:$0x1]
    %v663 = vperm.slane %v661, 0
    %v665 = vadd.f32 %v660, %v663
    %666 = vst [vmem:[%s3] sm:$0x3] %v665
  $region21: #{forward.8} parent=0 // pred_fallthru
    _
  // Predicated region
  $region22: #{forward.8} parent=0 // pred_check
    _
  $region23: #{forward.8} parent=0 // pred_check_branch
    %668 = sbr.rel (0) target = $region25
  $region24: #{forward.8} parent=0 // pred_region
    _
  $region25: #{forward.8} parent=0 // pred_fallthru
    _
  // Predicated region
  $region26: #{forward.8} parent=0 // pred_check
    _
  $region27: #{forward.8} parent=0 // pred_check_branch
    %670 = sbr.rel (0) target = $region29
  $region28: #{forward.8} parent=0 // pred_region
    _
  $region29: #{forward.8} parent=0 // pred_fallthru
    _

// kernel: forward.11
$region0: #{forward.11}
  #allocation0 [shape = 'u32[]', space=smem, size = 0x4, offset = 0x4, fixed_abs, tag = 'smem constant byte address 0x4 - core index']
  #allocation1 [shape = 'u32[72,128]{1,0:T(1,128)}', space=vmem, size = 0x9000, scoped, tag = 'internal scratch']
  %s0 = inlined_call_operand.vmem [shape: bf16[2,256,128], index: 0, kind: input, shape index: {}]
  %s1 = inlined_call_operand.vmem [shape: bf16[128,128], index: 1, kind: input, shape index: {}]
  %s2 = inlined_call_operand.vmem [shape: f32[1,128], index: 2, kind: input, shape index: {}]
  %s3 = inlined_call_operand.vmem [shape: bf16[2,256,128], index: 3, kind: output, shape index: {}]
  %s4 = sld [smem:[#allocation0]]
  $region45: #{forward.11} parent=0
    _
  %s6 = ssub.s32 1, %s4
  %s7 = scalar_select 0, %s6, %s4
  loop: start=0, step=1, limit=4
  $region2: #{forward.11} parent=0 // loop_pre_header
    _
  $region3: #{forward.11} parent=0 // loop_header
    %s9 = sphi 0, %s13
    %p10 = scmp.ge.s32.totalorder %s9, 4
    %s16 = sphi 0, %s28
    %s17 = sphi 0, %s24
    %s18 = sphi 0, %s16
    %s19 = sphi 0, %s17
    %s20 = sphi 0, %s18
    %s21 = sphi 0, %s19
    %s33 = sphi 0, %s35
    %s36 = sphi 0, %s33
    %s37 = sphi 0, %s36
    %s53 = sphi 0, %s37
    %s57 = sphi 0, %s57
    %s59 = sphi 0, %s57
    %s60 = sphi 0, %s59
    %s74 = sphi 0, %s60
    %s78 = sphi 0, %s78
    %s80 = sphi 0, %s78
    %s81 = sphi 0, %s80
    %s95 = sphi 0, %s81
    %s103 = sphi 0, %s105
    %s106 = sphi 0, %s103
    %s107 = sphi 0, %s106
    %s123 = sphi 0, %s107
  $region4: #{forward.11} parent=0 // loop_header_branch
    %12 = sbr.rel (%p10) target = $region8
  $region5: #{forward.11} parent=0 // loop_body
    %s14 = ssub.s32 %s9, 1
    %s15 = ssub.s32 %s9, 2
    %s22 = sadd.s32 1, %s17
    %p23 = scmp.ge.s32.totalorder %s22, 1
    %s24 = scalar_select %p23, 0, %s22
    %s25 = sadd.s32 1, %s16
    %s26 = scalar_select %p23, %s25, %s16
    %p27 = scmp.ge.s32.totalorder %s26, 2
    %s28 = scalar_select %p27, 0, %s26
    %s29 = ssub.s32 %s16, %s28
    %s30 = ssub.s32 %s17, %s24
    %s31 = sor.u32 %s29, %s30
    %p32 = scmp.eq.s32.totalorder %s31, 0
    %s34 = sadd.s32 %s33, 1
    %s35 = scalar_select %p32, %s33, %s34
    %p38 = pneg %p32
    %p39 = scmp.eq.s32.totalorder %s9, 1
    %p40 = por %p38, %p39
    %p41 = scmp.ne.s32.totalorder %s33, %s36
    %p42 = scmp.eq.s32.totalorder %s9, 0
    %p43 = por %p41, %p42
    %p44 = scmp.ne.s32.totalorder %s33, %s36
    %p45 = scmp.eq.s32.totalorder %s14, 1
    %p46 = por %p44, %p45
    %p47 = scmp.ne.s32.totalorder %s36, %s37
    %p48 = scmp.eq.s32.totalorder %s14, 0
    %p49 = por %p47, %p48
    %p50 = scmp.ne.s32.totalorder %s36, %s37
    %p51 = scmp.eq.s32.totalorder %s15, 1
    %p52 = por %p50, %p51
    %p54 = scmp.ne.s32.totalorder %s37, %s53
    %p55 = scmp.eq.s32.totalorder %s15, 0
    %p56 = por %p54, %p55
    %s58 = sadd.s32 %s57, 1
    %p61 = scmp.eq.s32.totalorder %s9, 1
    %p62 = scmp.ne.s32.totalorder %s57, %s59
    %p63 = scmp.eq.s32.totalorder %s9, 0
    %p64 = por %p62, %p63
    %p65 = scmp.ne.s32.totalorder %s57, %s59
    %p66 = scmp.eq.s32.totalorder %s14, 1
    %p67 = por %p65, %p66
    %p68 = scmp.ne.s32.totalorder %s59, %s60
    %p69 = scmp.eq.s32.totalorder %s14, 0
    %p70 = por %p68, %p69
    %p71 = scmp.ne.s32.totalorder %s59, %s60
    %p72 = scmp.eq.s32.totalorder %s15, 1
    %p73 = por %p71, %p72
    %p75 = scmp.ne.s32.totalorder %s60, %s74
    %p76 = scmp.eq.s32.totalorder %s15, 0
    %p77 = por %p75, %p76
    %s79 = sadd.s32 %s78, 1
    %p82 = scmp.eq.s32.totalorder %s9, 1
    %p83 = scmp.ne.s32.totalorder %s78, %s80
    %p84 = scmp.eq.s32.totalorder %s9, 0
    %p85 = por %p83, %p84
    %p86 = scmp.ne.s32.totalorder %s78, %s80
    %p87 = scmp.eq.s32.totalorder %s14, 1
    %p88 = por %p86, %p87
    %p89 = scmp.ne.s32.totalorder %s80, %s81
    %p90 = scmp.eq.s32.totalorder %s14, 0
    %p91 = por %p89, %p90
    %p92 = scmp.ne.s32.totalorder %s80, %s81
    %p93 = scmp.eq.s32.totalorder %s15, 1
    %p94 = por %p92, %p93
    %p96 = scmp.ne.s32.totalorder %s81, %s95
    %p97 = scmp.eq.s32.totalorder %s15, 0
    %p98 = por %p96, %p97
    %s99 = ssub.s32 %s16, %s28
    %s100 = ssub.s32 %s17, %s24
    %s101 = sor.u32 %s99, %s100
    %p102 = scmp.eq.s32.totalorder %s101, 0
    %s104 = sadd.s32 %s103, 1
    %s105 = scalar_select %p102, %s103, %s104
    %p108 = pneg %p102
    %p109 = scmp.eq.s32.totalorder %s9, 1
    %p110 = por %p108, %p109
    %p111 = scmp.ne.s32.totalorder %s103, %s106
    %p112 = scmp.eq.s32.totalorder %s9, 0
    %p113 = por %p111, %p112
    %p114 = scmp.ne.s32.totalorder %s103, %s106
    %p115 = scmp.eq.s32.totalorder %s14, 1
    %p116 = por %p114, %p115
    %p117 = scmp.ne.s32.totalorder %s106, %s107
    %p118 = scmp.eq.s32.totalorder %s14, 0
    %p119 = por %p117, %p118
    %p120 = scmp.ne.s32.totalorder %s106, %s107
    %p121 = scmp.eq.s32.totalorder %s15, 1
    %p122 = por %p120, %p121
    %p124 = scmp.ne.s32.totalorder %s107, %s123
    %p125 = scmp.eq.s32.totalorder %s15, 0
    %p126 = por %p124, %p125
    %p127 = scmp.le.s32.totalorder 1, %s9
    %p128 = scmp.lt.s32.totalorder %s9, 3
    %p129 = pnand %p127, %p128
    %p130 = pneg %p129
    // Predicated region
    $region9: #{forward.11} parent=5 // pred_check
      _
    $region10: #{forward.11} parent=5 // pred_check_branch
      %132 = sbr.rel (%p129) target = $region12
    $region11: #{forward.11} parent=5 // pred_region
      %s133 = ssub.s32 %s9, 1
      // Predicated region
      $region13: #{forward.11} parent=11 // pred_check
        %p134 = pneg %p70
      $region14: #{forward.11} parent=11 // pred_check_branch
        %136 = sbr.rel (%p134) target = $region16
      $region15: #{forward.11} parent=11 // pred_region
        _
      $region16: #{forward.11} parent=11 // pred_fallthru
        _
      // Predicated region
      $region17: #{forward.11} parent=11 // pred_check
        %p137 = pneg %p91
      $region18: #{forward.11} parent=11 // pred_check_branch
        %139 = sbr.rel (%p137) target = $region20
      $region19: #{forward.11} parent=11 // pred_region
        _
      $region20: #{forward.11} parent=11 // pred_fallthru
        _
    $region12: #{forward.11} parent=5 // pred_fallthru
      _
    %p140 = scmp.lt.s32.totalorder %s9, 2
    // Predicated region
    $region21: #{forward.11} parent=5 // pred_check
      %p141 = pneg %p140
    $region22: #{forward.11} parent=5 // pred_check_branch
      %143 = sbr.rel (%p141) target = $region24
    $region23: #{forward.11} parent=5 // pred_region
      // Predicated region
      $region25: #{forward.11} parent=23 // pred_check
        %p144 = pneg %p43
      $region26: #{forward.11} parent=23 // pred_check_branch
        %146 = sbr.rel (%p144) target = $region28
      $region27: #{forward.11} parent=23 // pred_region
        %s147 = smul.u32 32, %s17
        %p148 = scmp.lt.s32.totalorder %s16, 1
        %s149 = scalar_select %p148, %s16, 1
        %p150 = scmp.lt.s32.totalorder %s147, 31
        %s151 = scalar_select %p150, %s147, 31
        %s152 = smul.addr %s149, 32
        %s153 = sadd.s32 %s151, %s152
        %s154 = smul.addr %s153, 4
        %s155 = scalar_lea.vmem %s0, %s154
        %s156 = smul.u32 32, %s17
      $region28: #{forward.11} parent=23 // pred_fallthru
        _
    $region24: #{forward.11} parent=5 // pred_fallthru
      _
    %p157 = scmp.le.s32.totalorder 1, %s9
    %p158 = scmp.lt.s32.totalorder %s9, 3
    %p159 = pnand %p157, %p158
    %p160 = pneg %p159
    // Predicated region
    $region29: #{forward.11} parent=5 // pred_check
      _
    $region30: #{forward.11} parent=5 // pred_check_branch
      %162 = sbr.rel (%p159) target = $region32
    $region31: #{forward.11} parent=5 // pred_region
      %s163 = ssub.s32 %s9, 1
      %s164 = smul.u32 32, %s19
      %p165 = scmp.lt.s32.totalorder %s18, 1
      %s166 = scalar_select %p165, %s18, 1
      %p167 = scmp.lt.s32.totalorder %s164, 31
      %s168 = scalar_select %p167, %s164, 31
      %s169 = smul.addr %s166, 32
      %s170 = sadd.s32 %s168, %s169
      %s171 = smul.addr %s170, 4
      %s172 = scalar_lea.vmem %s0, %s171
      %p173 = pneg %p49
      %p174 = pneg %p46
      %p175 = pneg %p70
      %p176 = pneg %p67
      %p177 = pneg %p91
      %p178 = pneg %p88
      %p179 = pneg %p119
      %p180 = pneg %p116
      %s181 = smul.u32 32, %s19
      %p182 = scmp.lt.s32.totalorder %s18, 1
      %s183 = scalar_select %p182, %s18, 1
      %p184 = scmp.lt.s32.totalorder %s181, 31
      %s185 = scalar_select %p184, %s181, 31
      %s186 = smul.addr %s183, 32
      %s187 = sadd.s32 %s185, %s186
      %s188 = smul.addr %s187, 4
      %s189 = scalar_lea.vmem %s3, %s188
      %s190 = smul.u32 32, %s19
      %p191 = scmp.lt.s32.totalorder %s18, 1
      %s192 = scalar_select %p191, %s18, 1
      %p193 = scmp.lt.s32.totalorder %s190, 31
      %s194 = scalar_select %p193, %s190, 31
      %s195 = smul.addr %s192, 32
      %s196 = sadd.s32 %s194, %s195
      %s197 = smul.addr %s196, 4
      %s198 = scalar_lea.vmem %s0, %s197
      %s199 = smul.u32 32, %s19
      %s200 = smul.u32 32, %s19
      %p201 = scmp.lt.s32.totalorder %s18, 1
      %s202 = scalar_select %p201, %s18, 1
      %p203 = scmp.lt.s32.totalorder %s200, 31
      %s204 = scalar_select %p203, %s200, 31
      %s205 = smul.addr %s202, 32
      %s206 = sadd.s32 %s204, %s205
      %s207 = smul.addr %s206, 4
      %s208 = scalar_lea.vmem %s3, %s207
      %s209 = smul.u32 32, %s19
      %v210 = vld [vmem:[%s198] sm:$0xf]
      %v211 = vld [vmem:[%s198 + $0x4] sm:$0xf]
      %v212 = vld [vmem:[%s198 + $0x8] sm:$0xf]
      %v213 = vld [vmem:[%s198 + $0xc] sm:$0xf]
      %v214 = vld [vmem:[%s198 + $0x10] sm:$0xf]
      %v215 = vld [vmem:[%s198 + $0x14] sm:$0xf]
      %v216 = vld [vmem:[%s198 + $0x18] sm:$0xf]
      %v217 = vld [vmem:[%s198 + $0x1c] sm:$0xf]
      %v218 = vld [vmem:[%s198 + $0x20] sm:$0xf]
      %v219 = vld [vmem:[%s198 + $0x24] sm:$0xf]
      %v220 = vld [vmem:[%s198 + $0x28] sm:$0xf]
      %v221 = vld [vmem:[%s198 + $0x2c] sm:$0xf]
      %v222 = vld [vmem:[%s198 + $0x30] sm:$0xf]
      %v223 = vld [vmem:[%s198 + $0x34] sm:$0xf]
      %v224 = vld [vmem:[%s198 + $0x38] sm:$0xf]
      %v225 = vld [vmem:[%s198 + $0x3c] sm:$0xf]
      %v226 = vld [vmem:[%s198 + $0x40] sm:$0xf]
      %v227 = vld [vmem:[%s198 + $0x44] sm:$0xf]
      %v228 = vld [vmem:[%s198 + $0x48] sm:$0xf]
      %v229 = vld [vmem:[%s198 + $0x4c] sm:$0xf]
      %v230 = vld [vmem:[%s198 + $0x50] sm:$0xf]
      %v231 = vld [vmem:[%s198 + $0x54] sm:$0xf]
      %v232 = vld [vmem:[%s198 + $0x58] sm:$0xf]
      %v233 = vld [vmem:[%s198 + $0x5c] sm:$0xf]
      %v234 = vld [vmem:[%s198 + $0x60] sm:$0xf]
      %v235 = vld [vmem:[%s198 + $0x64] sm:$0xf]
      %v236 = vld [vmem:[%s198 + $0x68] sm:$0xf]
      %v237 = vld [vmem:[%s198 + $0x6c] sm:$0xf]
      %v238 = vld [vmem:[%s198 + $0x70] sm:$0xf]
      %v239 = vld [vmem:[%s198 + $0x74] sm:$0xf]
      %v240 = vld [vmem:[%s198 + $0x78] sm:$0xf]
      %v241 = vld [vmem:[%s198 + $0x7c] sm:$0xf]
      %v242 = vld [vmem:[%s1] sm:$0xf]
      %v243 = vld [vmem:[%s1 + $0x4] sm:$0xf]
      %v244 = vld [vmem:[%s1 + $0x8] sm:$0xf]
      %v245 = vld [vmem:[%s1 + $0xc] sm:$0xf]
      %v246 = vld [vmem:[%s1 + $0x10] sm:$0xf]
      %v247 = vld [vmem:[%s1 + $0x14] sm:$0xf]
      %v248 = vld [vmem:[%s1 + $0x18] sm:$0xf]
      %v249 = vld [vmem:[%s1 + $0x1c] sm:$0xf]
      %v250 = vld [vmem:[%s1 + $0x20] sm:$0xf]
      %v251 = vld [vmem:[%s1 + $0x24] sm:$0xf]
      %v252 = vld [vmem:[%s1 + $0x28] sm:$0xf]
      %v253 = vld [vmem:[%s1 + $0x2c] sm:$0xf]
      %v254 = vld [vmem:[%s1 + $0x30] sm:$0xf]
      %v255 = vld [vmem:[%s1 + $0x34] sm:$0xf]
      %v256 = vld [vmem:[%s1 + $0x38] sm:$0xf]
      %v257 = vld [vmem:[%s1 + $0x3c] sm:$0xf]
      %v258 = vld [vmem:[%s2] sm:$0x1]
      %v260 = vperm.slane %v258, 0
      %v294 = vunpack.c.l.b16 %v210
      %v295 = vunpack.c.l.b16 %v211
      %v296 = vunpack.c.l.b16 %v212
      %v297 = vunpack.c.l.b16 %v213
      %v298 = vunpack.c.l.b16 %v214
      %v299 = vunpack.c.l.b16 %v215
      %v300 = vunpack.c.l.b16 %v216
      %v301 = vunpack.c.l.b16 %v217
      %v302 = vunpack.c.l.b16 %v218
      %v303 = vunpack.c.l.b16 %v219
      %v304 = vunpack.c.l.b16 %v220
      %v305 = vunpack.c.l.b16 %v221
      %v306 = vunpack.c.l.b16 %v222
      %v307 = vunpack.c.l.b16 %v223
      %v308 = vunpack.c.l.b16 %v224
      %v309 = vunpack.c.l.b16 %v225
      %v310 = vunpack.c.l.b16 %v226
      %v311 = vunpack.c.l.b16 %v227
      %v312 = vunpack.c.l.b16 %v228
      %v313 = vunpack.c.l.b16 %v229
      %v314 = vunpack.c.l.b16 %v230
      %v315 = vunpack.c.l.b16 %v231
      %v316 = vunpack.c.l.b16 %v232
      %v317 = vunpack.c.l.b16 %v233
      %v318 = vunpack.c.l.b16 %v234
      %v319 = vunpack.c.l.b16 %v235
      %v320 = vunpack.c.l.b16 %v236
      %v321 = vunpack.c.l.b16 %v237
      %v322 = vunpack.c.l.b16 %v238
      %v323 = vunpack.c.l.b16 %v239
      %v324 = vunpack.c.l.b16 %v240
      %v325 = vunpack.c.l.b16 %v241
      %v326 = vpack.c.b16 %v295, %v294
      %v327 = vpack.c.b16 %v297, %v296
      %v328 = vpack.c.b16 %v299, %v298
      %v329 = vpack.c.b16 %v301, %v300
      %v330 = vpack.c.b16 %v303, %v302
      %v331 = vpack.c.b16 %v305, %v304
      %v332 = vpack.c.b16 %v307, %v306
      %v333 = vpack.c.b16 %v309, %v308
      %v334 = vpack.c.b16 %v311, %v310
      %v335 = vpack.c.b16 %v313, %v312
      %v336 = vpack.c.b16 %v315, %v314
      %v337 = vpack.c.b16 %v317, %v316
      %v338 = vpack.c.b16 %v319, %v318
      %v339 = vpack.c.b16 %v321, %v320
      %v340 = vpack.c.b16 %v323, %v322
      %v341 = vpack.c.b16 %v325, %v324
      %v374 = vunpack.c.l.b16 %v242
      %v375 = vunpack.c.l.b16 %v243
      %v376 = vunpack.c.l.b16 %v244
      %v377 = vunpack.c.l.b16 %v245
      %v378 = vunpack.c.l.b16 %v246
      %v379 = vunpack.c.l.b16 %v247
      %v380 = vunpack.c.l.b16 %v248
      %v381 = vunpack.c.l.b16 %v249
      %v382 = vunpack.c.l.b16 %v250
      %v383 = vunpack.c.l.b16 %v251
      %v384 = vunpack.c.l.b16 %v252
      %v385 = vunpack.c.l.b16 %v253
      %v386 = vunpack.c.l.b16 %v254
      %v387 = vunpack.c.l.b16 %v255
      %v388 = vunpack.c.l.b16 %v256
      %v389 = vunpack.c.l.b16 %v257
      %v390 = vpack.c.b16 %v375, %v374
      %v391 = vpack.c.b16 %v377, %v376
      %v392 = vpack.c.b16 %v379, %v378
      %v393 = vpack.c.b16 %v381, %v380
      %v394 = vpack.c.b16 %v383, %v382
      %v395 = vpack.c.b16 %v385, %v384
      %v396 = vpack.c.b16 %v387, %v386
      %v397 = vpack.c.b16 %v389, %v388
      %406 = vmatpush.bf16.msra.mxu0 %v397
      %407 = vmatpush.bf16.msra.mxu0 %v396
      %408 = vmatpush.bf16.msra.mxu0 %v395
      %409 = vmatpush.bf16.msra.mxu0 %v394
      %410 = vmatpush.bf16.msra.mxu0 %v393
      %411 = vmatpush.bf16.msra.mxu0 %v392
      %412 = vmatpush.bf16.msra.mxu0 %v391
      %413 = vmatpush.bf16.msra.mxu0 %v390
      %414 = vmatmul.bf16.gmra.mxu0 %v326
      %v415 = vpop.f32.mrf.mxu0
      %v416 = vadd.f32 %v260, %v415
      %v417 = vpop.f32.mrf.mxu0
      %v418 = vadd.f32 %v260, %v417
      %419 = vmatmul.bf16.gmra.mxu0 %v327
      %v420 = vpop.f32.mrf.mxu0
      %v421 = vadd.f32 %v260, %v420
      %v422 = vpop.f32.mrf.mxu0
      %v423 = vadd.f32 %v260, %v422
      %424 = vmatmul.bf16.gmra.mxu0 %v328
      %v425 = vpop.f32.mrf.mxu0
      %v426 = vadd.f32 %v260, %v425
      %v427 = vpop.f32.mrf.mxu0
      %v428 = vadd.f32 %v260, %v427
      %429 = vmatmul.bf16.gmra.mxu0 %v329
      %v430 = vpop.f32.mrf.mxu0
      %v431 = vadd.f32 %v260, %v430
      %v432 = vpop.f32.mrf.mxu0
      %v433 = vadd.f32 %v260, %v432
      %434 = vmatmul.bf16.gmra.mxu0 %v330
      %v435 = vpop.f32.mrf.mxu0
      %v436 = vadd.f32 %v260, %v435
      %v437 = vpop.f32.mrf.mxu0
      %v438 = vadd.f32 %v260, %v437
      %439 = vmatmul.bf16.gmra.mxu0 %v331
      %v440 = vpop.f32.mrf.mxu0
      %v441 = vadd.f32 %v260, %v440
      %v442 = vpop.f32.mrf.mxu0
      %v443 = vadd.f32 %v260, %v442
      %444 = vmatmul.bf16.gmra.mxu0 %v332
      %v445 = vpop.f32.mrf.mxu0
      %v446 = vadd.f32 %v260, %v445
      %v447 = vpop.f32.mrf.mxu0
      %v448 = vadd.f32 %v260, %v447
      %449 = vmatmul.bf16.gmra.mxu0 %v333
      %v450 = vpop.f32.mrf.mxu0
      %v451 = vadd.f32 %v260, %v450
      %v452 = vpop.f32.mrf.mxu0
      %v453 = vadd.f32 %v260, %v452
      %454 = vmatmul.bf16.gmra.mxu0 %v334
      %v455 = vpop.f32.mrf.mxu0
      %v456 = vadd.f32 %v260, %v455
      %v457 = vpop.f32.mrf.mxu0
      %v458 = vadd.f32 %v260, %v457
      %459 = vmatmul.bf16.gmra.mxu0 %v335
      %v460 = vpop.f32.mrf.mxu0
      %v461 = vadd.f32 %v260, %v460
      %v462 = vpop.f32.mrf.mxu0
      %v463 = vadd.f32 %v260, %v462
      %464 = vmatmul.bf16.gmra.mxu0 %v336
      %v465 = vpop.f32.mrf.mxu0
      %v466 = vadd.f32 %v260, %v465
      %v467 = vpop.f32.mrf.mxu0
      %v468 = vadd.f32 %v260, %v467
      %469 = vmatmul.bf16.gmra.mxu0 %v337
      %v470 = vpop.f32.mrf.mxu0
      %v471 = vadd.f32 %v260, %v470
      %v472 = vpop.f32.mrf.mxu0
      %v473 = vadd.f32 %v260, %v472
      %474 = vmatmul.bf16.gmra.mxu0 %v338
      %v475 = vpop.f32.mrf.mxu0
      %v476 = vadd.f32 %v260, %v475
      %v477 = vpop.f32.mrf.mxu0
      %v478 = vadd.f32 %v260, %v477
      %479 = vmatmul.bf16.gmra.mxu0 %v339
      %v480 = vpop.f32.mrf.mxu0
      %v481 = vadd.f32 %v260, %v480
      %v482 = vpop.f32.mrf.mxu0
      %v483 = vadd.f32 %v260, %v482
      %484 = vmatmul.bf16.gmra.mxu0 %v340
      %v485 = vpop.f32.mrf.mxu0
      %v486 = vadd.f32 %v260, %v485
      %v487 = vpop.f32.mrf.mxu0
      %v488 = vadd.f32 %v260, %v487
      %489 = vmatmul.bf16.gmra.mxu0 %v341
      %v490 = vpop.f32.mrf.mxu0
      %v491 = vadd.f32 %v260, %v490
      %v492 = vpop.f32.mrf.mxu0
      %v493 = vadd.f32 %v260, %v492
      %494 = vdwg.mxu0
      %v495 = vxor.u32 %v416, 2147483648
      %v496 = vxor.u32 %v418, 2147483648
      %v497 = vxor.u32 %v421, 2147483648
      %v498 = vxor.u32 %v423, 2147483648
      %v499 = vxor.u32 %v426, 2147483648
      %v500 = vxor.u32 %v428, 2147483648
      %v501 = vxor.u32 %v431, 2147483648
      %v502 = vxor.u32 %v433, 2147483648
      %v503 = vxor.u32 %v436, 2147483648
      %v504 = vxor.u32 %v438, 2147483648
      %v505 = vxor.u32 %v441, 2147483648
      %v506 = vxor.u32 %v443, 2147483648
      %v507 = vxor.u32 %v446, 2147483648
      %v508 = vxor.u32 %v448, 2147483648
      %v509 = vxor.u32 %v451, 2147483648
      %v510 = vxor.u32 %v453, 2147483648
      %v511 = vxor.u32 %v456, 2147483648
      %v512 = vxor.u32 %v458, 2147483648
      %v513 = vxor.u32 %v461, 2147483648
      %v514 = vxor.u32 %v463, 2147483648
      %v515 = vxor.u32 %v466, 2147483648
      %v516 = vxor.u32 %v468, 2147483648
      %v517 = vxor.u32 %v471, 2147483648
      %v518 = vxor.u32 %v473, 2147483648
      %v519 = vxor.u32 %v476, 2147483648
      %v520 = vxor.u32 %v478, 2147483648
      %v521 = vxor.u32 %v481, 2147483648
      %v522 = vxor.u32 %v483, 2147483648
      %v523 = vxor.u32 %v486, 2147483648
      %v524 = vxor.u32 %v488, 2147483648
      %v525 = vxor.u32 %v491, 2147483648
      %v526 = vxor.u32 %v493, 2147483648
      %v527 = vmul.f32 %v495, 1.442695
      %v528 = vpow.pop %v527
      %v529 = vmul.f32 %v496, 1.442695
      %v530 = vpow.pop %v529
      %v531 = vmul.f32 %v497, 1.442695
      %v532 = vpow.pop %v531
      %v533 = vmul.f32 %v498, 1.442695
      %v534 = vpow.pop %v533
      %v535 = vmul.f32 %v499, 1.442695
      %v536 = vpow.pop %v535
      %v537 = vmul.f32 %v500, 1.442695
      %v538 = vpow.pop %v537
      %v539 = vmul.f32 %v501, 1.442695
      %v540 = vpow.pop %v539
      %v541 = vmul.f32 %v502, 1.442695
      %v542 = vpow.pop %v541
      %v543 = vmul.f32 %v503, 1.442695
      %v544 = vpow.pop %v543
      %v545 = vmul.f32 %v504, 1.442695
      %v546 = vpow.pop %v545
      %v547 = vmul.f32 %v505, 1.442695
      %v548 = vpow.pop %v547
      %v549 = vmul.f32 %v506, 1.442695
      %v550 = vpow.pop %v549
      %v551 = vmul.f32 %v507, 1.442695
      %v552 = vpow.pop %v551
      %v553 = vmul.f32 %v508, 1.442695
      %v554 = vpow.pop %v553
      %v555 = vmul.f32 %v509, 1.442695
      %v556 = vpow.pop %v555
      %v557 = vmul.f32 %v510, 1.442695
      %v558 = vpow.pop %v557
      %v559 = vmul.f32 %v511, 1.442695
      %v560 = vpow.pop %v559
      %v561 = vmul.f32 %v512, 1.442695
      %v562 = vpow.pop %v561
      %v563 = vmul.f32 %v513, 1.442695
      %v564 = vpow.pop %v563
      %v565 = vmul.f32 %v514, 1.442695
      %v566 = vpow.pop %v565
      %v567 = vmul.f32 %v515, 1.442695
      %v568 = vpow.pop %v567
      %v569 = vmul.f32 %v516, 1.442695
      %v570 = vpow.pop %v569
      %v571 = vmul.f32 %v517, 1.442695
      %v572 = vpow.pop %v571
      %v573 = vmul.f32 %v518, 1.442695
      %v574 = vpow.pop %v573
      %v575 = vmul.f32 %v519, 1.442695
      %v576 = vpow.pop %v575
      %v577 = vmul.f32 %v520, 1.442695
      %v578 = vpow.pop %v577
      %v579 = vmul.f32 %v521, 1.442695
      %v580 = vpow.pop %v579
      %v581 = vmul.f32 %v522, 1.442695
      %v582 = vpow.pop %v581
      %v583 = vmul.f32 %v523, 1.442695
      %v584 = vpow.pop %v583
      %v585 = vmul.f32 %v524, 1.442695
      %v586 = vpow.pop %v585
      %v587 = vmul.f32 %v525, 1.442695
      %v588 = vpow.pop %v587
      %v589 = vmul.f32 %v526, 1.442695
      %v590 = vpow.pop %v589
      %v591 = vadd.f32 %v528, 1.0
      %v592 = vadd.f32 %v530, 1.0
      %v593 = vadd.f32 %v532, 1.0
      %v594 = vadd.f32 %v534, 1.0
      %v595 = vadd.f32 %v536, 1.0
      %v596 = vadd.f32 %v538, 1.0
      %v597 = vadd.f32 %v540, 1.0
      %v598 = vadd.f32 %v542, 1.0
      %v599 = vadd.f32 %v544, 1.0
      %v600 = vadd.f32 %v546, 1.0
      %v601 = vadd.f32 %v548, 1.0
      %v602 = vadd.f32 %v550, 1.0
      %v603 = vadd.f32 %v552, 1.0
      %v604 = vadd.f32 %v554, 1.0
      %v605 = vadd.f32 %v556, 1.0
      %v606 = vadd.f32 %v558, 1.0
      %v607 = vadd.f32 %v560, 1.0
      %v608 = vadd.f32 %v562, 1.0
      %v609 = vadd.f32 %v564, 1.0
      %v610 = vadd.f32 %v566, 1.0
      %v611 = vadd.f32 %v568, 1.0
      %v612 = vadd.f32 %v570, 1.0
      %v613 = vadd.f32 %v572, 1.0
      %v614 = vadd.f32 %v574, 1.0
      %v615 = vadd.f32 %v576, 1.0
      %v616 = vadd.f32 %v578, 1.0
      %v617 = vadd.f32 %v580, 1.0
      %v618 = vadd.f32 %v582, 1.0
      %v619 = vadd.f32 %v584, 1.0
      %v620 = vadd.f32 %v586, 1.0
      %v621 = vadd.f32 %v588, 1.0
      %v622 = vadd.f32 %v590, 1.0
      %v623 = vrcp.pop %v591
      %v624 = vmul.f32 %v591, %v623
      %v625 = vsub.f32 1.0, %v624
      %v626 = vmul.f32 %v623, %v625
      %v627 = vadd.f32 %v623, %v626
      %vm628 = vweird.f32 %v591
      %vm629 = vweird.f32 %v623
      %vm630 = vmor %vm628, %vm629
      %v631 = vsel %vm630, %v623, %v627
      %v632 = vand.u32 2147483647, %v591
      %vm633 = vcmp.eq.f32.partialorder %v632, 8.507059e+37
      %v634 = vand.u32 %v591, 2147483648
      %v635 = vor.u32 1.1754944e-38, %v634
      %v636 = vsel %vm633, %v635, %v631
      %v637 = vmul.f32 1.0, %v636
      %v638 = vrcp.pop %v592
      %v639 = vmul.f32 %v592, %v638
      %v640 = vsub.f32 1.0, %v639
      %v641 = vmul.f32 %v638, %v640
      %v642 = vadd.f32 %v638, %v641
      %vm643 = vweird.f32 %v592
      %vm644 = vweird.f32 %v638
      %vm645 = vmor %vm643, %vm644
      %v646 = vsel %vm645, %v638, %v642
      %v647 = vand.u32 2147483647, %v592
      %vm648 = vcmp.eq.f32.partialorder %v647, 8.507059e+37
      %v649 = vand.u32 %v592, 2147483648
      %v650 = vor.u32 1.1754944e-38, %v649
      %v651 = vsel %vm648, %v650, %v646
      %v652 = vmul.f32 1.0, %v651
      %v653 = vrcp.pop %v593
      %v654 = vmul.f32 %v593, %v653
      %v655 = vsub.f32 1.0, %v654
      %v656 = vmul.f32 %v653, %v655
      %v657 = vadd.f32 %v653, %v656
      %vm658 = vweird.f32 %v593
      %vm659 = vweird.f32 %v653
      %vm660 = vmor %vm658, %vm659
      %v661 = vsel %vm660, %v653, %v657
      %v662 = vand.u32 2147483647, %v593
      %vm663 = vcmp.eq.f32.partialorder %v662, 8.507059e+37
      %v664 = vand.u32 %v593, 2147483648
      %v665 = vor.u32 1.1754944e-38, %v664
      %v666 = vsel %vm663, %v665, %v661
      %v667 = vmul.f32 1.0, %v666
      %v668 = vrcp.pop %v594
      %v669 = vmul.f32 %v594, %v668
      %v670 = vsub.f32 1.0, %v669
      %v671 = vmul.f32 %v668, %v670
      %v672 = vadd.f32 %v668, %v671
      %vm673 = vweird.f32 %v594
      %vm674 = vweird.f32 %v668
      %vm675 = vmor %vm673, %vm674
      %v676 = vsel %vm675, %v668, %v672
      %v677 = vand.u32 2147483647, %v594
      %vm678 = vcmp.eq.f32.partialorder %v677, 8.507059e+37
      %v679 = vand.u32 %v594, 2147483648
      %v680 = vor.u32 1.1754944e-38, %v679
      %v681 = vsel %vm678, %v680, %v676
      %v682 = vmul.f32 1.0, %v681
      %v683 = vrcp.pop %v595
      %v684 = vmul.f32 %v595, %v683
      %v685 = vsub.f32 1.0, %v684
      %v686 = vmul.f32 %v683, %v685
      %v687 = vadd.f32 %v683, %v686
      %vm688 = vweird.f32 %v595
      %vm689 = vweird.f32 %v683
      %vm690 = vmor %vm688, %vm689
      %v691 = vsel %vm690, %v683, %v687
      %v692 = vand.u32 2147483647, %v595
      %vm693 = vcmp.eq.f32.partialorder %v692, 8.507059e+37
      %v694 = vand.u32 %v595, 2147483648
      %v695 = vor.u32 1.1754944e-38, %v694
      %v696 = vsel %vm693, %v695, %v691
      %v697 = vmul.f32 1.0, %v696
      %v698 = vrcp.pop %v596
      %v699 = vmul.f32 %v596, %v698
      %v700 = vsub.f32 1.0, %v699
      %v701 = vmul.f32 %v698, %v700
      %v702 = vadd.f32 %v698, %v701
      %vm703 = vweird.f32 %v596
      %vm704 = vweird.f32 %v698
      %vm705 = vmor %vm703, %vm704
      %v706 = vsel %vm705, %v698, %v702
      %v707 = vand.u32 2147483647, %v596
      %vm708 = vcmp.eq.f32.partialorder %v707, 8.507059e+37
      %v709 = vand.u32 %v596, 2147483648
      %v710 = vor.u32 1.1754944e-38, %v709
      %v711 = vsel %vm708, %v710, %v706
      %v712 = vmul.f32 1.0, %v711
      %v713 = vrcp.pop %v597
      %v714 = vmul.f32 %v597, %v713
      %v715 = vsub.f32 1.0, %v714
      %v716 = vmul.f32 %v713, %v715
      %v717 = vadd.f32 %v713, %v716
      %vm718 = vweird.f32 %v597
      %vm719 = vweird.f32 %v713
      %vm720 = vmor %vm718, %vm719
      %v721 = vsel %vm720, %v713, %v717
      %v722 = vand.u32 2147483647, %v597
      %vm723 = vcmp.eq.f32.partialorder %v722, 8.507059e+37
      %v724 = vand.u32 %v597, 2147483648
      %v725 = vor.u32 1.1754944e-38, %v724
      %v726 = vsel %vm723, %v725, %v721
      %v727 = vmul.f32 1.0, %v726
      %v728 = vrcp.pop %v598
      %v729 = vmul.f32 %v598, %v728
      %v730 = vsub.f32 1.0, %v729
      %v731 = vmul.f32 %v728, %v730
      %v732 = vadd.f32 %v728, %v731
      %vm733 = vweird.f32 %v598
      %vm734 = vweird.f32 %v728
      %vm735 = vmor %vm733, %vm734
      %v736 = vsel %vm735, %v728, %v732
      %v737 = vand.u32 2147483647, %v598
      %vm738 = vcmp.eq.f32.partialorder %v737, 8.507059e+37
      %v739 = vand.u32 %v598, 2147483648
      %v740 = vor.u32 1.1754944e-38, %v739
      %v741 = vsel %vm738, %v740, %v736
      %v742 = vmul.f32 1.0, %v741
      %v743 = vrcp.pop %v599
      %v744 = vmul.f32 %v599, %v743
      %v745 = vsub.f32 1.0, %v744
      %v746 = vmul.f32 %v743, %v745
      %v747 = vadd.f32 %v743, %v746
      %vm748 = vweird.f32 %v599
      %vm749 = vweird.f32 %v743
      %vm750 = vmor %vm748, %vm749
      %v751 = vsel %vm750, %v743, %v747
      %v752 = vand.u32 2147483647, %v599
      %vm753 = vcmp.eq.f32.partialorder %v752, 8.507059e+37
      %v754 = vand.u32 %v599, 2147483648
      %v755 = vor.u32 1.1754944e-38, %v754
      %v756 = vsel %vm753, %v755, %v751
      %v757 = vmul.f32 1.0, %v756
      %v758 = vrcp.pop %v600
      %v759 = vmul.f32 %v600, %v758
      %v760 = vsub.f32 1.0, %v759
      %v761 = vmul.f32 %v758, %v760
      %v762 = vadd.f32 %v758, %v761
      %vm763 = vweird.f32 %v600
      %vm764 = vweird.f32 %v758
      %vm765 = vmor %vm763, %vm764
      %v766 = vsel %vm765, %v758, %v762
      %v767 = vand.u32 2147483647, %v600
      %vm768 = vcmp.eq.f32.partialorder %v767, 8.507059e+37
      %v769 = vand.u32 %v600, 2147483648
      %v770 = vor.u32 1.1754944e-38, %v769
      %v771 = vsel %vm768, %v770, %v766
      %v772 = vmul.f32 1.0, %v771
      %v773 = vrcp.pop %v601
      %v774 = vmul.f32 %v601, %v773
      %v775 = vsub.f32 1.0, %v774
      %v776 = vmul.f32 %v773, %v775
      %v777 = vadd.f32 %v773, %v776
      %vm778 = vweird.f32 %v601
      %vm779 = vweird.f32 %v773
      %vm780 = vmor %vm778, %vm779
      %v781 = vsel %vm780, %v773, %v777
      %v782 = vand.u32 2147483647, %v601
      %vm783 = vcmp.eq.f32.partialorder %v782, 8.507059e+37
      %v784 = vand.u32 %v601, 2147483648
      %v785 = vor.u32 1.1754944e-38, %v784
      %v786 = vsel %vm783, %v785, %v781
      %v787 = vmul.f32 1.0, %v786
      %v788 = vrcp.pop %v602
      %v789 = vmul.f32 %v602, %v788
      %v790 = vsub.f32 1.0, %v789
      %v791 = vmul.f32 %v788, %v790
      %v792 = vadd.f32 %v788, %v791
      %vm793 = vweird.f32 %v602
      %vm794 = vweird.f32 %v788
      %vm795 = vmor %vm793, %vm794
      %v796 = vsel %vm795, %v788, %v792
      %v797 = vand.u32 2147483647, %v602
      %vm798 = vcmp.eq.f32.partialorder %v797, 8.507059e+37
      %v799 = vand.u32 %v602, 2147483648
      %v800 = vor.u32 1.1754944e-38, %v799
      %v801 = vsel %vm798, %v800, %v796
      %v802 = vmul.f32 1.0, %v801
      %v803 = vrcp.pop %v603
      %v804 = vmul.f32 %v603, %v803
      %v805 = vsub.f32 1.0, %v804
      %v806 = vmul.f32 %v803, %v805
      %v807 = vadd.f32 %v803, %v806
      %vm808 = vweird.f32 %v603
      %vm809 = vweird.f32 %v803
      %vm810 = vmor %vm808, %vm809
      %v811 = vsel %vm810, %v803, %v807
      %v812 = vand.u32 2147483647, %v603
      %vm813 = vcmp.eq.f32.partialorder %v812, 8.507059e+37
      %v814 = vand.u32 %v603, 2147483648
      %v815 = vor.u32 1.1754944e-38, %v814
      %v816 = vsel %vm813, %v815, %v811
      %v817 = vmul.f32 1.0, %v816
      %v818 = vrcp.pop %v604
      %v819 = vmul.f32 %v604, %v818
      %v820 = vsub.f32 1.0, %v819
      %v821 = vmul.f32 %v818, %v820
      %v822 = vadd.f32 %v818, %v821
      %vm823 = vweird.f32 %v604
      %vm824 = vweird.f32 %v818
      %vm825 = vmor %vm823, %vm824
      %v826 = vsel %vm825, %v818, %v822
      %v827 = vand.u32 2147483647, %v604
      %vm828 = vcmp.eq.f32.partialorder %v827, 8.507059e+37
      %v829 = vand.u32 %v604, 2147483648
      %v830 = vor.u32 1.1754944e-38, %v829
      %v831 = vsel %vm828, %v830, %v826
      %v832 = vmul.f32 1.0, %v831
      %v833 = vrcp.pop %v605
      %v834 = vmul.f32 %v605, %v833
      %v835 = vsub.f32 1.0, %v834
      %v836 = vmul.f32 %v833, %v835
      %v837 = vadd.f32 %v833, %v836
      %vm838 = vweird.f32 %v605
      %vm839 = vweird.f32 %v833
      %vm840 = vmor %vm838, %vm839
      %v841 = vsel %vm840, %v833, %v837
      %v842 = vand.u32 2147483647, %v605
      %vm843 = vcmp.eq.f32.partialorder %v842, 8.507059e+37
      %v844 = vand.u32 %v605, 2147483648
      %v845 = vor.u32 1.1754944e-38, %v844
      %v846 = vsel %vm843, %v845, %v841
      %v847 = vmul.f32 1.0, %v846
      %v848 = vrcp.pop %v606
      %v849 = vmul.f32 %v606, %v848
      %v850 = vsub.f32 1.0, %v849
      %v851 = vmul.f32 %v848, %v850
      %v852 = vadd.f32 %v848, %v851
      %vm853 = vweird.f32 %v606
      %vm854 = vweird.f32 %v848
      %vm855 = vmor %vm853, %vm854
      %v856 = vsel %vm855, %v848, %v852
      %v857 = vand.u32 2147483647, %v606
      %vm858 = vcmp.eq.f32.partialorder %v857, 8.507059e+37
      %v859 = vand.u32 %v606, 2147483648
      %v860 = vor.u32 1.1754944e-38, %v859
      %v861 = vsel %vm858, %v860, %v856
      %v862 = vmul.f32 1.0, %v861
      %v863 = vrcp.pop %v607
      %v864 = vmul.f32 %v607, %v863
      %v865 = vsub.f32 1.0, %v864
      %v866 = vmul.f32 %v863, %v865
      %v867 = vadd.f32 %v863, %v866
      %vm868 = vweird.f32 %v607
      %vm869 = vweird.f32 %v863
      %vm870 = vmor %vm868, %vm869
      %v871 = vsel %vm870, %v863, %v867
      %v872 = vand.u32 2147483647, %v607
      %vm873 = vcmp.eq.f32.partialorder %v872, 8.507059e+37
      %v874 = vand.u32 %v607, 2147483648
      %v875 = vor.u32 1.1754944e-38, %v874
      %v876 = vsel %vm873, %v875, %v871
      %v877 = vmul.f32 1.0, %v876
      %v878 = vrcp.pop %v608
      %v879 = vmul.f32 %v608, %v878
      %v880 = vsub.f32 1.0, %v879
      %v881 = vmul.f32 %v878, %v880
      %v882 = vadd.f32 %v878, %v881
      %vm883 = vweird.f32 %v608
      %vm884 = vweird.f32 %v878
      %vm885 = vmor %vm883, %vm884
      %v886 = vsel %vm885, %v878, %v882
      %v887 = vand.u32 2147483647, %v608
      %vm888 = vcmp.eq.f32.partialorder %v887, 8.507059e+37
      %v889 = vand.u32 %v608, 2147483648
      %v890 = vor.u32 1.1754944e-38, %v889
      %v891 = vsel %vm888, %v890, %v886
      %v892 = vmul.f32 1.0, %v891
      %v893 = vrcp.pop %v609
      %v894 = vmul.f32 %v609, %v893
      %v895 = vsub.f32 1.0, %v894
      %v896 = vmul.f32 %v893, %v895
      %v897 = vadd.f32 %v893, %v896
      %vm898 = vweird.f32 %v609
      %vm899 = vweird.f32 %v893
      %vm900 = vmor %vm898, %vm899
      %v901 = vsel %vm900, %v893, %v897
      %v902 = vand.u32 2147483647, %v609
      %vm903 = vcmp.eq.f32.partialorder %v902, 8.507059e+37
      %v904 = vand.u32 %v609, 2147483648
      %v905 = vor.u32 1.1754944e-38, %v904
      %v906 = vsel %vm903, %v905, %v901
      %v907 = vmul.f32 1.0, %v906
      %v908 = vrcp.pop %v610
      %v909 = vmul.f32 %v610, %v908
      %v910 = vsub.f32 1.0, %v909
      %v911 = vmul.f32 %v908, %v910
      %v912 = vadd.f32 %v908, %v911
      %vm913 = vweird.f32 %v610
      %vm914 = vweird.f32 %v908
      %vm915 = vmor %vm913, %vm914
      %v916 = vsel %vm915, %v908, %v912
      %v917 = vand.u32 2147483647, %v610
      %vm918 = vcmp.eq.f32.partialorder %v917, 8.507059e+37
      %v919 = vand.u32 %v610, 2147483648
      %v920 = vor.u32 1.1754944e-38, %v919
      %v921 = vsel %vm918, %v920, %v916
      %v922 = vmul.f32 1.0, %v921
      %v923 = vrcp.pop %v611
      %v924 = vmul.f32 %v611, %v923
      %v925 = vsub.f32 1.0, %v924
      %v926 = vmul.f32 %v923, %v925
      %v927 = vadd.f32 %v923, %v926
      %vm928 = vweird.f32 %v611
      %vm929 = vweird.f32 %v923
      %vm930 = vmor %vm928, %vm929
      %v931 = vsel %vm930, %v923, %v927
      %v932 = vand.u32 2147483647, %v611
      %vm933 = vcmp.eq.f32.partialorder %v932, 8.507059e+37
      %v934 = vand.u32 %v611, 2147483648
      %v935 = vor.u32 1.1754944e-38, %v934
      %v936 = vsel %vm933, %v935, %v931
      %v937 = vmul.f32 1.0, %v936
      %v938 = vrcp.pop %v612
      %v939 = vmul.f32 %v612, %v938
      %v940 = vsub.f32 1.0, %v939
      %v941 = vmul.f32 %v938, %v940
      %v942 = vadd.f32 %v938, %v941
      %vm943 = vweird.f32 %v612
      %vm944 = vweird.f32 %v938
      %vm945 = vmor %vm943, %vm944
      %v946 = vsel %vm945, %v938, %v942
      %v947 = vand.u32 2147483647, %v612
      %vm948 = vcmp.eq.f32.partialorder %v947, 8.507059e+37
      %v949 = vand.u32 %v612, 2147483648
      %v950 = vor.u32 1.1754944e-38, %v949
      %v951 = vsel %vm948, %v950, %v946
      %v952 = vmul.f32 1.0, %v951
      %v953 = vrcp.pop %v613
      %v954 = vmul.f32 %v613, %v953
      %v955 = vsub.f32 1.0, %v954
      %v956 = vmul.f32 %v953, %v955
      %v957 = vadd.f32 %v953, %v956
      %vm958 = vweird.f32 %v613
      %vm959 = vweird.f32 %v953
      %vm960 = vmor %vm958, %vm959
      %v961 = vsel %vm960, %v953, %v957
      %v962 = vand.u32 2147483647, %v613
      %vm963 = vcmp.eq.f32.partialorder %v962, 8.507059e+37
      %v964 = vand.u32 %v613, 2147483648
      %v965 = vor.u32 1.1754944e-38, %v964
      %v966 = vsel %vm963, %v965, %v961
      %v967 = vmul.f32 1.0, %v966
      %v968 = vrcp.pop %v614
      %v969 = vmul.f32 %v614, %v968
      %v970 = vsub.f32 1.0, %v969
      %v971 = vmul.f32 %v968, %v970
      %v972 = vadd.f32 %v968, %v971
      %vm973 = vweird.f32 %v614
      %vm974 = vweird.f32 %v968
      %vm975 = vmor %vm973, %vm974
      %v976 = vsel %vm975, %v968, %v972
      %v977 = vand.u32 2147483647, %v614
      %vm978 = vcmp.eq.f32.partialorder %v977, 8.507059e+37
      %v979 = vand.u32 %v614, 2147483648
      %v980 = vor.u32 1.1754944e-38, %v979
      %v981 = vsel %vm978, %v980, %v976
      %v982 = vmul.f32 1.0, %v981
      %v983 = vrcp.pop %v615
      %v984 = vmul.f32 %v615, %v983
      %v985 = vsub.f32 1.0, %v984
      %v986 = vmul.f32 %v983, %v985
      %v987 = vadd.f32 %v983, %v986
      %vm988 = vweird.f32 %v615
      %vm989 = vweird.f32 %v983
      %vm990 = vmor %vm988, %vm989
      %v991 = vsel %vm990, %v983, %v987
      %v992 = vand.u32 2147483647, %v615
      %vm993 = vcmp.eq.f32.partialorder %v992, 8.507059e+37
      %v994 = vand.u32 %v615, 2147483648
      %v995 = vor.u32 1.1754944e-38, %v994
      %v996 = vsel %vm993, %v995, %v991
      %v997 = vmul.f32 1.0, %v996
      %v998 = vrcp.pop %v616
      %v999 = vmul.f32 %v616, %v998
      %v1000 = vsub.f32 1.0, %v999
      %v1001 = vmul.f32 %v998, %v1000
      %v1002 = vadd.f32 %v998, %v1001
      %vm1003 = vweird.f32 %v616
      %vm1004 = vweird.f32 %v998
      %vm1005 = vmor %vm1003, %vm1004
      %v1006 = vsel %vm1005, %v998, %v1002
      %v1007 = vand.u32 2147483647, %v616
      %vm1008 = vcmp.eq.f32.partialorder %v1007, 8.507059e+37
      %v1009 = vand.u32 %v616, 2147483648
      %v1010 = vor.u32 1.1754944e-38, %v1009
      %v1011 = vsel %vm1008, %v1010, %v1006
      %v1012 = vmul.f32 1.0, %v1011
      %v1013 = vrcp.pop %v617
      %v1014 = vmul.f32 %v617, %v1013
      %v1015 = vsub.f32 1.0, %v1014
      %v1016 = vmul.f32 %v1013, %v1015
      %v1017 = vadd.f32 %v1013, %v1016
      %vm1018 = vweird.f32 %v617
      %vm1019 = vweird.f32 %v1013
      %vm1020 = vmor %vm1018, %vm1019
      %v1021 = vsel %vm1020, %v1013, %v1017
      %v1022 = vand.u32 2147483647, %v617
      %vm1023 = vcmp.eq.f32.partialorder %v1022, 8.507059e+37
      %v1024 = vand.u32 %v617, 2147483648
      %v1025 = vor.u32 1.1754944e-38, %v1024
      %v1026 = vsel %vm1023, %v1025, %v1021
      %v1027 = vmul.f32 1.0, %v1026
      %v1028 = vrcp.pop %v618
      %v1029 = vmul.f32 %v618, %v1028
      %v1030 = vsub.f32 1.0, %v1029
      %v1031 = vmul.f32 %v1028, %v1030
      %v1032 = vadd.f32 %v1028, %v1031
      %vm1033 = vweird.f32 %v618
      %vm1034 = vweird.f32 %v1028
      %vm1035 = vmor %vm1033, %vm1034
      %v1036 = vsel %vm1035, %v1028, %v1032
      %v1037 = vand.u32 2147483647, %v618
      %vm1038 = vcmp.eq.f32.partialorder %v1037, 8.507059e+37
      %v1039 = vand.u32 %v618, 2147483648
      %v1040 = vor.u32 1.1754944e-38, %v1039
      %v1041 = vsel %vm1038, %v1040, %v1036
      %v1042 = vmul.f32 1.0, %v1041
      %v1043 = vrcp.pop %v619
      %v1044 = vmul.f32 %v619, %v1043
      %v1045 = vsub.f32 1.0, %v1044
      %v1046 = vmul.f32 %v1043, %v1045
      %v1047 = vadd.f32 %v1043, %v1046
      %vm1048 = vweird.f32 %v619
      %vm1049 = vweird.f32 %v1043
      %vm1050 = vmor %vm1048, %vm1049
      %v1051 = vsel %vm1050, %v1043, %v1047
      %v1052 = vand.u32 2147483647, %v619
      %vm1053 = vcmp.eq.f32.partialorder %v1052, 8.507059e+37
      %v1054 = vand.u32 %v619, 2147483648
      %v1055 = vor.u32 1.1754944e-38, %v1054
      %v1056 = vsel %vm1053, %v1055, %v1051
      %v1057 = vmul.f32 1.0, %v1056
      %v1058 = vrcp.pop %v620
      %v1059 = vmul.f32 %v620, %v1058
      %v1060 = vsub.f32 1.0, %v1059
      %v1061 = vmul.f32 %v1058, %v1060
      %v1062 = vadd.f32 %v1058, %v1061
      %vm1063 = vweird.f32 %v620
      %vm1064 = vweird.f32 %v1058
      %vm1065 = vmor %vm1063, %vm1064
      %v1066 = vsel %vm1065, %v1058, %v1062
      %v1067 = vand.u32 2147483647, %v620
      %vm1068 = vcmp.eq.f32.partialorder %v1067, 8.507059e+37
      %v1069 = vand.u32 %v620, 2147483648
      %v1070 = vor.u32 1.1754944e-38, %v1069
      %v1071 = vsel %vm1068, %v1070, %v1066
      %v1072 = vmul.f32 1.0, %v1071
      %v1073 = vrcp.pop %v621
      %v1074 = vmul.f32 %v621, %v1073
      %v1075 = vsub.f32 1.0, %v1074
      %v1076 = vmul.f32 %v1073, %v1075
      %v1077 = vadd.f32 %v1073, %v1076
      %vm1078 = vweird.f32 %v621
      %vm1079 = vweird.f32 %v1073
      %vm1080 = vmor %vm1078, %vm1079
      %v1081 = vsel %vm1080, %v1073, %v1077
      %v1082 = vand.u32 2147483647, %v621
      %vm1083 = vcmp.eq.f32.partialorder %v1082, 8.507059e+37
      %v1084 = vand.u32 %v621, 2147483648
      %v1085 = vor.u32 1.1754944e-38, %v1084
      %v1086 = vsel %vm1083, %v1085, %v1081
      %v1087 = vmul.f32 1.0, %v1086
      %v1088 = vrcp.pop %v622
      %v1089 = vmul.f32 %v622, %v1088
      %v1090 = vsub.f32 1.0, %v1089
      %v1091 = vmul.f32 %v1088, %v1090
      %v1092 = vadd.f32 %v1088, %v1091
      %vm1093 = vweird.f32 %v622
      %vm1094 = vweird.f32 %v1088
      %vm1095 = vmor %vm1093, %vm1094
      %v1096 = vsel %vm1095, %v1088, %v1092
      %v1097 = vand.u32 2147483647, %v622
      %vm1098 = vcmp.eq.f32.partialorder %v1097, 8.507059e+37
      %v1099 = vand.u32 %v622, 2147483648
      %v1100 = vor.u32 1.1754944e-38, %v1099
      %v1101 = vsel %vm1098, %v1100, %v1096
      %v1102 = vmul.f32 1.0, %v1101
      %v1103 = vpack.c.bf16 %v637, %v637
      %v1104 = vpack.c.bf16 %v652, %v652
      %v1105 = vpack.c.bf16 %v667, %v667
      %v1106 = vpack.c.bf16 %v682, %v682
      %v1107 = vpack.c.bf16 %v697, %v697
      %v1108 = vpack.c.bf16 %v712, %v712
      %v1109 = vpack.c.bf16 %v727, %v727
      %v1110 = vpack.c.bf16 %v742, %v742
      %v1111 = vpack.c.bf16 %v757, %v757
      %v1112 = vpack.c.bf16 %v772, %v772
      %v1113 = vpack.c.bf16 %v787, %v787
      %v1114 = vpack.c.bf16 %v802, %v802
      %v1115 = vpack.c.bf16 %v817, %v817
      %v1116 = vpack.c.bf16 %v832, %v832
      %v1117 = vpack.c.bf16 %v847, %v847
      %v1118 = vpack.c.bf16 %v862, %v862
      %v1119 = vpack.c.bf16 %v877, %v877
      %v1120 = vpack.c.bf16 %v892, %v892
      %v1121 = vpack.c.bf16 %v907, %v907
      %v1122 = vpack.c.bf16 %v922, %v922
      %v1123 = vpack.c.bf16 %v937, %v937
      %v1124 = vpack.c.bf16 %v952, %v952
      %v1125 = vpack.c.bf16 %v967, %v967
      %v1126 = vpack.c.bf16 %v982, %v982
      %v1127 = vpack.c.bf16 %v997, %v997
      %v1128 = vpack.c.bf16 %v1012, %v1012
      %v1129 = vpack.c.bf16 %v1027, %v1027
      %v1130 = vpack.c.bf16 %v1042, %v1042
      %v1131 = vpack.c.bf16 %v1057, %v1057
      %v1132 = vpack.c.bf16 %v1072, %v1072
      %v1133 = vpack.c.bf16 %v1087, %v1087
      %v1134 = vpack.c.bf16 %v1102, %v1102
      %1135 = vst [vmem:[%s208] sm:$0xf] %v1103
      %1136 = vst [vmem:[%s208 + $0x4] sm:$0xf] %v1104
      %1137 = vst [vmem:[%s208 + $0x8] sm:$0xf] %v1105
      %1138 = vst [vmem:[%s208 + $0xc] sm:$0xf] %v1106
      %1139 = vst [vmem:[%s208 + $0x10] sm:$0xf] %v1107
      %1140 = vst [vmem:[%s208 + $0x14] sm:$0xf] %v1108
      %1141 = vst [vmem:[%s208 + $0x18] sm:$0xf] %v1109
      %1142 = vst [vmem:[%s208 + $0x1c] sm:$0xf] %v1110
      %1143 = vst [vmem:[%s208 + $0x20] sm:$0xf] %v1111
      %1144 = vst [vmem:[%s208 + $0x24] sm:$0xf] %v1112
      %1145 = vst [vmem:[%s208 + $0x28] sm:$0xf] %v1113
      %1146 = vst [vmem:[%s208 + $0x2c] sm:$0xf] %v1114
      %1147 = vst [vmem:[%s208 + $0x30] sm:$0xf] %v1115
      %1148 = vst [vmem:[%s208 + $0x34] sm:$0xf] %v1116
      %1149 = vst [vmem:[%s208 + $0x38] sm:$0xf] %v1117
      %1150 = vst [vmem:[%s208 + $0x3c] sm:$0xf] %v1118
      %1151 = vst [vmem:[%s208 + $0x40] sm:$0xf] %v1119
      %1152 = vst [vmem:[%s208 + $0x44] sm:$0xf] %v1120
      %1153 = vst [vmem:[%s208 + $0x48] sm:$0xf] %v1121
      %1154 = vst [vmem:[%s208 + $0x4c] sm:$0xf] %v1122
      %1155 = vst [vmem:[%s208 + $0x50] sm:$0xf] %v1123
      %1156 = vst [vmem:[%s208 + $0x54] sm:$0xf] %v1124
      %1157 = vst [vmem:[%s208 + $0x58] sm:$0xf] %v1125
      %1158 = vst [vmem:[%s208 + $0x5c] sm:$0xf] %v1126
      %1159 = vst [vmem:[%s208 + $0x60] sm:$0xf] %v1127
      %1160 = vst [vmem:[%s208 + $0x64] sm:$0xf] %v1128
      %1161 = vst [vmem:[%s208 + $0x68] sm:$0xf] %v1129
      %1162 = vst [vmem:[%s208 + $0x6c] sm:$0xf] %v1130
      %1163 = vst [vmem:[%s208 + $0x70] sm:$0xf] %v1131
      %1164 = vst [vmem:[%s208 + $0x74] sm:$0xf] %v1132
      %1165 = vst [vmem:[%s208 + $0x78] sm:$0xf] %v1133
      %1166 = vst [vmem:[%s208 + $0x7c] sm:$0xf] %v1134
      %s1167 = smul.u32 32, %s19
      %p1168 = scmp.lt.s32.totalorder %s18, 1
      %s1169 = scalar_select %p1168, %s18, 1
      %p1170 = scmp.lt.s32.totalorder %s1167, 31
      %s1171 = scalar_select %p1170, %s1167, 31
      %s1172 = smul.addr %s1169, 32
      %s1173 = sadd.s32 %s1171, %s1172
      %s1174 = smul.addr %s1173, 4
      %s1175 = scalar_lea.vmem %s3, %s1174
      // Predicated region
      $region33: #{forward.11} parent=31 // pred_check
        %p1176 = pneg %p116
      $region34: #{forward.11} parent=31 // pred_check_branch
        %1178 = sbr.rel (%p1176) target = $region36
      $region35: #{forward.11} parent=31 // pred_region
        %s1179 = smul.u32 32, %s19
      $region36: #{forward.11} parent=31 // pred_fallthru
        _
    $region32: #{forward.11} parent=5 // pred_fallthru
      _
    %p1180 = scmp.le.s32.totalorder 2, %s9
    // Predicated region
    $region37: #{forward.11} parent=5 // pred_check
      %p1181 = pneg %p1180
    $region38: #{forward.11} parent=5 // pred_check_branch
      %1183 = sbr.rel (%p1181) target = $region40
    $region39: #{forward.11} parent=5 // pred_region
      %s1184 = ssub.s32 %s9, 2
      // Predicated region
      $region41: #{forward.11} parent=39 // pred_check
        %p1185 = pneg %p122
      $region42: #{forward.11} parent=39 // pred_check_branch
        %1187 = sbr.rel (%p1185) target = $region44
      $region43: #{forward.11} parent=39 // pred_region
        %s1188 = smul.u32 32, %s21
        %p1189 = scmp.lt.s32.totalorder %s20, 1
        %s1190 = scalar_select %p1189, %s20, 1
        %p1191 = scmp.lt.s32.totalorder %s1188, 31
        %s1192 = scalar_select %p1191, %s1188, 31
        %s1193 = smul.addr %s1190, 32
        %s1194 = sadd.s32 %s1192, %s1193
        %s1195 = smul.addr %s1194, 4
        %s1196 = scalar_lea.vmem %s3, %s1195
      $region44: #{forward.11} parent=39 // pred_fallthru
        _
    $region40: #{forward.11} parent=5 // pred_fallthru
      _
  $region6: #{forward.11} parent=0 // loop_footer
    %s13 = sadd.s32 1, %s9
  $region7: #{forward.11} parent=0 // loop_footer_branch
    %8 = sbr.rel target = $region3
  $region8: #{forward.11} parent=0 // loop_exit
    _

</llo_original>
